<compile_context>
chip_gen: v5e
topology: v5e:2x2
jax: 0.10.0
libtpu: 0.0.40
codegen_flags: <defaults>
</compile_context>

<pallas_src>
import functools
import math

import jax
import jax.numpy as jnp
from jax import lax
from jax.experimental import pallas as pl
from jax.experimental.pallas import tpu as pltpu


# --------------------------------------------------------------------------
# Tiling / compiler-param helpers
# --------------------------------------------------------------------------
_TM = 256                      # row tile for matmul-like kernels
_TN = 512                      # col tile for the generic fused linear
_VMEM_LIMIT = 32 * 1024 * 1024  # safe on v5e/v6e/v7x (v7x physical = 64 MiB)


def _cparams(n_axes):
    return pltpu.CompilerParams(
        dimension_semantics=("parallel",) * n_axes,
        vmem_limit_bytes=_VMEM_LIMIT)


def _choose_tile(size, base):
    """Return (tile, padded_size). Block == full dim when size <= base."""
    if size <= base:
        return size, size
    padded = ((size + base - 1) // base) * base
    return base, padded


def _ln(x, g, b, eps):
    mean = jnp.mean(x, axis=-1, keepdims=True)
    var = jnp.mean(jnp.square(x - mean), axis=-1, keepdims=True)
    return (x - mean) * lax.rsqrt(var + eps) * g + b


# --------------------------------------------------------------------------
# Pallas kernels
# --------------------------------------------------------------------------
def _fused_linear_kernel(*refs, ln, act, has_add, out_scale, add_scale, eps):
    """[LayerNorm] -> bf16 matmul -> bias -> [act] -> [*scale] -> [+ add]."""
    refs = list(refs)
    o_ref = refs.pop()
    idx = 0
    x = refs[idx][...]
    idx += 1
    if ln:
        x = _ln(x, refs[idx][...], refs[idx + 1][...], eps)
        idx += 2
    w = refs[idx][...]
    b = refs[idx + 1][...]
    idx += 2
    y = jnp.dot(x.astype(jnp.bfloat16), w,
                preferred_element_type=jnp.float32) + b
    if act == "relu":
        y = jnp.maximum(y, 0.0)
    elif act == "silu":
        y = y * jax.nn.sigmoid(y)
    if out_scale != 1.0:
        y = y * out_scale
    if has_add:
        y = y + add_scale * refs[idx][...]
        idx += 1
    o_ref[...] = y


def _ffn_kernel(x_ref, g_ref, bln_ref, w1_ref, b1_ref, w2_ref, b2_ref, *rest,
                final_ln, eps):
    """x + 0.5 * (W2 @ SiLU(W1 @ LN(x)))  [+ fused final LayerNorm]."""
    o_ref = rest[-1]
    x = x_ref[...]
    y = _ln(x, g_ref[...], bln_ref[...], eps)
    h = jnp.dot(y.astype(jnp.bfloat16), w1_ref[...],
                preferred_element_type=jnp.float32) + b1_ref[...]
    h = h * jax.nn.sigmoid(h)                      # SiLU in f32
    z = jnp.dot(h.astype(jnp.bfloat16), w2_ref[...],
                preferred_element_type=jnp.float32) + b2_ref[...]
    out = x + 0.5 * z
    if final_ln:
        out = _ln(out, rest[0][...], rest[1][...], eps)
    o_ref[...] = out


def _ln_glu_kernel(x_ref, g_ref, bln_ref, wa_ref, ba_ref, wb_ref, bb_ref,
                   o_ref, *, eps):
    """LayerNorm -> pointwise-conv1 (as two lane-dense halves) -> GLU."""
    y = _ln(x_ref[...], g_ref[...], bln_ref[...], eps)
    yb = y.astype(jnp.bfloat16)
    a = jnp.dot(yb, wa_ref[...], preferred_element_type=jnp.float32) + ba_ref[...]
    b = jnp.dot(yb, wb_ref[...], preferred_element_type=jnp.float32) + bb_ref[...]
    o_ref[...] = a * jax.nn.sigmoid(b)


def _attn_kernel(qkv_ref, m_ref, o_ref, *, H, D, scale):
    """Per-batch multi-head attention; all heads processed in one call."""
    qkv = qkv_ref[0]                               # (T, 3D) f32
    bias = m_ref[0]                                # (1, T) key-padding bias
    dh = D // H
    outs = []
    for h in range(H):                             # static loop over heads
        q = qkv[:, h * dh:(h + 1) * dh].astype(jnp.bfloat16)
        k = qkv[:, D + h * dh:D + (h + 1) * dh].astype(jnp.bfloat16)
        v = qkv[:, 2 * D + h * dh:2 * D + (h + 1) * dh].astype(jnp.bfloat16)
        s = lax.dot_general(q, k, (((1,), (1,)), ((), ())),
                            preferred_element_type=jnp.float32) * scale
        s = s + bias
        s = s - jnp.max(s, axis=-1, keepdims=True)
        p = jnp.exp(s)
        p = p * pl.reciprocal(jnp.sum(p, axis=-1, keepdims=True), approx=True)
        outs.append(jnp.dot(p.astype(jnp.bfloat16), v,
                            preferred_element_type=jnp.float32))
    o_ref[0] = jnp.concatenate(outs, axis=-1)      # (T, D), lane-dense store


def _conv_tail_kernel(hp_ref, dw_ref, db_ref, s_ref, t_ref, w2_ref, b2_ref,
                      res_ref, o_ref, *, K, T):
    """Depthwise conv + fused BatchNorm + SiLU + pointwise-conv2 + residual."""
    x = hp_ref[0]                                  # (T + K - 1, D) f32
    w = dw_ref[...]                                # (K, D)
    acc = x[0:T, :] * w[0:1, :]
    for k in range(1, K):                          # static unroll over taps
        acc = acc + x[k:k + T, :] * w[k:k + 1, :]
    y = acc + db_ref[...]
    y = y * s_ref[...] + t_ref[...]                # fused inference BatchNorm
    y = y * jax.nn.sigmoid(y)                      # SiLU
    z = jnp.dot(y.astype(jnp.bfloat16), w2_ref[...],
                preferred_element_type=jnp.float32) + b2_ref[...]
    o_ref[0] = res_ref[0] + z


def _fc_logsm_kernel(x_ref, w_ref, b_ref, logit_ref, logp_ref):
    """Output projection + log_softmax fused (two outputs)."""
    y = jnp.dot(x_ref[...].astype(jnp.bfloat16), w_ref[...],
                preferred_element_type=jnp.float32) + b_ref[...]
    logit_ref[...] = y
    m = jnp.max(y, axis=-1, keepdims=True)
    s = y - m
    lse = jnp.log(jnp.sum(jnp.exp(s), axis=-1, keepdims=True))
    logp_ref[...] = s - lse


# --------------------------------------------------------------------------
# Kernel wrappers (BlockSpecs / grids / padding)
# --------------------------------------------------------------------------
def fused_linear(x, w, b, *, ln=None, act=None, add=None, add_scale=1.0,
                 out_scale=1.0, eps=1e-5):
    shp = x.shape
    K = shp[-1]
    N = w.shape[1]
    x2 = x.reshape(-1, K).astype(jnp.float32)
    M = x2.shape[0]
    tm, Mp = _choose_tile(M, _TM)
    tn, Np = _choose_tile(N, _TN)
    if Mp != M:
        x2 = jnp.pad(x2, ((0, Mp - M), (0, 0)))
    wb16 = w.astype(jnp.bfloat16)
    bias = b.reshape(1, N).astype(jnp.float32)
    if Np != N:
        wb16 = jnp.pad(wb16, ((0, 0), (0, Np - N)))
        bias = jnp.pad(bias, ((0, 0), (0, Np - N)))

    arrays = [x2]
    specs = [pl.BlockSpec((tm, K), lambda i, j: (i, 0))]
    if ln is not None:
        g, bl = ln
        arrays += [g.reshape(1, K).astype(jnp.float32),
                   bl.reshape(1, K).astype(jnp.float32)]
        specs += [pl.BlockSpec((1, K), lambda i, j: (0, 0))] * 2
    arrays += [wb16, bias]
    specs += [pl.BlockSpec((K, tn), lambda i, j: (0, j)),
              pl.BlockSpec((1, tn), lambda i, j: (0, j))]
    if add is not None:
        add2 = add.reshape(-1, N).astype(jnp.float32)
        if Mp != M or Np != N:
            add2 = jnp.pad(add2, ((0, Mp - M), (0, Np - N)))
        arrays.append(add2)
        specs.append(pl.BlockSpec((tm, tn), lambda i, j: (i, j)))

    out = pl.pallas_call(
        functools.partial(_fused_linear_kernel, ln=ln is not None, act=act,
                          has_add=add is not None, out_scale=out_scale,
                          add_scale=add_scale, eps=eps),
        grid=(Mp // tm, Np // tn),
        in_specs=specs,
        out_specs=pl.BlockSpec((tm, tn), lambda i, j: (i, j)),
        out_shape=jax.ShapeDtypeStruct((Mp, Np), jnp.float32),
        compiler_params=_cparams(2),
    )(*arrays)
    return out[:M, :N].reshape(shp[:-1] + (N,))


def ffn_block(x, g, bl, w1, b1, w2, b2, final_ln=None, eps=1e-5):
    shp = x.shape
    D = shp[-1]
    Hd = w1.shape[1]
    x2 = x.reshape(-1, D).astype(jnp.float32)
    M = x2.shape[0]
    tm, Mp = _choose_tile(M, _TM)
    if Mp != M:
        x2 = jnp.pad(x2, ((0, Mp - M), (0, 0)))

    arrays = [x2,
              g.reshape(1, D).astype(jnp.float32),
              bl.reshape(1, D).astype(jnp.float32),
              w1.astype(jnp.bfloat16), b1.reshape(1, Hd).astype(jnp.float32),
              w2.astype(jnp.bfloat16), b2.reshape(1, D).astype(jnp.float32)]
    specs = [pl.BlockSpec((tm, D), lambda i: (i, 0)),
             pl.BlockSpec((1, D), lambda i: (0, 0)),
             pl.BlockSpec((1, D), lambda i: (0, 0)),
             pl.BlockSpec((D, Hd), lambda i: (0, 0)),
             pl.BlockSpec((1, Hd), lambda i: (0, 0)),
             pl.BlockSpec((Hd, D), lambda i: (0, 0)),
             pl.BlockSpec((1, D), lambda i: (0, 0))]
    if final_ln is not None:
        gf, bf = final_ln
        arrays += [gf.reshape(1, D).astype(jnp.float32),
                   bf.reshape(1, D).astype(jnp.float32)]
        specs += [pl.BlockSpec((1, D), lambda i: (0, 0))] * 2

    out = pl.pallas_call(
        functools.partial(_ffn_kernel, final_ln=final_ln is not None, eps=eps),
        grid=(Mp // tm,),
        in_specs=specs,
        out_specs=pl.BlockSpec((tm, D), lambda i: (i, 0)),
        out_shape=jax.ShapeDtypeStruct((Mp, D), jnp.float32),
        compiler_params=_cparams(1),
    )(*arrays)
    return out[:M].reshape(shp)


def ln_glu(x, g, bl, wa, ba, wb, bb, eps=1e-5):
    shp = x.shape
    D = shp[-1]
    N = wa.shape[1]
    x2 = x.reshape(-1, D).astype(jnp.float32)
    M = x2.shape[0]
    tm, Mp = _choose_tile(M, _TM)
    if Mp != M:
        x2 = jnp.pad(x2, ((0, Mp - M), (0, 0)))
    out = pl.pallas_call(
        functools.partial(_ln_glu_kernel, eps=eps),
        grid=(Mp // tm,),
        in_specs=[pl.BlockSpec((tm, D), lambda i: (i, 0)),
                  pl.BlockSpec((1, D), lambda i: (0, 0)),
                  pl.BlockSpec((1, D), lambda i: (0, 0)),
                  pl.BlockSpec((D, N), lambda i: (0, 0)),
                  pl.BlockSpec((1, N), lambda i: (0, 0)),
                  pl.BlockSpec((D, N), lambda i: (0, 0)),
                  pl.BlockSpec((1, N), lambda i: (0, 0))],
        out_specs=pl.BlockSpec((tm, N), lambda i: (i, 0)),
        out_shape=jax.ShapeDtypeStruct((Mp, N), jnp.float32),
        compiler_params=_cparams(1),
    )(x2, g.reshape(1, D).astype(jnp.float32),
      bl.reshape(1, D).astype(jnp.float32),
      wa.astype(jnp.bfloat16), ba.reshape(1, N).astype(jnp.float32),
      wb.astype(jnp.bfloat16), bb.reshape(1, N).astype(jnp.float32))
    return out[:M].reshape(shp[:-1] + (N,))


def attention(qkv, mask_bias, H):
    B, T, D3 = qkv.shape
    D = D3 // 3
    scale = 1.0 / math.sqrt(D // H)
    mb = mask_bias.reshape(B, 1, T).astype(jnp.float32)
    return pl.pallas_call(
        functools.partial(_attn_kernel, H=H, D=D, scale=scale),
        grid=(B,),
        in_specs=[pl.BlockSpec((1, T, D3), lambda i: (i, 0, 0)),
                  pl.BlockSpec((1, 1, T), lambda i: (i, 0, 0))],
        out_specs=pl.BlockSpec((1, T, D), lambda i: (i, 0, 0)),
        out_shape=jax.ShapeDtypeStruct((B, T, D), jnp.float32),
        compiler_params=_cparams(1),
    )(qkv.astype(jnp.float32), mb)


def conv_tail(h, res, dw_w, dw_b, bn_scale, bn_shift, w2, b2, K):
    B, T, D = h.shape
    pad_l = (K - 1) // 2
    hp = jnp.pad(h, ((0, 0), (pad_l, K - 1 - pad_l), (0, 0))).astype(jnp.float32)
    Tp = T + K - 1
    return pl.pallas_call(
        functools.partial(_conv_tail_kernel, K=K, T=T),
        grid=(B,),
        in_specs=[pl.BlockSpec((1, Tp, D), lambda i: (i, 0, 0)),
                  pl.BlockSpec((K, D), lambda i: (0, 0)),
                  pl.BlockSpec((1, D), lambda i: (0, 0)),
                  pl.BlockSpec((1, D), lambda i: (0, 0)),
                  pl.BlockSpec((1, D), lambda i: (0, 0)),
                  pl.BlockSpec((D, D), lambda i: (0, 0)),
                  pl.BlockSpec((1, D), lambda i: (0, 0)),
                  pl.BlockSpec((1, T, D), lambda i: (i, 0, 0))],
        out_specs=pl.BlockSpec((1, T, D), lambda i: (i, 0, 0)),
        out_shape=jax.ShapeDtypeStruct((B, T, D), jnp.float32),
        compiler_params=_cparams(1),
    )(hp, dw_w.astype(jnp.float32), dw_b.reshape(1, D).astype(jnp.float32),
      bn_scale.reshape(1, D).astype(jnp.float32),
      bn_shift.reshape(1, D).astype(jnp.float32),
      w2.astype(jnp.bfloat16), b2.reshape(1, D).astype(jnp.float32),
      res.astype(jnp.float32))


def fc_log_softmax(x, w, b):
    B, T, D = x.shape
    V = w.shape[1]
    x2 = x.reshape(-1, D).astype(jnp.float32)
    M = x2.shape[0]
    tm, Mp = _choose_tile(M, _TM)
    if Mp != M:
        x2 = jnp.pad(x2, ((0, Mp - M), (0, 0)))
    logits, logp = pl.pallas_call(
        _fc_logsm_kernel,
        grid=(Mp // tm,),
        in_specs=[pl.BlockSpec((tm, D), lambda i: (i, 0)),
                  pl.BlockSpec((D, V), lambda i: (0, 0)),
                  pl.BlockSpec((1, V), lambda i: (0, 0))],
        out_specs=[pl.BlockSpec((tm, V), lambda i: (i, 0)),
                   pl.BlockSpec((tm, V), lambda i: (i, 0))],
        out_shape=[jax.ShapeDtypeStruct((Mp, V), jnp.float32),
                   jax.ShapeDtypeStruct((Mp, V), jnp.float32)],
        compiler_params=_cparams(1),
    )(x2, w.astype(jnp.bfloat16), b.reshape(1, V).astype(jnp.float32))
    return logits[:M].reshape(B, T, V), logp[:M].reshape(B, T, V)


# --------------------------------------------------------------------------
# Glue: im2col, positional encoding, CTC loss, parameter init
# --------------------------------------------------------------------------
def im2col(x, kh, kw, stride):
    # x: (B, C, H, W) -> (B*Ho*Wo, C*kh*kw), patch flattened (C, kh, kw)-major.
    B, C, H, W = x.shape
    Ho = (H - kh) // stride + 1
    Wo = (W - kw) // stride + 1
    patches = []
    for i in range(kh):
        for j in range(kw):
            patches.append(x[:, :, i:i + stride * Ho:stride, j:j + stride * Wo:stride])
    p = jnp.stack(patches, axis=0)                 # (kh*kw, B, C, Ho, Wo)
    p = p.transpose(1, 3, 4, 2, 0).reshape(B * Ho * Wo, C * kh * kw)
    return p, Ho, Wo


def sinusoid_pe(T, d):
    pos = jnp.arange(T, dtype=jnp.float32)[:, None]
    div = jnp.exp(jnp.arange(0, d, 2, dtype=jnp.float32) * (-math.log(10000.0) / d))
    pe = jnp.zeros((T, d), jnp.float32)
    pe = pe.at[:, 0::2].set(jnp.sin(pos * div))
    pe = pe.at[:, 1::2].set(jnp.cos(pos * div))
    return pe


def ctc_loss_per_sample(log_probs_tbv, input_lens, targets, target_lens, blank):
    # Standard CTC forward algorithm (log domain).  log_probs_tbv: (T, B, V).
    T, B, V = log_probs_tbv.shape
    U = targets.shape[1]
    S = 2 * U + 1
    NEG = -1e30

    ext = jnp.full((B, S), blank, jnp.int32)
    ext = ext.at[:, 1::2].set(targets.astype(jnp.int32))
    ext_prev2 = jnp.concatenate(
        [jnp.full((B, 2), -1, jnp.int32), ext[:, :-2]], axis=1)
    allow_skip = (ext != blank) & (ext != ext_prev2)

    lp0 = jnp.take_along_axis(log_probs_tbv[0], ext, axis=1)      # (B, S)
    alpha = jnp.full((B, S), NEG)
    alpha = alpha.at[:, 0].set(lp0[:, 0])
    alpha = alpha.at[:, 1].set(jnp.where(target_lens > 0, lp0[:, 1], NEG))

    def logadd3(a, b, c):
        m = jnp.maximum(jnp.maximum(a, b), c)
        return m + jnp.log(jnp.exp(a - m) + jnp.exp(b - m) + jnp.exp(c - m))

    def step(a_prev, xs):
        t, frame = xs
        lp_t = jnp.take_along_axis(frame, ext, axis=1)
        a1 = jnp.concatenate([jnp.full((B, 1), NEG), a_prev[:, :-1]], axis=1)
        a2 = jnp.concatenate([jnp.full((B, 2), NEG), a_prev[:, :-2]], axis=1)
        a2 = jnp.where(allow_skip, a2, NEG)
        new = logadd3(a_prev, a1, a2) + lp_t
        new = jnp.where((t < input_lens)[:, None], new, a_prev)
        return new, None

    alpha, _ = lax.scan(step, alpha, (jnp.arange(1, T), log_probs_tbv[1:]))

    s_last = 2 * target_lens
    i_last = jnp.clip(s_last, 0, S - 1)[:, None]
    i_prev = jnp.clip(s_last - 1, 0, S - 1)[:, None]
    a_last = jnp.take_along_axis(alpha, i_last, axis=1)[:, 0]
    a_prev = jnp.take_along_axis(alpha, i_prev, axis=1)[:, 0]
    a_prev = jnp.where(target_lens > 0, a_prev, NEG)
    m = jnp.maximum(a_last, a_prev)
    ll = m + jnp.log(jnp.exp(a_last - m) + jnp.exp(a_prev - m))
    loss = -ll
    # zero_infinity=True
    loss = jnp.where(jnp.isfinite(loss) & (loss < 1e29), loss, 0.0)
    return loss


def init_params(key, cfg, vocab_size):
    d = cfg["d_model"]
    Fm = cfg["mel_dim"]
    r = cfg["ff_ratio"]
    K = cfg["conv_kernel"]
    L = cfg["num_layers"]
    keys = list(jax.random.split(key, 128))
    kit = iter(keys)

    def dense(shape):
        return 0.02 * jax.random.normal(next(kit), shape, jnp.float32)

    f1 = (Fm - 1) // 2
    f2 = (f1 - 1) // 2

    p = {
        "conv1_w": dense((d, 1, 3, 3)), "conv1_b": jnp.zeros((d,)),
        "conv2_w": dense((d, d, 3, 3)), "conv2_b": jnp.zeros((d,)),
        "sub_lin_w": dense((d * f2, d)), "sub_lin_b": jnp.zeros((d,)),
        "fc_w": dense((d, vocab_size)), "fc_b": jnp.zeros((vocab_size,)),
    }
    layers = []
    for _ in range(L):
        lp = {}
        for nm in ["ln_ff1", "ln_mha", "ln_conv", "ln_ff2", "ln_final"]:
            lp[nm + "_g"] = jnp.ones((d,))
            lp[nm + "_b"] = jnp.zeros((d,))
        for nm in ["ff1", "ff2"]:
            lp[nm + "_w1"] = dense((d, d * r)); lp[nm + "_b1"] = jnp.zeros((d * r,))
            lp[nm + "_w2"] = dense((d * r, d)); lp[nm + "_b2"] = jnp.zeros((d,))
        for nm in ["q", "k", "v", "o"]:
            lp[nm + "_w"] = dense((d, d)); lp[nm + "_b"] = jnp.zeros((d,))
        lp["pw1_w"] = dense((d, 2 * d)); lp["pw1_b"] = jnp.zeros((2 * d,))
        lp["dw_w"] = dense((K, d));      lp["dw_b"] = jnp.zeros((d,))
        lp["bn_g"] = jnp.ones((d,)); lp["bn_b"] = jnp.zeros((d,))
        lp["bn_mean"] = jnp.zeros((d,)); lp["bn_var"] = jnp.ones((d,))
        lp["pw2_w"] = dense((d, d)); lp["pw2_b"] = jnp.zeros((d,))
        layers.append(lp)
    p["layers"] = layers
    return p


# --------------------------------------------------------------------------
# Model forward
# --------------------------------------------------------------------------
def conformer_block(x, lp, mask_bias, H, K, eps=1e-5):
    D = x.shape[-1]

    # Macaron FFN 1: LN + W1 + SiLU + W2 + 0.5 + residual   (one pallas_call)
    x = ffn_block(x, lp["ln_ff1_g"], lp["ln_ff1_b"],
                  lp["ff1_w1"], lp["ff1_b1"], lp["ff1_w2"], lp["ff1_b2"])

    # MHSA: LN + fused QKV projection -> attention -> O-proj + residual
    wqkv = jnp.concatenate([lp["q_w"], lp["k_w"], lp["v_w"]], axis=1)
    bqkv = jnp.concatenate([lp["q_b"], lp["k_b"], lp["v_b"]])
    qkv = fused_linear(x, wqkv, bqkv, ln=(lp["ln_mha_g"], lp["ln_mha_b"]))
    attn = attention(qkv, mask_bias, H)
    x = fused_linear(attn, lp["o_w"], lp["o_b"], add=x)

    # Conv module: LN + pw1 (split halves) + GLU -> dwconv+BN+SiLU+pw2+residual
    h = ln_glu(x, lp["ln_conv_g"], lp["ln_conv_b"],
               lp["pw1_w"][:, :D], lp["pw1_b"][:D],
               lp["pw1_w"][:, D:], lp["pw1_b"][D:])
    bn_scale = lp["bn_g"] * lax.rsqrt(lp["bn_var"] + eps)
    bn_shift = lp["bn_b"] - lp["bn_mean"] * bn_scale
    x = conv_tail(h, x, lp["dw_w"], lp["dw_b"], bn_scale, bn_shift,
                  lp["pw2_w"], lp["pw2_b"], K)

    # Macaron FFN 2 with fused final LayerNorm
    x = ffn_block(x, lp["ln_ff2_g"], lp["ln_ff2_b"],
                  lp["ff2_w1"], lp["ff2_b1"], lp["ff2_w2"], lp["ff2_b2"],
                  final_ln=(lp["ln_final_g"], lp["ln_final_b"]))
    return x


def forward(params, cfg, blank_id, mel, mel_lens, targets, target_lens):
    d = cfg["d_model"]
    H = cfg["nhead"]
    B, T, Fm = mel.shape

    # ---- Subsampling: Conv2d(1,d,3,s2)+ReLU -> Conv2d(d,d,3,s2)+ReLU -> Linear
    x = mel[:, None, :, :].astype(jnp.float32)                     # (B,1,T,F)
    p1, T1, F1 = im2col(x, 3, 3, 2)
    h1 = fused_linear(p1, params["conv1_w"].reshape(d, 9).T,
                      params["conv1_b"], act="relu")
    h1 = h1.reshape(B, T1, F1, d).transpose(0, 3, 1, 2)            # (B,d,T1,F1)
    p2, T2, F2 = im2col(h1, 3, 3, 2)
    h2 = fused_linear(p2, params["conv2_w"].reshape(d, d * 9).T,
                      params["conv2_b"], act="relu")
    h2 = h2.reshape(B, T2, F2, d).transpose(0, 1, 3, 2).reshape(B, T2, d * F2)
    sub_lens = ((mel_lens - 1) // 2 - 1) // 2

    # ---- sub_lin + x*sqrt(d) + PE fused in one matmul epilogue ----
    pe = jnp.broadcast_to(sinusoid_pe(T2, d)[None], (B, T2, d))
    feat = fused_linear(h2, params["sub_lin_w"], params["sub_lin_b"],
                        add=pe, out_scale=math.sqrt(d))            # (B,T2,d)

    # ---- Encoder mask: True where t >= length (padding) ----
    pad_mask = jnp.arange(T2)[None, :] >= sub_lens[:, None]
    mask_bias = jnp.where(pad_mask, -1e9, 0.0).astype(jnp.float32)

    # ---- Conformer encoder ----
    enc = feat
    for lp in params["layers"]:
        enc = conformer_block(enc, lp, mask_bias, H, cfg["conv_kernel"])

    # ---- Output projection + log_softmax (fused, two outputs) ----
    logits, log_probs = fc_log_softmax(enc, params["fc_w"], params["fc_b"])
    log_probs_tbv = jnp.transpose(log_probs, (1, 0, 2))            # (T2,B,V)

    # ---- CTC loss (mean reduction, blank=blank_id, zero_infinity) ----
    clamped = jnp.minimum(target_lens, sub_lens)                   # clamping branch
    valid = clamped > 0
    per = ctc_loss_per_sample(log_probs_tbv, sub_lens, targets, clamped, blank_id)
    per = per / jnp.maximum(clamped, 1).astype(jnp.float32)
    loss = jnp.sum(jnp.where(valid, per, 0.0)) / jnp.maximum(jnp.sum(valid), 1)

    return logits, loss, sub_lens


# --------------------------------------------------------------------------
if __name__ == "__main__":
    cfg = dict(mel_dim=16, d_model=32, nhead=4, ff_ratio=4,
               num_layers=2, conv_kernel=7, dropout=0.0)
    vocab_size = 40
    blank_id = 0

    key = jax.random.PRNGKey(0)
    pkey, xkey, tkey = jax.random.split(key, 3)
    params = init_params(pkey, cfg, vocab_size)

    B, T, Fm = 2, 32, 16
    mel = jax.random.normal(xkey, (B, T, Fm), jnp.float32)
    mel_lens = jnp.array([32, 24], jnp.int32)
    targets = jax.random.randint(tkey, (B, 5), 1, vocab_size, dtype=jnp.int32)
    target_lens = jnp.array([5, 3], jnp.int32)

    fwd = jax.jit(lambda p, a, b, c, dd: forward(p, cfg, blank_id, a, b, c, dd))
    logits, loss, sub_lens = fwd(params, mel, mel_lens, targets, target_lens)
    jax.block_until_ready((logits, loss, sub_lens))

    assert logits.shape == (B, 7, vocab_size)
    assert sub_lens.shape == (B,)
    assert bool(jnp.isfinite(loss))
    print("KERNEL_OK")
</pallas_src>

<mosaic_0001>
module attributes {stable_mosaic.version = 11 : i64} {
  func.func @_fused_linear_kernel(%arg0: i32, %arg1: i32, %arg2: memref<210x9xf32, #tpu.memory_space<vmem>>, %arg3: memref<9x32xbf16, #tpu.memory_space<vmem>>, %arg4: memref<1x32xf32, #tpu.memory_space<vmem>>, %arg5: memref<210x32xf32, #tpu.memory_space<vmem>>) attributes {dimension_semantics = [#tpu.dimension_semantics<parallel>, #tpu.dimension_semantics<parallel>], iteration_bounds = array<i64: 1, 1>, scalar_prefetch = 0 : i64, scratch_operands = 0 : i64, tpu.core_type = #tpu.core_type<tc>, window_params = [{transform_indices = @transform_0, window_bounds = array<i64: 210, 9>}, {transform_indices = @transform_1, window_bounds = array<i64: 9, 32>}, {transform_indices = @transform_2, window_bounds = array<i64: 1, 32>}, {transform_indices = @transform_3, window_bounds = array<i64: 210, 32>}]} {
    %c0 = arith.constant 0 : index
    %c0_0 = arith.constant 0 : index
    %0 = vector.load %arg2[%c0, %c0_0] : memref<210x9xf32, #tpu.memory_space<vmem>>, vector<210x9xf32>
    %c0_1 = arith.constant 0 : index
    %c0_2 = arith.constant 0 : index
    %1 = vector.load %arg3[%c0_1, %c0_2] : memref<9x32xbf16, #tpu.memory_space<vmem>>, vector<9x32xbf16>
    %c0_3 = arith.constant 0 : index
    %c0_4 = arith.constant 0 : index
    %2 = vector.load %arg4[%c0_3, %c0_4] : memref<1x32xf32, #tpu.memory_space<vmem>>, vector<1x32xf32>
    %3 = arith.truncf %0 : vector<210x9xf32> to vector<210x9xbf16>
    %cst = arith.constant dense<0.000000e+00> : vector<210x32xf32>
    %4 = tpu.matmul %3, %1, %cst {dimension_numbers = #tpu.dot_dimension_numbers<[1], [0], [0], [1], [0, 0, 1, 1], [], []>} : vector<210x9xbf16>, vector<9x32xbf16>, vector<210x32xf32> -> vector<210x32xf32>
    %5 = vector.broadcast %2 : vector<1x32xf32> to vector<210x32xf32>
    %6 = arith.addf %4, %5 : vector<210x32xf32>
    %cst_5 = arith.constant 0.000000e+00 : f32
    %7 = vector.broadcast %cst_5 : f32 to vector<210x32xf32>
    %8 = arith.maximumf %6, %7 : vector<210x32xf32>
    %c0_6 = arith.constant 0 : index
    %c0_7 = arith.constant 0 : index
    %9 = vector.load %arg5[%c0_6, %c0_7] : memref<210x32xf32, #tpu.memory_space<vmem>>, vector<210x32xf32>
    tpu.vector_store %arg5[%c0_6, %c0_7], %8 {strides = array<i32>} : memref<210x32xf32, #tpu.memory_space<vmem>>, vector<210x32xf32>,
    return
  }
  func.func @transform_0(%arg0: i32, %arg1: i32) -> (i32, i32) {
    %c0_i32 = arith.constant 0 : i32
    %c0_i32_0 = arith.constant 0 : i32
    return %arg0, %c0_i32 : i32, i32
  }
  func.func @transform_1(%arg0: i32, %arg1: i32) -> (i32, i32) {
    %c0_i32 = arith.constant 0 : i32
    %c0_i32_0 = arith.constant 0 : i32
    return %c0_i32, %arg1 : i32, i32
  }
  func.func @transform_2(%arg0: i32, %arg1: i32) -> (i32, i32) {
    %c0_i32 = arith.constant 0 : i32
    %c0_i32_0 = arith.constant 0 : i32
    return %c0_i32, %arg1 : i32, i32
  }
  func.func @transform_3(%arg0: i32, %arg1: i32) -> (i32, i32) {
    %c0_i32 = arith.constant 0 : i32
    return %arg0, %arg1 : i32, i32
  }
}

module attributes {stable_mosaic.version = 11 : i64} {
  func.func @_fused_linear_kernel(%arg0: i32, %arg1: i32, %arg2: memref<42x288xf32, #tpu.memory_space<vmem>>, %arg3: memref<288x32xbf16, #tpu.memory_space<vmem>>, %arg4: memref<1x32xf32, #tpu.memory_space<vmem>>, %arg5: memref<42x32xf32, #tpu.memory_space<vmem>>) attributes {dimension_semantics = [#tpu.dimension_semantics<parallel>, #tpu.dimension_semantics<parallel>], iteration_bounds = array<i64: 1, 1>, scalar_prefetch = 0 : i64, scratch_operands = 0 : i64, tpu.core_type = #tpu.core_type<tc>, window_params = [{transform_indices = @transform_0, window_bounds = array<i64: 42, 288>}, {transform_indices = @transform_1, window_bounds = array<i64: 288, 32>}, {transform_indices = @transform_2, window_bounds = array<i64: 1, 32>}, {transform_indices = @transform_3, window_bounds = array<i64: 42, 32>}]} {
    %c0 = arith.constant 0 : index
    %c0_0 = arith.constant 0 : index
    %0 = vector.load %arg2[%c0, %c0_0] : memref<42x288xf32, #tpu.memory_space<vmem>>, vector<42x288xf32>
    %c0_1 = arith.constant 0 : index
    %c0_2 = arith.constant 0 : index
    %1 = vector.load %arg3[%c0_1, %c0_2] : memref<288x32xbf16, #tpu.memory_space<vmem>>, vector<288x32xbf16>
    %c0_3 = arith.constant 0 : index
    %c0_4 = arith.constant 0 : index
    %2 = vector.load %arg4[%c0_3, %c0_4] : memref<1x32xf32, #tpu.memory_space<vmem>>, vector<1x32xf32>
    %3 = arith.truncf %0 : vector<42x288xf32> to vector<42x288xbf16>
    %cst = arith.constant dense<0.000000e+00> : vector<42x32xf32>
    %4 = tpu.matmul %3, %1, %cst {dimension_numbers = #tpu.dot_dimension_numbers<[1], [0], [0], [1], [0, 0, 1, 1], [], []>} : vector<42x288xbf16>, vector<288x32xbf16>, vector<42x32xf32> -> vector<42x32xf32>
    %5 = vector.broadcast %2 : vector<1x32xf32> to vector<42x32xf32>
    %6 = arith.addf %4, %5 : vector<42x32xf32>
    %cst_5 = arith.constant 0.000000e+00 : f32
    %7 = vector.broadcast %cst_5 : f32 to vector<42x32xf32>
    %8 = arith.maximumf %6, %7 : vector<42x32xf32>
    %c0_6 = arith.constant 0 : index
    %c0_7 = arith.constant 0 : index
    %9 = vector.load %arg5[%c0_6, %c0_7] : memref<42x32xf32, #tpu.memory_space<vmem>>, vector<42x32xf32>
    tpu.vector_store %arg5[%c0_6, %c0_7], %8 {strides = array<i32>} : memref<42x32xf32, #tpu.memory_space<vmem>>, vector<42x32xf32>,
    return
  }
  func.func @transform_0(%arg0: i32, %arg1: i32) -> (i32, i32) {
    %c0_i32 = arith.constant 0 : i32
    %c0_i32_0 = arith.constant 0 : i32
    return %arg0, %c0_i32 : i32, i32
  }
  func.func @transform_1(%arg0: i32, %arg1: i32) -> (i32, i32) {
    %c0_i32 = arith.constant 0 : i32
    %c0_i32_0 = arith.constant 0 : i32
    return %c0_i32, %arg1 : i32, i32
  }
  func.func @transform_2(%arg0: i32, %arg1: i32) -> (i32, i32) {
    %c0_i32 = arith.constant 0 : i32
    %c0_i32_0 = arith.constant 0 : i32
    return %c0_i32, %arg1 : i32, i32
  }
  func.func @transform_3(%arg0: i32, %arg1: i32) -> (i32, i32) {
    %c0_i32 = arith.constant 0 : i32
    return %arg0, %arg1 : i32, i32
  }
}

module attributes {stable_mosaic.version = 11 : i64} {
  func.func @_fused_linear_kernel(%arg0: i32, %arg1: i32, %arg2: memref<14x96xf32, #tpu.memory_space<vmem>>, %arg3: memref<96x32xbf16, #tpu.memory_space<vmem>>, %arg4: memref<1x32xf32, #tpu.memory_space<vmem>>, %arg5: memref<14x32xf32, #tpu.memory_space<vmem>>, %arg6: memref<14x32xf32, #tpu.memory_space<vmem>>) attributes {dimension_semantics = [#tpu.dimension_semantics<parallel>, #tpu.dimension_semantics<parallel>], iteration_bounds = array<i64: 1, 1>, scalar_prefetch = 0 : i64, scratch_operands = 0 : i64, tpu.core_type = #tpu.core_type<tc>, window_params = [{transform_indices = @transform_0, window_bounds = array<i64: 14, 96>}, {transform_indices = @transform_1, window_bounds = array<i64: 96, 32>}, {transform_indices = @transform_2, window_bounds = array<i64: 1, 32>}, {transform_indices = @transform_3, window_bounds = array<i64: 14, 32>}, {transform_indices = @transform_4, window_bounds = array<i64: 14, 32>}]} {
    %c0 = arith.constant 0 : index
    %c0_0 = arith.constant 0 : index
    %0 = vector.load %arg2[%c0, %c0_0] : memref<14x96xf32, #tpu.memory_space<vmem>>, vector<14x96xf32>
    %c0_1 = arith.constant 0 : index
    %c0_2 = arith.constant 0 : index
    %1 = vector.load %arg3[%c0_1, %c0_2] : memref<96x32xbf16, #tpu.memory_space<vmem>>, vector<96x32xbf16>
    %c0_3 = arith.constant 0 : index
    %c0_4 = arith.constant 0 : index
    %2 = vector.load %arg4[%c0_3, %c0_4] : memref<1x32xf32, #tpu.memory_space<vmem>>, vector<1x32xf32>
    %3 = arith.truncf %0 : vector<14x96xf32> to vector<14x96xbf16>
    %cst = arith.constant dense<0.000000e+00> : vector<14x32xf32>
    %4 = tpu.matmul %3, %1, %cst {dimension_numbers = #tpu.dot_dimension_numbers<[1], [0], [0], [1], [0, 0, 1, 1], [], []>} : vector<14x96xbf16>, vector<96x32xbf16>, vector<14x32xf32> -> vector<14x32xf32>
    %5 = vector.broadcast %2 : vector<1x32xf32> to vector<14x32xf32>
    %6 = arith.addf %4, %5 : vector<14x32xf32>
    %cst_5 = arith.constant 5.65685415 : f32
    %7 = vector.broadcast %cst_5 : f32 to vector<14x32xf32>
    %8 = arith.mulf %6, %7 : vector<14x32xf32>
    %c0_6 = arith.constant 0 : index
    %c0_7 = arith.constant 0 : index
    %9 = vector.load %arg5[%c0_6, %c0_7] : memref<14x32xf32, #tpu.memory_space<vmem>>, vector<14x32xf32>
    %cst_8 = arith.constant 1.000000e+00 : f32
    %10 = vector.broadcast %cst_8 : f32 to vector<14x32xf32>
    %11 = arith.mulf %10, %9 : vector<14x32xf32>
    %12 = arith.addf %8, %11 : vector<14x32xf32>
    %c0_9 = arith.constant 0 : index
    %c0_10 = arith.constant 0 : index
    %13 = vector.load %arg6[%c0_9, %c0_10] : memref<14x32xf32, #tpu.memory_space<vmem>>, vector<14x32xf32>
    tpu.vector_store %arg6[%c0_9, %c0_10], %12 {strides = array<i32>} : memref<14x32xf32, #tpu.memory_space<vmem>>, vector<14x32xf32>,
    return
  }
  func.func @transform_0(%arg0: i32, %arg1: i32) -> (i32, i32) {
    %c0_i32 = arith.constant 0 : i32
    %c0_i32_0 = arith.constant 0 : i32
    return %arg0, %c0_i32 : i32, i32
  }
  func.func @transform_1(%arg0: i32, %arg1: i32) -> (i32, i32) {
    %c0_i32 = arith.constant 0 : i32
    %c0_i32_0 = arith.constant 0 : i32
    return %c0_i32, %arg1 : i32, i32
  }
  func.func @transform_2(%arg0: i32, %arg1: i32) -> (i32, i32) {
    %c0_i32 = arith.constant 0 : i32
    %c0_i32_0 = arith.constant 0 : i32
    return %c0_i32, %arg1 : i32, i32
  }
  func.func @transform_3(%arg0: i32, %arg1: i32) -> (i32, i32) {
    %c0_i32 = arith.constant 0 : i32
    return %arg0, %arg1 : i32, i32
  }
  func.func @transform_4(%arg0: i32, %arg1: i32) -> (i32, i32) {
    %c0_i32 = arith.constant 0 : i32
    return %arg0, %arg1 : i32, i32
  }
}

module attributes {stable_mosaic.version = 11 : i64} {
  func.func @_ffn_kernel(%arg0: i32, %arg1: memref<14x32xf32, #tpu.memory_space<vmem>>, %arg2: memref<1x32xf32, #tpu.memory_space<vmem>>, %arg3: memref<1x32xf32, #tpu.memory_space<vmem>>, %arg4: memref<32x128xbf16, #tpu.memory_space<vmem>>, %arg5: memref<1x128xf32, #tpu.memory_space<vmem>>, %arg6: memref<128x32xbf16, #tpu.memory_space<vmem>>, %arg7: memref<1x32xf32, #tpu.memory_space<vmem>>, %arg8: memref<14x32xf32, #tpu.memory_space<vmem>>) attributes {dimension_semantics = [#tpu.dimension_semantics<parallel>], iteration_bounds = array<i64: 1>, scalar_prefetch = 0 : i64, scratch_operands = 0 : i64, tpu.core_type = #tpu.core_type<tc>, window_params = [{transform_indices = @transform_0, window_bounds = array<i64: 14, 32>}, {pipeline_mode = #tpu.pipeline_mode<synchronous>, transform_indices = @transform_1, window_bounds = array<i64: 1, 32>}, {pipeline_mode = #tpu.pipeline_mode<synchronous>, transform_indices = @transform_2, window_bounds = array<i64: 1, 32>}, {pipeline_mode = #tpu.pipeline_mode<synchronous>, transform_indices = @transform_3, window_bounds = array<i64: 32, 128>}, {pipeline_mode = #tpu.pipeline_mode<synchronous>, transform_indices = @transform_4, window_bounds = array<i64: 1, 128>}, {pipeline_mode = #tpu.pipeline_mode<synchronous>, transform_indices = @transform_5, window_bounds = array<i64: 128, 32>}, {pipeline_mode = #tpu.pipeline_mode<synchronous>, transform_indices = @transform_6, window_bounds = array<i64: 1, 32>}, {transform_indices = @transform_7, window_bounds = array<i64: 14, 32>}]} {
    %c0 = arith.constant 0 : index
    %c0_0 = arith.constant 0 : index
    %0 = vector.load %arg1[%c0, %c0_0] : memref<14x32xf32, #tpu.memory_space<vmem>>, vector<14x32xf32>
    %c0_1 = arith.constant 0 : index
    %c0_2 = arith.constant 0 : index
    %1 = vector.load %arg2[%c0_1, %c0_2] : memref<1x32xf32, #tpu.memory_space<vmem>>, vector<1x32xf32>
    %c0_3 = arith.constant 0 : index
    %c0_4 = arith.constant 0 : index
    %2 = vector.load %arg3[%c0_3, %c0_4] : memref<1x32xf32, #tpu.memory_space<vmem>>, vector<1x32xf32>
    %cst = arith.constant dense<0.000000e+00> : vector<14xf32>
    %3 = vector.multi_reduction <add>, %0, %cst [1] : vector<14x32xf32> to vector<14xf32>
    %4 = vector.shape_cast %3 : vector<14xf32> to vector<14x1xf32>
    %cst_5 = arith.constant 3.200000e+01 : f32
    %5 = vector.broadcast %cst_5 : f32 to vector<14x1xf32>
    %6 = arith.divf %4, %5 : vector<14x1xf32>
    %7 = vector.broadcast %6 : vector<14x1xf32> to vector<14x32xf32>
    %8 = arith.subf %0, %7 : vector<14x32xf32>
    %9 = arith.mulf %8, %8 : vector<14x32xf32>
    %cst_6 = arith.constant dense<0.000000e+00> : vector<14xf32>
    %10 = vector.multi_reduction <add>, %9, %cst_6 [1] : vector<14x32xf32> to vector<14xf32>
    %11 = vector.shape_cast %10 : vector<14xf32> to vector<14x1xf32>
    %cst_7 = arith.constant 3.200000e+01 : f32
    %12 = vector.broadcast %cst_7 : f32 to vector<14x1xf32>
    %13 = arith.divf %11, %12 : vector<14x1xf32>
    %14 = vector.broadcast %6 : vector<14x1xf32> to vector<14x32xf32>
    %15 = arith.subf %0, %14 : vector<14x32xf32>
    %cst_8 = arith.constant 9.99999974E-6 : f32
    %16 = vector.broadcast %cst_8 : f32 to vector<14x1xf32>
    %17 = arith.addf %13, %16 : vector<14x1xf32>
    %18 = math.rsqrt %17 : vector<14x1xf32>
    %19 = vector.broadcast %18 : vector<14x1xf32> to vector<14x32xf32>
    %20 = arith.mulf %15, %19 : vector<14x32xf32>
    %21 = vector.broadcast %1 : vector<1x32xf32> to vector<14x32xf32>
    %22 = arith.mulf %20, %21 : vector<14x32xf32>
    %23 = vector.broadcast %2 : vector<1x32xf32> to vector<14x32xf32>
    %24 = arith.addf %22, %23 : vector<14x32xf32>
    %25 = arith.truncf %24 : vector<14x32xf32> to vector<14x32xbf16>
    %c0_9 = arith.constant 0 : index
    %c0_10 = arith.constant 0 : index
    %26 = vector.load %arg4[%c0_9, %c0_10] : memref<32x128xbf16, #tpu.memory_space<vmem>>, vector<32x128xbf16>
    %cst_11 = arith.constant dense<0.000000e+00> : vector<14x128xf32>
    %27 = tpu.matmul %25, %26, %cst_11 {dimension_numbers = #tpu.dot_dimension_numbers<[1], [0], [0], [1], [0, 0, 1, 1], [], []>} : vector<14x32xbf16>, vector<32x128xbf16>, vector<14x128xf32> -> vector<14x128xf32>
    %c0_12 = arith.constant 0 : index
    %c0_13 = arith.constant 0 : index
    %28 = vector.load %arg5[%c0_12, %c0_13] : memref<1x128xf32, #tpu.memory_space<vmem>>, vector<1x128xf32>
    %29 = vector.broadcast %28 : vector<1x128xf32> to vector<14x128xf32>
    %30 = arith.addf %27, %29 : vector<14x128xf32>
    %31 = arith.negf %30 : vector<14x128xf32>
    %32 = math.exp %31 : vector<14x128xf32>
    %cst_14 = arith.constant 1.000000e+00 : f32
    %33 = vector.broadcast %cst_14 : f32 to vector<14x128xf32>
    %34 = arith.addf %33, %32 : vector<14x128xf32>
    %35 = arith.divf %33, %34 : vector<14x128xf32>
    %36 = arith.mulf %30, %35 : vector<14x128xf32>
    %37 = arith.truncf %36 : vector<14x128xf32> to vector<14x128xbf16>
    %c0_15 = arith.constant 0 : index
    %c0_16 = arith.constant 0 : index
    %38 = vector.load %arg6[%c0_15, %c0_16] : memref<128x32xbf16, #tpu.memory_space<vmem>>, vector<128x32xbf16>
    %cst_17 = arith.constant dense<0.000000e+00> : vector<14x32xf32>
    %39 = tpu.matmul %37, %38, %cst_17 {dimension_numbers = #tpu.dot_dimension_numbers<[1], [0], [0], [1], [0, 0, 1, 1], [], []>} : vector<14x128xbf16>, vector<128x32xbf16>, vector<14x32xf32> -> vector<14x32xf32>
    %c0_18 = arith.constant 0 : index
    %c0_19 = arith.constant 0 : index
    %40 = vector.load %arg7[%c0_18, %c0_19] : memref<1x32xf32, #tpu.memory_space<vmem>>, vector<1x32xf32>
    %41 = vector.broadcast %40 : vector<1x32xf32> to vector<14x32xf32>
    %42 = arith.addf %39, %41 : vector<14x32xf32>
    %cst_20 = arith.constant 5.000000e-01 : f32
    %43 = vector.broadcast %cst_20 : f32 to vector<14x32xf32>
    %44 = arith.mulf %43, %42 : vector<14x32xf32>
    %45 = arith.addf %0, %44 : vector<14x32xf32>
    %c0_21 = arith.constant 0 : index
    %c0_22 = arith.constant 0 : index
    %46 = vector.load %arg8[%c0_21, %c0_22] : memref<14x32xf32, #tpu.memory_space<vmem>>, vector<14x32xf32>
    tpu.vector_store %arg8[%c0_21, %c0_22], %45 {strides = array<i32>} : memref<14x32xf32, #tpu.memory_space<vmem>>, vector<14x32xf32>,
    return
  }
  func.func @transform_0(%arg0: i32) -> (i32, i32) {
    %c0_i32 = arith.constant 0 : i32
    %c0_i32_0 = arith.constant 0 : i32
    return %arg0, %c0_i32 : i32, i32
  }
  func.func @transform_1(%arg0: i32) -> (i32, i32) {
    %c0_i32 = arith.constant 0 : i32
    %c0_i32_0 = arith.constant 0 : i32
    %c0_i32_1 = arith.constant 0 : i32
    return %c0_i32, %c0_i32_0 : i32, i32
  }
  func.func @transform_2(%arg0: i32) -> (i32, i32) {
    %c0_i32 = arith.constant 0 : i32
    %c0_i32_0 = arith.constant 0 : i32
    %c0_i32_1 = arith.constant 0 : i32
    return %c0_i32, %c0_i32_0 : i32, i32
  }
  func.func @transform_3(%arg0: i32) -> (i32, i32) {
    %c0_i32 = arith.constant 0 : i32
    %c0_i32_0 = arith.constant 0 : i32
    %c0_i32_1 = arith.constant 0 : i32
    return %c0_i32, %c0_i32_0 : i32, i32
  }
  func.func @transform_4(%arg0: i32) -> (i32, i32) {
    %c0_i32 = arith.constant 0 : i32
    %c0_i32_0 = arith.constant 0 : i32
    %c0_i32_1 = arith.constant 0 : i32
    return %c0_i32, %c0_i32_0 : i32, i32
  }
  func.func @transform_5(%arg0: i32) -> (i32, i32) {
    %c0_i32 = arith.constant 0 : i32
    %c0_i32_0 = arith.constant 0 : i32
    %c0_i32_1 = arith.constant 0 : i32
    return %c0_i32, %c0_i32_0 : i32, i32
  }
  func.func @transform_6(%arg0: i32) -> (i32, i32) {
    %c0_i32 = arith.constant 0 : i32
    %c0_i32_0 = arith.constant 0 : i32
    %c0_i32_1 = arith.constant 0 : i32
    return %c0_i32, %c0_i32_0 : i32, i32
  }
  func.func @transform_7(%arg0: i32) -> (i32, i32) {
    %c0_i32 = arith.constant 0 : i32
    %c0_i32_0 = arith.constant 0 : i32
    return %arg0, %c0_i32 : i32, i32
  }
}

module attributes {stable_mosaic.version = 11 : i64} {
  func.func @_fused_linear_kernel(%arg0: i32, %arg1: i32, %arg2: memref<14x32xf32, #tpu.memory_space<vmem>>, %arg3: memref<1x32xf32, #tpu.memory_space<vmem>>, %arg4: memref<1x32xf32, #tpu.memory_space<vmem>>, %arg5: memref<32x96xbf16, #tpu.memory_space<vmem>>, %arg6: memref<1x96xf32, #tpu.memory_space<vmem>>, %arg7: memref<14x96xf32, #tpu.memory_space<vmem>>) attributes {dimension_semantics = [#tpu.dimension_semantics<parallel>, #tpu.dimension_semantics<parallel>], iteration_bounds = array<i64: 1, 1>, scalar_prefetch = 0 : i64, scratch_operands = 0 : i64, tpu.core_type = #tpu.core_type<tc>, window_params = [{transform_indices = @transform_0, window_bounds = array<i64: 14, 32>}, {pipeline_mode = #tpu.pipeline_mode<synchronous>, transform_indices = @transform_1, window_bounds = array<i64: 1, 32>}, {pipeline_mode = #tpu.pipeline_mode<synchronous>, transform_indices = @transform_2, window_bounds = array<i64: 1, 32>}, {transform_indices = @transform_3, window_bounds = array<i64: 32, 96>}, {transform_indices = @transform_4, window_bounds = array<i64: 1, 96>}, {transform_indices = @transform_5, window_bounds = array<i64: 14, 96>}]} {
    %c0 = arith.constant 0 : index
    %c0_0 = arith.constant 0 : index
    %0 = vector.load %arg2[%c0, %c0_0] : memref<14x32xf32, #tpu.memory_space<vmem>>, vector<14x32xf32>
    %c0_1 = arith.constant 0 : index
    %c0_2 = arith.constant 0 : index
    %1 = vector.load %arg3[%c0_1, %c0_2] : memref<1x32xf32, #tpu.memory_space<vmem>>, vector<1x32xf32>
    %c0_3 = arith.constant 0 : index
    %c0_4 = arith.constant 0 : index
    %2 = vector.load %arg4[%c0_3, %c0_4] : memref<1x32xf32, #tpu.memory_space<vmem>>, vector<1x32xf32>
    %cst = arith.constant dense<0.000000e+00> : vector<14xf32>
    %3 = vector.multi_reduction <add>, %0, %cst [1] : vector<14x32xf32> to vector<14xf32>
    %4 = vector.shape_cast %3 : vector<14xf32> to vector<14x1xf32>
    %cst_5 = arith.constant 3.200000e+01 : f32
    %5 = vector.broadcast %cst_5 : f32 to vector<14x1xf32>
    %6 = arith.divf %4, %5 : vector<14x1xf32>
    %7 = vector.broadcast %6 : vector<14x1xf32> to vector<14x32xf32>
    %8 = arith.subf %0, %7 : vector<14x32xf32>
    %9 = arith.mulf %8, %8 : vector<14x32xf32>
    %cst_6 = arith.constant dense<0.000000e+00> : vector<14xf32>
    %10 = vector.multi_reduction <add>, %9, %cst_6 [1] : vector<14x32xf32> to vector<14xf32>
    %11 = vector.shape_cast %10 : vector<14xf32> to vector<14x1xf32>
    %cst_7 = arith.constant 3.200000e+01 : f32
    %12 = vector.broadcast %cst_7 : f32 to vector<14x1xf32>
    %13 = arith.divf %11, %12 : vector<14x1xf32>
    %14 = vector.broadcast %6 : vector<14x1xf32> to vector<14x32xf32>
    %15 = arith.subf %0, %14 : vector<14x32xf32>
    %cst_8 = arith.constant 9.99999974E-6 : f32
    %16 = vector.broadcast %cst_8 : f32 to vector<14x1xf32>
    %17 = arith.addf %13, %16 : vector<14x1xf32>
    %18 = math.rsqrt %17 : vector<14x1xf32>
    %19 = vector.broadcast %18 : vector<14x1xf32> to vector<14x32xf32>
    %20 = arith.mulf %15, %19 : vector<14x32xf32>
    %21 = vector.broadcast %1 : vector<1x32xf32> to vector<14x32xf32>
    %22 = arith.mulf %20, %21 : vector<14x32xf32>
    %23 = vector.broadcast %2 : vector<1x32xf32> to vector<14x32xf32>
    %24 = arith.addf %22, %23 : vector<14x32xf32>
    %c0_9 = arith.constant 0 : index
    %c0_10 = arith.constant 0 : index
    %25 = vector.load %arg5[%c0_9, %c0_10] : memref<32x96xbf16, #tpu.memory_space<vmem>>, vector<32x96xbf16>
    %c0_11 = arith.constant 0 : index
    %c0_12 = arith.constant 0 : index
    %26 = vector.load %arg6[%c0_11, %c0_12] : memref<1x96xf32, #tpu.memory_space<vmem>>, vector<1x96xf32>
    %27 = arith.truncf %24 : vector<14x32xf32> to vector<14x32xbf16>
    %cst_13 = arith.constant dense<0.000000e+00> : vector<14x96xf32>
    %28 = tpu.matmul %27, %25, %cst_13 {dimension_numbers = #tpu.dot_dimension_numbers<[1], [0], [0], [1], [0, 0, 1, 1], [], []>} : vector<14x32xbf16>, vector<32x96xbf16>, vector<14x96xf32> -> vector<14x96xf32>
    %29 = vector.broadcast %26 : vector<1x96xf32> to vector<14x96xf32>
    %30 = arith.addf %28, %29 : vector<14x96xf32>
    %c0_14 = arith.constant 0 : index
    %c0_15 = arith.constant 0 : index
    %31 = vector.load %arg7[%c0_14, %c0_15] : memref<14x96xf32, #tpu.memory_space<vmem>>, vector<14x96xf32>
    tpu.vector_store %arg7[%c0_14, %c0_15], %30 {strides = array<i32>} : memref<14x96xf32, #tpu.memory_space<vmem>>, vector<14x96xf32>,
    return
  }
  func.func @transform_0(%arg0: i32, %arg1: i32) -> (i32, i32) {
    %c0_i32 = arith.constant 0 : i32
    %c0_i32_0 = arith.constant 0 : i32
    return %arg0, %c0_i32 : i32, i32
  }
  func.func @transform_1(%arg0: i32, %arg1: i32) -> (i32, i32) {
    %c0_i32 = arith.constant 0 : i32
    %c0_i32_0 = arith.constant 0 : i32
    %c0_i32_1 = arith.constant 0 : i32
    return %c0_i32, %c0_i32_0 : i32, i32
  }
  func.func @transform_2(%arg0: i32, %arg1: i32) -> (i32, i32) {
    %c0_i32 = arith.constant 0 : i32
    %c0_i32_0 = arith.constant 0 : i32
    %c0_i32_1 = arith.constant 0 : i32
    return %c0_i32, %c0_i32_0 : i32, i32
  }
  func.func @transform_3(%arg0: i32, %arg1: i32) -> (i32, i32) {
    %c0_i32 = arith.constant 0 : i32
    %c0_i32_0 = arith.constant 0 : i32
    return %c0_i32, %arg1 : i32, i32
  }
  func.func @transform_4(%arg0: i32, %arg1: i32) -> (i32, i32) {
    %c0_i32 = arith.constant 0 : i32
    %c0_i32_0 = arith.constant 0 : i32
    return %c0_i32, %arg1 : i32, i32
  }
  func.func @transform_5(%arg0: i32, %arg1: i32) -> (i32, i32) {
    %c0_i32 = arith.constant 0 : i32
    return %arg0, %arg1 : i32, i32
  }
}

module attributes {stable_mosaic.version = 11 : i64} {
  func.func @_attn_kernel(%arg0: i32, %arg1: memref<1x7x96xf32, #tpu.memory_space<vmem>>, %arg2: memref<1x1x7xf32, #tpu.memory_space<vmem>>, %arg3: memref<1x7x32xf32, #tpu.memory_space<vmem>>) attributes {dimension_semantics = [#tpu.dimension_semantics<parallel>], iteration_bounds = array<i64: 2>, scalar_prefetch = 0 : i64, scratch_operands = 0 : i64, tpu.core_type = #tpu.core_type<tc>, window_params = [{transform_indices = @transform_0, window_bounds = array<i64: 1, 7, 96>}, {transform_indices = @transform_1, window_bounds = array<i64: 1, 1, 7>}, {transform_indices = @transform_2, window_bounds = array<i64: 1, 7, 32>}]} {
    %c0 = arith.constant 0 : index
    %c0_0 = arith.constant 0 : index
    %c0_1 = arith.constant 0 : index
    %0 = vector.load %arg1[%c0, %c0_0, %c0_1] : memref<1x7x96xf32, #tpu.memory_space<vmem>>, vector<1x7x96xf32>
    %1 = vector.shape_cast %0 : vector<1x7x96xf32> to vector<7x96xf32>
    %c0_2 = arith.constant 0 : index
    %c0_3 = arith.constant 0 : index
    %c0_4 = arith.constant 0 : index
    %2 = vector.load %arg2[%c0_2, %c0_3, %c0_4] : memref<1x1x7xf32, #tpu.memory_space<vmem>>, vector<1x1x7xf32>
    %3 = vector.shape_cast %2 : vector<1x1x7xf32> to vector<1x7xf32>
    %4 = vector.extract_strided_slice %1 {offsets = [0, 0], sizes = [7, 8], strides = [1, 1]} : vector<7x96xf32> to vector<7x8xf32>
    %5 = arith.truncf %4 : vector<7x8xf32> to vector<7x8xbf16>
    %6 = vector.extract_strided_slice %1 {offsets = [0, 32], sizes = [7, 8], strides = [1, 1]} : vector<7x96xf32> to vector<7x8xf32>
    %7 = arith.truncf %6 : vector<7x8xf32> to vector<7x8xbf16>
    %8 = vector.extract_strided_slice %1 {offsets = [0, 64], sizes = [7, 8], strides = [1, 1]} : vector<7x96xf32> to vector<7x8xf32>
    %9 = arith.truncf %8 : vector<7x8xf32> to vector<7x8xbf16>
    %cst = arith.constant dense<0.000000e+00> : vector<7x7xf32>
    %10 = tpu.matmul %5, %7, %cst {dimension_numbers = #tpu.dot_dimension_numbers<[1], [1], [0], [0], [0, 0, 1, 0], [], []>} : vector<7x8xbf16>, vector<7x8xbf16>, vector<7x7xf32> -> vector<7x7xf32>
    %cst_5 = arith.constant 0.353553385 : f32
    %11 = vector.broadcast %cst_5 : f32 to vector<7x7xf32>
    %12 = arith.mulf %10, %11 : vector<7x7xf32>
    %13 = vector.broadcast %3 : vector<1x7xf32> to vector<7x7xf32>
    %14 = arith.addf %12, %13 : vector<7x7xf32>
    %cst_6 = arith.constant dense<0xFF800000> : vector<7xf32>
    %15 = vector.multi_reduction <maximumf>, %14, %cst_6 [1] : vector<7x7xf32> to vector<7xf32>
    %16 = vector.shape_cast %15 : vector<7xf32> to vector<7x1xf32>
    %17 = vector.broadcast %16 : vector<7x1xf32> to vector<7x7xf32>
    %18 = arith.subf %14, %17 : vector<7x7xf32>
    %19 = math.exp %18 : vector<7x7xf32>
    %cst_7 = arith.constant dense<0.000000e+00> : vector<7xf32>
    %20 = vector.multi_reduction <add>, %19, %cst_7 [1] : vector<7x7xf32> to vector<7xf32>
    %21 = vector.shape_cast %20 : vector<7xf32> to vector<7x1xf32>
    %22 = tpu.reciprocal %21 {approx = true} : vector<7x1xf32> -> vector<7x1xf32>
    %23 = vector.broadcast %22 : vector<7x1xf32> to vector<7x7xf32>
    %24 = arith.mulf %19, %23 : vector<7x7xf32>
    %25 = arith.truncf %24 : vector<7x7xf32> to vector<7x7xbf16>
    %cst_8 = arith.constant dense<0.000000e+00> : vector<7x8xf32>
    %26 = tpu.matmul %25, %9, %cst_8 {dimension_numbers = #tpu.dot_dimension_numbers<[1], [0], [0], [1], [0, 0, 1, 1], [], []>} : vector<7x7xbf16>, vector<7x8xbf16>, vector<7x8xf32> -> vector<7x8xf32>
    %27 = vector.extract_strided_slice %1 {offsets = [0, 8], sizes = [7, 8], strides = [1, 1]} : vector<7x96xf32> to vector<7x8xf32>
    %28 = arith.truncf %27 : vector<7x8xf32> to vector<7x8xbf16>
    %29 = vector.extract_strided_slice %1 {offsets = [0, 40], sizes = [7, 8], strides = [1, 1]} : vector<7x96xf32> to vector<7x8xf32>
    %30 = arith.truncf %29 : vector<7x8xf32> to vector<7x8xbf16>
    %31 = vector.extract_strided_slice %1 {offsets = [0, 72], sizes = [7, 8], strides = [1, 1]} : vector<7x96xf32> to vector<7x8xf32>
    %32 = arith.truncf %31 : vector<7x8xf32> to vector<7x8xbf16>
    %cst_9 = arith.constant dense<0.000000e+00> : vector<7x7xf32>
    %33 = tpu.matmul %28, %30, %cst_9 {dimension_numbers = #tpu.dot_dimension_numbers<[1], [1], [0], [0], [0, 0, 1, 0], [], []>} : vector<7x8xbf16>, vector<7x8xbf16>, vector<7x7xf32> -> vector<7x7xf32>
    %cst_10 = arith.constant 0.353553385 : f32
    %34 = vector.broadcast %cst_10 : f32 to vector<7x7xf32>
    %35 = arith.mulf %33, %34 : vector<7x7xf32>
    %36 = vector.broadcast %3 : vector<1x7xf32> to vector<7x7xf32>
    %37 = arith.addf %35, %36 : vector<7x7xf32>
    %cst_11 = arith.constant dense<0xFF800000> : vector<7xf32>
    %38 = vector.multi_reduction <maximumf>, %37, %cst_11 [1] : vector<7x7xf32> to vector<7xf32>
    %39 = vector.shape_cast %38 : vector<7xf32> to vector<7x1xf32>
    %40 = vector.broadcast %39 : vector<7x1xf32> to vector<7x7xf32>
    %41 = arith.subf %37, %40 : vector<7x7xf32>
    %42 = math.exp %41 : vector<7x7xf32>
    %cst_12 = arith.constant dense<0.000000e+00> : vector<7xf32>
    %43 = vector.multi_reduction <add>, %42, %cst_12 [1] : vector<7x7xf32> to vector<7xf32>
    %44 = vector.shape_cast %43 : vector<7xf32> to vector<7x1xf32>
    %45 = tpu.reciprocal %44 {approx = true} : vector<7x1xf32> -> vector<7x1xf32>
    %46 = vector.broadcast %45 : vector<7x1xf32> to vector<7x7xf32>
    %47 = arith.mulf %42, %46 : vector<7x7xf32>
    %48 = arith.truncf %47 : vector<7x7xf32> to vector<7x7xbf16>
    %cst_13 = arith.constant dense<0.000000e+00> : vector<7x8xf32>
    %49 = tpu.matmul %48, %32, %cst_13 {dimension_numbers = #tpu.dot_dimension_numbers<[1], [0], [0], [1], [0, 0, 1, 1], [], []>} : vector<7x7xbf16>, vector<7x8xbf16>, vector<7x8xf32> -> vector<7x8xf32>
    %50 = vector.extract_strided_slice %1 {offsets = [0, 16], sizes = [7, 8], strides = [1, 1]} : vector<7x96xf32> to vector<7x8xf32>
    %51 = arith.truncf %50 : vector<7x8xf32> to vector<7x8xbf16>
    %52 = vector.extract_strided_slice %1 {offsets = [0, 48], sizes = [7, 8], strides = [1, 1]} : vector<7x96xf32> to vector<7x8xf32>
    %53 = arith.truncf %52 : vector<7x8xf32> to vector<7x8xbf16>
    %54 = vector.extract_strided_slice %1 {offsets = [0, 80], sizes = [7, 8], strides = [1, 1]} : vector<7x96xf32> to vector<7x8xf32>
    %55 = arith.truncf %54 : vector<7x8xf32> to vector<7x8xbf16>
    %cst_14 = arith.constant dense<0.000000e+00> : vector<7x7xf32>
    %56 = tpu.matmul %51, %53, %cst_14 {dimension_numbers = #tpu.dot_dimension_numbers<[1], [1], [0], [0], [0, 0, 1, 0], [], []>} : vector<7x8xbf16>, vector<7x8xbf16>, vector<7x7xf32> -> vector<7x7xf32>
    %cst_15 = arith.constant 0.353553385 : f32
    %57 = vector.broadcast %cst_15 : f32 to vector<7x7xf32>
    %58 = arith.mulf %56, %57 : vector<7x7xf32>
    %59 = vector.broadcast %3 : vector<1x7xf32> to vector<7x7xf32>
    %60 = arith.addf %58, %59 : vector<7x7xf32>
    %cst_16 = arith.constant dense<0xFF800000> : vector<7xf32>
    %61 = vector.multi_reduction <maximumf>, %60, %cst_16 [1] : vector<7x7xf32> to vector<7xf32>
    %62 = vector.shape_cast %61 : vector<7xf32> to vector<7x1xf32>
    %63 = vector.broadcast %62 : vector<7x1xf32> to vector<7x7xf32>
    %64 = arith.subf %60, %63 : vector<7x7xf32>
    %65 = math.exp %64 : vector<7x7xf32>
    %cst_17 = arith.constant dense<0.000000e+00> : vector<7xf32>
    %66 = vector.multi_reduction <add>, %65, %cst_17 [1] : vector<7x7xf32> to vector<7xf32>
    %67 = vector.shape_cast %66 : vector<7xf32> to vector<7x1xf32>
    %68 = tpu.reciprocal %67 {approx = true} : vector<7x1xf32> -> vector<7x1xf32>
    %69 = vector.broadcast %68 : vector<7x1xf32> to vector<7x7xf32>
    %70 = arith.mulf %65, %69 : vector<7x7xf32>
    %71 = arith.truncf %70 : vector<7x7xf32> to vector<7x7xbf16>
    %cst_18 = arith.constant dense<0.000000e+00> : vector<7x8xf32>
    %72 = tpu.matmul %71, %55, %cst_18 {dimension_numbers = #tpu.dot_dimension_numbers<[1], [0], [0], [1], [0, 0, 1, 1], [], []>} : vector<7x7xbf16>, vector<7x8xbf16>, vector<7x8xf32> -> vector<7x8xf32>
    %73 = vector.extract_strided_slice %1 {offsets = [0, 24], sizes = [7, 8], strides = [1, 1]} : vector<7x96xf32> to vector<7x8xf32>
    %74 = arith.truncf %73 : vector<7x8xf32> to vector<7x8xbf16>
    %75 = vector.extract_strided_slice %1 {offsets = [0, 56], sizes = [7, 8], strides = [1, 1]} : vector<7x96xf32> to vector<7x8xf32>
    %76 = arith.truncf %75 : vector<7x8xf32> to vector<7x8xbf16>
    %77 = vector.extract_strided_slice %1 {offsets = [0, 88], sizes = [7, 8], strides = [1, 1]} : vector<7x96xf32> to vector<7x8xf32>
    %78 = arith.truncf %77 : vector<7x8xf32> to vector<7x8xbf16>
    %cst_19 = arith.constant dense<0.000000e+00> : vector<7x7xf32>
    %79 = tpu.matmul %74, %76, %cst_19 {dimension_numbers = #tpu.dot_dimension_numbers<[1], [1], [0], [0], [0, 0, 1, 0], [], []>} : vector<7x8xbf16>, vector<7x8xbf16>, vector<7x7xf32> -> vector<7x7xf32>
    %cst_20 = arith.constant 0.353553385 : f32
    %80 = vector.broadcast %cst_20 : f32 to vector<7x7xf32>
    %81 = arith.mulf %79, %80 : vector<7x7xf32>
    %82 = vector.broadcast %3 : vector<1x7xf32> to vector<7x7xf32>
    %83 = arith.addf %81, %82 : vector<7x7xf32>
    %cst_21 = arith.constant dense<0xFF800000> : vector<7xf32>
    %84 = vector.multi_reduction <maximumf>, %83, %cst_21 [1] : vector<7x7xf32> to vector<7xf32>
    %85 = vector.shape_cast %84 : vector<7xf32> to vector<7x1xf32>
    %86 = vector.broadcast %85 : vector<7x1xf32> to vector<7x7xf32>
    %87 = arith.subf %83, %86 : vector<7x7xf32>
    %88 = math.exp %87 : vector<7x7xf32>
    %cst_22 = arith.constant dense<0.000000e+00> : vector<7xf32>
    %89 = vector.multi_reduction <add>, %88, %cst_22 [1] : vector<7x7xf32> to vector<7xf32>
    %90 = vector.shape_cast %89 : vector<7xf32> to vector<7x1xf32>
    %91 = tpu.reciprocal %90 {approx = true} : vector<7x1xf32> -> vector<7x1xf32>
    %92 = vector.broadcast %91 : vector<7x1xf32> to vector<7x7xf32>
    %93 = arith.mulf %88, %92 : vector<7x7xf32>
    %94 = arith.truncf %93 : vector<7x7xf32> to vector<7x7xbf16>
    %cst_23 = arith.constant dense<0.000000e+00> : vector<7x8xf32>
    %95 = tpu.matmul %94, %78, %cst_23 {dimension_numbers = #tpu.dot_dimension_numbers<[1], [0], [0], [1], [0, 0, 1, 1], [], []>} : vector<7x7xbf16>, vector<7x8xbf16>, vector<7x8xf32> -> vector<7x8xf32>
    %96 = tpu.concatenate %26, %49, %72, %95 in 1 : vector<7x8xf32>, vector<7x8xf32>, vector<7x8xf32>, vector<7x8xf32> -> vector<7x32xf32>
    %c0_24 = arith.constant 0 : index
    %c0_25 = arith.constant 0 : index
    %c0_26 = arith.constant 0 : index
    %97 = vector.load %arg3[%c0_24, %c0_25, %c0_26] : memref<1x7x32xf32, #tpu.memory_space<vmem>>, vector<1x7x32xf32>
    %98 = vector.shape_cast %97 : vector<1x7x32xf32> to vector<7x32xf32>
    %99 = vector.shape_cast %96 : vector<7x32xf32> to vector<1x7x32xf32>
    tpu.vector_store %arg3[%c0_24, %c0_25, %c0_26], %99 {strides = array<i32>} : memref<1x7x32xf32, #tpu.memory_space<vmem>>, vector<1x7x32xf32>,
    return
  }
  func.func @transform_0(%arg0: i32) -> (i32, i32, i32) {
    %c0_i32 = arith.constant 0 : i32
    %c0_i32_0 = arith.constant 0 : i32
    %c0_i32_1 = arith.constant 0 : i32
    return %arg0, %c0_i32, %c0_i32_0 : i32, i32, i32
  }
  func.func @transform_1(%arg0: i32) -> (i32, i32, i32) {
    %c0_i32 = arith.constant 0 : i32
    %c0_i32_0 = arith.constant 0 : i32
    %c0_i32_1 = arith.constant 0 : i32
    return %arg0, %c0_i32, %c0_i32_0 : i32, i32, i32
  }
  func.func @transform_2(%arg0: i32) -> (i32, i32, i32) {
    %c0_i32 = arith.constant 0 : i32
    %c0_i32_0 = arith.constant 0 : i32
    %c0_i32_1 = arith.constant 0 : i32
    return %arg0, %c0_i32, %c0_i32_0 : i32, i32, i32
  }
}

module attributes {stable_mosaic.version = 11 : i64} {
  func.func @_fused_linear_kernel(%arg0: i32, %arg1: i32, %arg2: memref<14x32xf32, #tpu.memory_space<vmem>>, %arg3: memref<32x32xbf16, #tpu.memory_space<vmem>>, %arg4: memref<1x32xf32, #tpu.memory_space<vmem>>, %arg5: memref<14x32xf32, #tpu.memory_space<vmem>>, %arg6: memref<14x32xf32, #tpu.memory_space<vmem>>) attributes {dimension_semantics = [#tpu.dimension_semantics<parallel>, #tpu.dimension_semantics<parallel>], iteration_bounds = array<i64: 1, 1>, scalar_prefetch = 0 : i64, scratch_operands = 0 : i64, tpu.core_type = #tpu.core_type<tc>, window_params = [{transform_indices = @transform_0, window_bounds = array<i64: 14, 32>}, {transform_indices = @transform_1, window_bounds = array<i64: 32, 32>}, {transform_indices = @transform_2, window_bounds = array<i64: 1, 32>}, {transform_indices = @transform_3, window_bounds = array<i64: 14, 32>}, {transform_indices = @transform_4, window_bounds = array<i64: 14, 32>}]} {
    %c0 = arith.constant 0 : index
    %c0_0 = arith.constant 0 : index
    %0 = vector.load %arg2[%c0, %c0_0] : memref<14x32xf32, #tpu.memory_space<vmem>>, vector<14x32xf32>
    %c0_1 = arith.constant 0 : index
    %c0_2 = arith.constant 0 : index
    %1 = vector.load %arg3[%c0_1, %c0_2] : memref<32x32xbf16, #tpu.memory_space<vmem>>, vector<32x32xbf16>
    %c0_3 = arith.constant 0 : index
    %c0_4 = arith.constant 0 : index
    %2 = vector.load %arg4[%c0_3, %c0_4] : memref<1x32xf32, #tpu.memory_space<vmem>>, vector<1x32xf32>
    %3 = arith.truncf %0 : vector<14x32xf32> to vector<14x32xbf16>
    %cst = arith.constant dense<0.000000e+00> : vector<14x32xf32>
    %4 = tpu.matmul %3, %1, %cst {dimension_numbers = #tpu.dot_dimension_numbers<[1], [0], [0], [1], [0, 0, 1, 1], [], []>} : vector<14x32xbf16>, vector<32x32xbf16>, vector<14x32xf32> -> vector<14x32xf32>
    %5 = vector.broadcast %2 : vector<1x32xf32> to vector<14x32xf32>
    %6 = arith.addf %4, %5 : vector<14x32xf32>
    %c0_5 = arith.constant 0 : index
    %c0_6 = arith.constant 0 : index
    %7 = vector.load %arg5[%c0_5, %c0_6] : memref<14x32xf32, #tpu.memory_space<vmem>>, vector<14x32xf32>
    %cst_7 = arith.constant 1.000000e+00 : f32
    %8 = vector.broadcast %cst_7 : f32 to vector<14x32xf32>
    %9 = arith.mulf %8, %7 : vector<14x32xf32>
    %10 = arith.addf %6, %9 : vector<14x32xf32>
    %c0_8 = arith.constant 0 : index
    %c0_9 = arith.constant 0 : index
    %11 = vector.load %arg6[%c0_8, %c0_9] : memref<14x32xf32, #tpu.memory_space<vmem>>, vector<14x32xf32>
    tpu.vector_store %arg6[%c0_8, %c0_9], %10 {strides = array<i32>} : memref<14x32xf32, #tpu.memory_space<vmem>>, vector<14x32xf32>,
    return
  }
  func.func @transform_0(%arg0: i32, %arg1: i32) -> (i32, i32) {
    %c0_i32 = arith.constant 0 : i32
    %c0_i32_0 = arith.constant 0 : i32
    return %arg0, %c0_i32 : i32, i32
  }
  func.func @transform_1(%arg0: i32, %arg1: i32) -> (i32, i32) {
    %c0_i32 = arith.constant 0 : i32
    %c0_i32_0 = arith.constant 0 : i32
    return %c0_i32, %arg1 : i32, i32
  }
  func.func @transform_2(%arg0: i32, %arg1: i32) -> (i32, i32) {
    %c0_i32 = arith.constant 0 : i32
    %c0_i32_0 = arith.constant 0 : i32
    return %c0_i32, %arg1 : i32, i32
  }
  func.func @transform_3(%arg0: i32, %arg1: i32) -> (i32, i32) {
    %c0_i32 = arith.constant 0 : i32
    return %arg0, %arg1 : i32, i32
  }
  func.func @transform_4(%arg0: i32, %arg1: i32) -> (i32, i32) {
    %c0_i32 = arith.constant 0 : i32
    return %arg0, %arg1 : i32, i32
  }
}

module attributes {stable_mosaic.version = 11 : i64} {
  func.func @_ln_glu_kernel(%arg0: i32, %arg1: memref<14x32xf32, #tpu.memory_space<vmem>>, %arg2: memref<1x32xf32, #tpu.memory_space<vmem>>, %arg3: memref<1x32xf32, #tpu.memory_space<vmem>>, %arg4: memref<32x32xbf16, #tpu.memory_space<vmem>>, %arg5: memref<1x32xf32, #tpu.memory_space<vmem>>, %arg6: memref<32x32xbf16, #tpu.memory_space<vmem>>, %arg7: memref<1x32xf32, #tpu.memory_space<vmem>>, %arg8: memref<14x32xf32, #tpu.memory_space<vmem>>) attributes {dimension_semantics = [#tpu.dimension_semantics<parallel>], iteration_bounds = array<i64: 1>, scalar_prefetch = 0 : i64, scratch_operands = 0 : i64, tpu.core_type = #tpu.core_type<tc>, window_params = [{transform_indices = @transform_0, window_bounds = array<i64: 14, 32>}, {pipeline_mode = #tpu.pipeline_mode<synchronous>, transform_indices = @transform_1, window_bounds = array<i64: 1, 32>}, {pipeline_mode = #tpu.pipeline_mode<synchronous>, transform_indices = @transform_2, window_bounds = array<i64: 1, 32>}, {pipeline_mode = #tpu.pipeline_mode<synchronous>, transform_indices = @transform_3, window_bounds = array<i64: 32, 32>}, {pipeline_mode = #tpu.pipeline_mode<synchronous>, transform_indices = @transform_4, window_bounds = array<i64: 1, 32>}, {pipeline_mode = #tpu.pipeline_mode<synchronous>, transform_indices = @transform_5, window_bounds = array<i64: 32, 32>}, {pipeline_mode = #tpu.pipeline_mode<synchronous>, transform_indices = @transform_6, window_bounds = array<i64: 1, 32>}, {transform_indices = @transform_7, window_bounds = array<i64: 14, 32>}]} {
    %c0 = arith.constant 0 : index
    %c0_0 = arith.constant 0 : index
    %0 = vector.load %arg1[%c0, %c0_0] : memref<14x32xf32, #tpu.memory_space<vmem>>, vector<14x32xf32>
    %c0_1 = arith.constant 0 : index
    %c0_2 = arith.constant 0 : index
    %1 = vector.load %arg2[%c0_1, %c0_2] : memref<1x32xf32, #tpu.memory_space<vmem>>, vector<1x32xf32>
    %c0_3 = arith.constant 0 : index
    %c0_4 = arith.constant 0 : index
    %2 = vector.load %arg3[%c0_3, %c0_4] : memref<1x32xf32, #tpu.memory_space<vmem>>, vector<1x32xf32>
    %cst = arith.constant dense<0.000000e+00> : vector<14xf32>
    %3 = vector.multi_reduction <add>, %0, %cst [1] : vector<14x32xf32> to vector<14xf32>
    %4 = vector.shape_cast %3 : vector<14xf32> to vector<14x1xf32>
    %cst_5 = arith.constant 3.200000e+01 : f32
    %5 = vector.broadcast %cst_5 : f32 to vector<14x1xf32>
    %6 = arith.divf %4, %5 : vector<14x1xf32>
    %7 = vector.broadcast %6 : vector<14x1xf32> to vector<14x32xf32>
    %8 = arith.subf %0, %7 : vector<14x32xf32>
    %9 = arith.mulf %8, %8 : vector<14x32xf32>
    %cst_6 = arith.constant dense<0.000000e+00> : vector<14xf32>
    %10 = vector.multi_reduction <add>, %9, %cst_6 [1] : vector<14x32xf32> to vector<14xf32>
    %11 = vector.shape_cast %10 : vector<14xf32> to vector<14x1xf32>
    %cst_7 = arith.constant 3.200000e+01 : f32
    %12 = vector.broadcast %cst_7 : f32 to vector<14x1xf32>
    %13 = arith.divf %11, %12 : vector<14x1xf32>
    %14 = vector.broadcast %6 : vector<14x1xf32> to vector<14x32xf32>
    %15 = arith.subf %0, %14 : vector<14x32xf32>
    %cst_8 = arith.constant 9.99999974E-6 : f32
    %16 = vector.broadcast %cst_8 : f32 to vector<14x1xf32>
    %17 = arith.addf %13, %16 : vector<14x1xf32>
    %18 = math.rsqrt %17 : vector<14x1xf32>
    %19 = vector.broadcast %18 : vector<14x1xf32> to vector<14x32xf32>
    %20 = arith.mulf %15, %19 : vector<14x32xf32>
    %21 = vector.broadcast %1 : vector<1x32xf32> to vector<14x32xf32>
    %22 = arith.mulf %20, %21 : vector<14x32xf32>
    %23 = vector.broadcast %2 : vector<1x32xf32> to vector<14x32xf32>
    %24 = arith.addf %22, %23 : vector<14x32xf32>
    %25 = arith.truncf %24 : vector<14x32xf32> to vector<14x32xbf16>
    %c0_9 = arith.constant 0 : index
    %c0_10 = arith.constant 0 : index
    %26 = vector.load %arg4[%c0_9, %c0_10] : memref<32x32xbf16, #tpu.memory_space<vmem>>, vector<32x32xbf16>
    %cst_11 = arith.constant dense<0.000000e+00> : vector<14x32xf32>
    %27 = tpu.matmul %25, %26, %cst_11 {dimension_numbers = #tpu.dot_dimension_numbers<[1], [0], [0], [1], [0, 0, 1, 1], [], []>} : vector<14x32xbf16>, vector<32x32xbf16>, vector<14x32xf32> -> vector<14x32xf32>
    %c0_12 = arith.constant 0 : index
    %c0_13 = arith.constant 0 : index
    %28 = vector.load %arg5[%c0_12, %c0_13] : memref<1x32xf32, #tpu.memory_space<vmem>>, vector<1x32xf32>
    %29 = vector.broadcast %28 : vector<1x32xf32> to vector<14x32xf32>
    %30 = arith.addf %27, %29 : vector<14x32xf32>
    %c0_14 = arith.constant 0 : index
    %c0_15 = arith.constant 0 : index
    %31 = vector.load %arg6[%c0_14, %c0_15] : memref<32x32xbf16, #tpu.memory_space<vmem>>, vector<32x32xbf16>
    %cst_16 = arith.constant dense<0.000000e+00> : vector<14x32xf32>
    %32 = tpu.matmul %25, %31, %cst_16 {dimension_numbers = #tpu.dot_dimension_numbers<[1], [0], [0], [1], [0, 0, 1, 1], [], []>} : vector<14x32xbf16>, vector<32x32xbf16>, vector<14x32xf32> -> vector<14x32xf32>
    %c0_17 = arith.constant 0 : index
    %c0_18 = arith.constant 0 : index
    %33 = vector.load %arg7[%c0_17, %c0_18] : memref<1x32xf32, #tpu.memory_space<vmem>>, vector<1x32xf32>
    %34 = vector.broadcast %33 : vector<1x32xf32> to vector<14x32xf32>
    %35 = arith.addf %32, %34 : vector<14x32xf32>
    %36 = arith.negf %35 : vector<14x32xf32>
    %37 = math.exp %36 : vector<14x32xf32>
    %cst_19 = arith.constant 1.000000e+00 : f32
    %38 = vector.broadcast %cst_19 : f32 to vector<14x32xf32>
    %39 = arith.addf %38, %37 : vector<14x32xf32>
    %40 = arith.divf %38, %39 : vector<14x32xf32>
    %41 = arith.mulf %30, %40 : vector<14x32xf32>
    %c0_20 = arith.constant 0 : index
    %c0_21 = arith.constant 0 : index
    %42 = vector.load %arg8[%c0_20, %c0_21] : memref<14x32xf32, #tpu.memory_space<vmem>>, vector<14x32xf32>
    tpu.vector_store %arg8[%c0_20, %c0_21], %41 {strides = array<i32>} : memref<14x32xf32, #tpu.memory_space<vmem>>, vector<14x32xf32>,
    return
  }
  func.func @transform_0(%arg0: i32) -> (i32, i32) {
    %c0_i32 = arith.constant 0 : i32
    %c0_i32_0 = arith.constant 0 : i32
    return %arg0, %c0_i32 : i32, i32
  }
  func.func @transform_1(%arg0: i32) -> (i32, i32) {
    %c0_i32 = arith.constant 0 : i32
    %c0_i32_0 = arith.constant 0 : i32
    %c0_i32_1 = arith.constant 0 : i32
    return %c0_i32, %c0_i32_0 : i32, i32
  }
  func.func @transform_2(%arg0: i32) -> (i32, i32) {
    %c0_i32 = arith.constant 0 : i32
    %c0_i32_0 = arith.constant 0 : i32
    %c0_i32_1 = arith.constant 0 : i32
    return %c0_i32, %c0_i32_0 : i32, i32
  }
  func.func @transform_3(%arg0: i32) -> (i32, i32) {
    %c0_i32 = arith.constant 0 : i32
    %c0_i32_0 = arith.constant 0 : i32
    %c0_i32_1 = arith.constant 0 : i32
    return %c0_i32, %c0_i32_0 : i32, i32
  }
  func.func @transform_4(%arg0: i32) -> (i32, i32) {
    %c0_i32 = arith.constant 0 : i32
    %c0_i32_0 = arith.constant 0 : i32
    %c0_i32_1 = arith.constant 0 : i32
    return %c0_i32, %c0_i32_0 : i32, i32
  }
  func.func @transform_5(%arg0: i32) -> (i32, i32) {
    %c0_i32 = arith.constant 0 : i32
    %c0_i32_0 = arith.constant 0 : i32
    %c0_i32_1 = arith.constant 0 : i32
    return %c0_i32, %c0_i32_0 : i32, i32
  }
  func.func @transform_6(%arg0: i32) -> (i32, i32) {
    %c0_i32 = arith.constant 0 : i32
    %c0_i32_0 = arith.constant 0 : i32
    %c0_i32_1 = arith.constant 0 : i32
    return %c0_i32, %c0_i32_0 : i32, i32
  }
  func.func @transform_7(%arg0: i32) -> (i32, i32) {
    %c0_i32 = arith.constant 0 : i32
    %c0_i32_0 = arith.constant 0 : i32
    return %arg0, %c0_i32 : i32, i32
  }
}

module attributes {stable_mosaic.version = 11 : i64} {
  func.func @_conv_tail_kernel(%arg0: i32, %arg1: memref<1x13x32xf32, #tpu.memory_space<vmem>>, %arg2: memref<7x32xf32, #tpu.memory_space<vmem>>, %arg3: memref<1x32xf32, #tpu.memory_space<vmem>>, %arg4: memref<1x32xf32, #tpu.memory_space<vmem>>, %arg5: memref<1x32xf32, #tpu.memory_space<vmem>>, %arg6: memref<32x32xbf16, #tpu.memory_space<vmem>>, %arg7: memref<1x32xf32, #tpu.memory_space<vmem>>, %arg8: memref<1x7x32xf32, #tpu.memory_space<vmem>>, %arg9: memref<1x7x32xf32, #tpu.memory_space<vmem>>) attributes {dimension_semantics = [#tpu.dimension_semantics<parallel>], iteration_bounds = array<i64: 2>, scalar_prefetch = 0 : i64, scratch_operands = 0 : i64, tpu.core_type = #tpu.core_type<tc>, window_params = [{transform_indices = @transform_0, window_bounds = array<i64: 1, 13, 32>}, {pipeline_mode = #tpu.pipeline_mode<synchronous>, transform_indices = @transform_1, window_bounds = array<i64: 7, 32>}, {pipeline_mode = #tpu.pipeline_mode<synchronous>, transform_indices = @transform_2, window_bounds = array<i64: 1, 32>}, {pipeline_mode = #tpu.pipeline_mode<synchronous>, transform_indices = @transform_3, window_bounds = array<i64: 1, 32>}, {pipeline_mode = #tpu.pipeline_mode<synchronous>, transform_indices = @transform_4, window_bounds = array<i64: 1, 32>}, {pipeline_mode = #tpu.pipeline_mode<synchronous>, transform_indices = @transform_5, window_bounds = array<i64: 32, 32>}, {pipeline_mode = #tpu.pipeline_mode<synchronous>, transform_indices = @transform_6, window_bounds = array<i64: 1, 32>}, {transform_indices = @transform_7, window_bounds = array<i64: 1, 7, 32>}, {transform_indices = @transform_8, window_bounds = array<i64: 1, 7, 32>}]} {
    %c0 = arith.constant 0 : index
    %c0_0 = arith.constant 0 : index
    %c0_1 = arith.constant 0 : index
    %0 = vector.load %arg1[%c0, %c0_0, %c0_1] : memref<1x13x32xf32, #tpu.memory_space<vmem>>, vector<1x13x32xf32>
    %1 = vector.shape_cast %0 : vector<1x13x32xf32> to vector<13x32xf32>
    %c0_2 = arith.constant 0 : index
    %c0_3 = arith.constant 0 : index
    %2 = vector.load %arg2[%c0_2, %c0_3] : memref<7x32xf32, #tpu.memory_space<vmem>>, vector<7x32xf32>
    %3 = vector.extract_strided_slice %1 {offsets = [0, 0], sizes = [7, 32], strides = [1, 1]} : vector<13x32xf32> to vector<7x32xf32>
    %4 = vector.extract_strided_slice %2 {offsets = [0, 0], sizes = [1, 32], strides = [1, 1]} : vector<7x32xf32> to vector<1x32xf32>
    %5 = vector.broadcast %4 : vector<1x32xf32> to vector<7x32xf32>
    %6 = arith.mulf %3, %5 : vector<7x32xf32>
    %7 = vector.extract_strided_slice %1 {offsets = [1, 0], sizes = [7, 32], strides = [1, 1]} : vector<13x32xf32> to vector<7x32xf32>
    %8 = vector.extract_strided_slice %2 {offsets = [1, 0], sizes = [1, 32], strides = [1, 1]} : vector<7x32xf32> to vector<1x32xf32>
    %9 = vector.broadcast %8 : vector<1x32xf32> to vector<7x32xf32>
    %10 = arith.mulf %7, %9 : vector<7x32xf32>
    %11 = arith.addf %6, %10 : vector<7x32xf32>
    %12 = vector.extract_strided_slice %1 {offsets = [2, 0], sizes = [7, 32], strides = [1, 1]} : vector<13x32xf32> to vector<7x32xf32>
    %13 = vector.extract_strided_slice %2 {offsets = [2, 0], sizes = [1, 32], strides = [1, 1]} : vector<7x32xf32> to vector<1x32xf32>
    %14 = vector.broadcast %13 : vector<1x32xf32> to vector<7x32xf32>
    %15 = arith.mulf %12, %14 : vector<7x32xf32>
    %16 = arith.addf %11, %15 : vector<7x32xf32>
    %17 = vector.extract_strided_slice %1 {offsets = [3, 0], sizes = [7, 32], strides = [1, 1]} : vector<13x32xf32> to vector<7x32xf32>
    %18 = vector.extract_strided_slice %2 {offsets = [3, 0], sizes = [1, 32], strides = [1, 1]} : vector<7x32xf32> to vector<1x32xf32>
    %19 = vector.broadcast %18 : vector<1x32xf32> to vector<7x32xf32>
    %20 = arith.mulf %17, %19 : vector<7x32xf32>
    %21 = arith.addf %16, %20 : vector<7x32xf32>
    %22 = vector.extract_strided_slice %1 {offsets = [4, 0], sizes = [7, 32], strides = [1, 1]} : vector<13x32xf32> to vector<7x32xf32>
    %23 = vector.extract_strided_slice %2 {offsets = [4, 0], sizes = [1, 32], strides = [1, 1]} : vector<7x32xf32> to vector<1x32xf32>
    %24 = vector.broadcast %23 : vector<1x32xf32> to vector<7x32xf32>
    %25 = arith.mulf %22, %24 : vector<7x32xf32>
    %26 = arith.addf %21, %25 : vector<7x32xf32>
    %27 = vector.extract_strided_slice %1 {offsets = [5, 0], sizes = [7, 32], strides = [1, 1]} : vector<13x32xf32> to vector<7x32xf32>
    %28 = vector.extract_strided_slice %2 {offsets = [5, 0], sizes = [1, 32], strides = [1, 1]} : vector<7x32xf32> to vector<1x32xf32>
    %29 = vector.broadcast %28 : vector<1x32xf32> to vector<7x32xf32>
    %30 = arith.mulf %27, %29 : vector<7x32xf32>
    %31 = arith.addf %26, %30 : vector<7x32xf32>
    %32 = vector.extract_strided_slice %1 {offsets = [6, 0], sizes = [7, 32], strides = [1, 1]} : vector<13x32xf32> to vector<7x32xf32>
    %33 = vector.extract_strided_slice %2 {offsets = [6, 0], sizes = [1, 32], strides = [1, 1]} : vector<7x32xf32> to vector<1x32xf32>
    %34 = vector.broadcast %33 : vector<1x32xf32> to vector<7x32xf32>
    %35 = arith.mulf %32, %34 : vector<7x32xf32>
    %36 = arith.addf %31, %35 : vector<7x32xf32>
    %c0_4 = arith.constant 0 : index
    %c0_5 = arith.constant 0 : index
    %37 = vector.load %arg3[%c0_4, %c0_5] : memref<1x32xf32, #tpu.memory_space<vmem>>, vector<1x32xf32>
    %38 = vector.broadcast %37 : vector<1x32xf32> to vector<7x32xf32>
    %39 = arith.addf %36, %38 : vector<7x32xf32>
    %c0_6 = arith.constant 0 : index
    %c0_7 = arith.constant 0 : index
    %40 = vector.load %arg4[%c0_6, %c0_7] : memref<1x32xf32, #tpu.memory_space<vmem>>, vector<1x32xf32>
    %41 = vector.broadcast %40 : vector<1x32xf32> to vector<7x32xf32>
    %42 = arith.mulf %39, %41 : vector<7x32xf32>
    %c0_8 = arith.constant 0 : index
    %c0_9 = arith.constant 0 : index
    %43 = vector.load %arg5[%c0_8, %c0_9] : memref<1x32xf32, #tpu.memory_space<vmem>>, vector<1x32xf32>
    %44 = vector.broadcast %43 : vector<1x32xf32> to vector<7x32xf32>
    %45 = arith.addf %42, %44 : vector<7x32xf32>
    %46 = arith.negf %45 : vector<7x32xf32>
    %47 = math.exp %46 : vector<7x32xf32>
    %cst = arith.constant 1.000000e+00 : f32
    %48 = vector.broadcast %cst : f32 to vector<7x32xf32>
    %49 = arith.addf %48, %47 : vector<7x32xf32>
    %50 = arith.divf %48, %49 : vector<7x32xf32>
    %51 = arith.mulf %45, %50 : vector<7x32xf32>
    %52 = arith.truncf %51 : vector<7x32xf32> to vector<7x32xbf16>
    %c0_10 = arith.constant 0 : index
    %c0_11 = arith.constant 0 : index
    %53 = vector.load %arg6[%c0_10, %c0_11] : memref<32x32xbf16, #tpu.memory_space<vmem>>, vector<32x32xbf16>
    %cst_12 = arith.constant dense<0.000000e+00> : vector<7x32xf32>
    %54 = tpu.matmul %52, %53, %cst_12 {dimension_numbers = #tpu.dot_dimension_numbers<[1], [0], [0], [1], [0, 0, 1, 1], [], []>} : vector<7x32xbf16>, vector<32x32xbf16>, vector<7x32xf32> -> vector<7x32xf32>
    %c0_13 = arith.constant 0 : index
    %c0_14 = arith.constant 0 : index
    %55 = vector.load %arg7[%c0_13, %c0_14] : memref<1x32xf32, #tpu.memory_space<vmem>>, vector<1x32xf32>
    %56 = vector.broadcast %55 : vector<1x32xf32> to vector<7x32xf32>
    %57 = arith.addf %54, %56 : vector<7x32xf32>
    %c0_15 = arith.constant 0 : index
    %c0_16 = arith.constant 0 : index
    %c0_17 = arith.constant 0 : index
    %58 = vector.load %arg8[%c0_15, %c0_16, %c0_17] : memref<1x7x32xf32, #tpu.memory_space<vmem>>, vector<1x7x32xf32>
    %59 = vector.shape_cast %58 : vector<1x7x32xf32> to vector<7x32xf32>
    %60 = arith.addf %59, %57 : vector<7x32xf32>
    %c0_18 = arith.constant 0 : index
    %c0_19 = arith.constant 0 : index
    %c0_20 = arith.constant 0 : index
    %61 = vector.load %arg9[%c0_18, %c0_19, %c0_20] : memref<1x7x32xf32, #tpu.memory_space<vmem>>, vector<1x7x32xf32>
    %62 = vector.shape_cast %61 : vector<1x7x32xf32> to vector<7x32xf32>
    %63 = vector.shape_cast %60 : vector<7x32xf32> to vector<1x7x32xf32>
    tpu.vector_store %arg9[%c0_18, %c0_19, %c0_20], %63 {strides = array<i32>} : memref<1x7x32xf32, #tpu.memory_space<vmem>>, vector<1x7x32xf32>,
    return
  }
  func.func @transform_0(%arg0: i32) -> (i32, i32, i32) {
    %c0_i32 = arith.constant 0 : i32
    %c0_i32_0 = arith.constant 0 : i32
    %c0_i32_1 = arith.constant 0 : i32
    return %arg0, %c0_i32, %c0_i32_0 : i32, i32, i32
  }
  func.func @transform_1(%arg0: i32) -> (i32, i32) {
    %c0_i32 = arith.constant 0 : i32
    %c0_i32_0 = arith.constant 0 : i32
    %c0_i32_1 = arith.constant 0 : i32
    return %c0_i32, %c0_i32_0 : i32, i32
  }
  func.func @transform_2(%arg0: i32) -> (i32, i32) {
    %c0_i32 = arith.constant 0 : i32
    %c0_i32_0 = arith.constant 0 : i32
    %c0_i32_1 = arith.constant 0 : i32
    return %c0_i32, %c0_i32_0 : i32, i32
  }
  func.func @transform_3(%arg0: i32) -> (i32, i32) {
    %c0_i32 = arith.constant 0 : i32
    %c0_i32_0 = arith.constant 0 : i32
    %c0_i32_1 = arith.constant 0 : i32
    return %c0_i32, %c0_i32_0 : i32, i32
  }
  func.func @transform_4(%arg0: i32) -> (i32, i32) {
    %c0_i32 = arith.constant 0 : i32
    %c0_i32_0 = arith.constant 0 : i32
    %c0_i32_1 = arith.constant 0 : i32
    return %c0_i32, %c0_i32_0 : i32, i32
  }
  func.func @transform_5(%arg0: i32) -> (i32, i32) {
    %c0_i32 = arith.constant 0 : i32
    %c0_i32_0 = arith.constant 0 : i32
    %c0_i32_1 = arith.constant 0 : i32
    return %c0_i32, %c0_i32_0 : i32, i32
  }
  func.func @transform_6(%arg0: i32) -> (i32, i32) {
    %c0_i32 = arith.constant 0 : i32
    %c0_i32_0 = arith.constant 0 : i32
    %c0_i32_1 = arith.constant 0 : i32
    return %c0_i32, %c0_i32_0 : i32, i32
  }
  func.func @transform_7(%arg0: i32) -> (i32, i32, i32) {
    %c0_i32 = arith.constant 0 : i32
    %c0_i32_0 = arith.constant 0 : i32
    %c0_i32_1 = arith.constant 0 : i32
    return %arg0, %c0_i32, %c0_i32_0 : i32, i32, i32
  }
  func.func @transform_8(%arg0: i32) -> (i32, i32, i32) {
    %c0_i32 = arith.constant 0 : i32
    %c0_i32_0 = arith.constant 0 : i32
    %c0_i32_1 = arith.constant 0 : i32
    return %arg0, %c0_i32, %c0_i32_0 : i32, i32, i32
  }
}

module attributes {stable_mosaic.version = 11 : i64} {
  func.func @_ffn_kernel(%arg0: i32, %arg1: memref<14x32xf32, #tpu.memory_space<vmem>>, %arg2: memref<1x32xf32, #tpu.memory_space<vmem>>, %arg3: memref<1x32xf32, #tpu.memory_space<vmem>>, %arg4: memref<32x128xbf16, #tpu.memory_space<vmem>>, %arg5: memref<1x128xf32, #tpu.memory_space<vmem>>, %arg6: memref<128x32xbf16, #tpu.memory_space<vmem>>, %arg7: memref<1x32xf32, #tpu.memory_space<vmem>>, %arg8: memref<1x32xf32, #tpu.memory_space<vmem>>, %arg9: memref<1x32xf32, #tpu.memory_space<vmem>>, %arg10: memref<14x32xf32, #tpu.memory_space<vmem>>) attributes {dimension_semantics = [#tpu.dimension_semantics<parallel>], iteration_bounds = array<i64: 1>, scalar_prefetch = 0 : i64, scratch_operands = 0 : i64, tpu.core_type = #tpu.core_type<tc>, window_params = [{transform_indices = @transform_0, window_bounds = array<i64: 14, 32>}, {pipeline_mode = #tpu.pipeline_mode<synchronous>, transform_indices = @transform_1, window_bounds = array<i64: 1, 32>}, {pipeline_mode = #tpu.pipeline_mode<synchronous>, transform_indices = @transform_2, window_bounds = array<i64: 1, 32>}, {pipeline_mode = #tpu.pipeline_mode<synchronous>, transform_indices = @transform_3, window_bounds = array<i64: 32, 128>}, {pipeline_mode = #tpu.pipeline_mode<synchronous>, transform_indices = @transform_4, window_bounds = array<i64: 1, 128>}, {pipeline_mode = #tpu.pipeline_mode<synchronous>, transform_indices = @transform_5, window_bounds = array<i64: 128, 32>}, {pipeline_mode = #tpu.pipeline_mode<synchronous>, transform_indices = @transform_6, window_bounds = array<i64: 1, 32>}, {pipeline_mode = #tpu.pipeline_mode<synchronous>, transform_indices = @transform_7, window_bounds = array<i64: 1, 32>}, {pipeline_mode = #tpu.pipeline_mode<synchronous>, transform_indices = @transform_8, window_bounds = array<i64: 1, 32>}, {transform_indices = @transform_9, window_bounds = array<i64: 14, 32>}]} {
    %c0 = arith.constant 0 : index
    %c0_0 = arith.constant 0 : index
    %0 = vector.load %arg1[%c0, %c0_0] : memref<14x32xf32, #tpu.memory_space<vmem>>, vector<14x32xf32>
    %c0_1 = arith.constant 0 : index
    %c0_2 = arith.constant 0 : index
    %1 = vector.load %arg2[%c0_1, %c0_2] : memref<1x32xf32, #tpu.memory_space<vmem>>, vector<1x32xf32>
    %c0_3 = arith.constant 0 : index
    %c0_4 = arith.constant 0 : index
    %2 = vector.load %arg3[%c0_3, %c0_4] : memref<1x32xf32, #tpu.memory_space<vmem>>, vector<1x32xf32>
    %cst = arith.constant dense<0.000000e+00> : vector<14xf32>
    %3 = vector.multi_reduction <add>, %0, %cst [1] : vector<14x32xf32> to vector<14xf32>
    %4 = vector.shape_cast %3 : vector<14xf32> to vector<14x1xf32>
    %cst_5 = arith.constant 3.200000e+01 : f32
    %5 = vector.broadcast %cst_5 : f32 to vector<14x1xf32>
    %6 = arith.divf %4, %5 : vector<14x1xf32>
    %7 = vector.broadcast %6 : vector<14x1xf32> to vector<14x32xf32>
    %8 = arith.subf %0, %7 : vector<14x32xf32>
    %9 = arith.mulf %8, %8 : vector<14x32xf32>
    %cst_6 = arith.constant dense<0.000000e+00> : vector<14xf32>
    %10 = vector.multi_reduction <add>, %9, %cst_6 [1] : vector<14x32xf32> to vector<14xf32>
    %11 = vector.shape_cast %10 : vector<14xf32> to vector<14x1xf32>
    %cst_7 = arith.constant 3.200000e+01 : f32
    %12 = vector.broadcast %cst_7 : f32 to vector<14x1xf32>
    %13 = arith.divf %11, %12 : vector<14x1xf32>
    %14 = vector.broadcast %6 : vector<14x1xf32> to vector<14x32xf32>
    %15 = arith.subf %0, %14 : vector<14x32xf32>
    %cst_8 = arith.constant 9.99999974E-6 : f32
    %16 = vector.broadcast %cst_8 : f32 to vector<14x1xf32>
    %17 = arith.addf %13, %16 : vector<14x1xf32>
    %18 = math.rsqrt %17 : vector<14x1xf32>
    %19 = vector.broadcast %18 : vector<14x1xf32> to vector<14x32xf32>
    %20 = arith.mulf %15, %19 : vector<14x32xf32>
    %21 = vector.broadcast %1 : vector<1x32xf32> to vector<14x32xf32>
    %22 = arith.mulf %20, %21 : vector<14x32xf32>
    %23 = vector.broadcast %2 : vector<1x32xf32> to vector<14x32xf32>
    %24 = arith.addf %22, %23 : vector<14x32xf32>
    %25 = arith.truncf %24 : vector<14x32xf32> to vector<14x32xbf16>
    %c0_9 = arith.constant 0 : index
    %c0_10 = arith.constant 0 : index
    %26 = vector.load %arg4[%c0_9, %c0_10] : memref<32x128xbf16, #tpu.memory_space<vmem>>, vector<32x128xbf16>
    %cst_11 = arith.constant dense<0.000000e+00> : vector<14x128xf32>
    %27 = tpu.matmul %25, %26, %cst_11 {dimension_numbers = #tpu.dot_dimension_numbers<[1], [0], [0], [1], [0, 0, 1, 1], [], []>} : vector<14x32xbf16>, vector<32x128xbf16>, vector<14x128xf32> -> vector<14x128xf32>
    %c0_12 = arith.constant 0 : index
    %c0_13 = arith.constant 0 : index
    %28 = vector.load %arg5[%c0_12, %c0_13] : memref<1x128xf32, #tpu.memory_space<vmem>>, vector<1x128xf32>
    %29 = vector.broadcast %28 : vector<1x128xf32> to vector<14x128xf32>
    %30 = arith.addf %27, %29 : vector<14x128xf32>
    %31 = arith.negf %30 : vector<14x128xf32>
    %32 = math.exp %31 : vector<14x128xf32>
    %cst_14 = arith.constant 1.000000e+00 : f32
    %33 = vector.broadcast %cst_14 : f32 to vector<14x128xf32>
    %34 = arith.addf %33, %32 : vector<14x128xf32>
    %35 = arith.divf %33, %34 : vector<14x128xf32>
    %36 = arith.mulf %30, %35 : vector<14x128xf32>
    %37 = arith.truncf %36 : vector<14x128xf32> to vector<14x128xbf16>
    %c0_15 = arith.constant 0 : index
    %c0_16 = arith.constant 0 : index
    %38 = vector.load %arg6[%c0_15, %c0_16] : memref<128x32xbf16, #tpu.memory_space<vmem>>, vector<128x32xbf16>
    %cst_17 = arith.constant dense<0.000000e+00> : vector<14x32xf32>
    %39 = tpu.matmul %37, %38, %cst_17 {dimension_numbers = #tpu.dot_dimension_numbers<[1], [0], [0], [1], [0, 0, 1, 1], [], []>} : vector<14x128xbf16>, vector<128x32xbf16>, vector<14x32xf32> -> vector<14x32xf32>
    %c0_18 = arith.constant 0 : index
    %c0_19 = arith.constant 0 : index
    %40 = vector.load %arg7[%c0_18, %c0_19] : memref<1x32xf32, #tpu.memory_space<vmem>>, vector<1x32xf32>
    %41 = vector.broadcast %40 : vector<1x32xf32> to vector<14x32xf32>
    %42 = arith.addf %39, %41 : vector<14x32xf32>
    %cst_20 = arith.constant 5.000000e-01 : f32
    %43 = vector.broadcast %cst_20 : f32 to vector<14x32xf32>
    %44 = arith.mulf %43, %42 : vector<14x32xf32>
    %45 = arith.addf %0, %44 : vector<14x32xf32>
    %c0_21 = arith.constant 0 : index
    %c0_22 = arith.constant 0 : index
    %46 = vector.load %arg8[%c0_21, %c0_22] : memref<1x32xf32, #tpu.memory_space<vmem>>, vector<1x32xf32>
    %c0_23 = arith.constant 0 : index
    %c0_24 = arith.constant 0 : index
    %47 = vector.load %arg9[%c0_23, %c0_24] : memref<1x32xf32, #tpu.memory_space<vmem>>, vector<1x32xf32>
    %cst_25 = arith.constant dense<0.000000e+00> : vector<14xf32>
    %48 = vector.multi_reduction <add>, %45, %cst_25 [1] : vector<14x32xf32> to vector<14xf32>
    %49 = vector.shape_cast %48 : vector<14xf32> to vector<14x1xf32>
    %cst_26 = arith.constant 3.200000e+01 : f32
    %50 = vector.broadcast %cst_26 : f32 to vector<14x1xf32>
    %51 = arith.divf %49, %50 : vector<14x1xf32>
    %52 = vector.broadcast %51 : vector<14x1xf32> to vector<14x32xf32>
    %53 = arith.subf %45, %52 : vector<14x32xf32>
    %54 = arith.mulf %53, %53 : vector<14x32xf32>
    %cst_27 = arith.constant dense<0.000000e+00> : vector<14xf32>
    %55 = vector.multi_reduction <add>, %54, %cst_27 [1] : vector<14x32xf32> to vector<14xf32>
    %56 = vector.shape_cast %55 : vector<14xf32> to vector<14x1xf32>
    %cst_28 = arith.constant 3.200000e+01 : f32
    %57 = vector.broadcast %cst_28 : f32 to vector<14x1xf32>
    %58 = arith.divf %56, %57 : vector<14x1xf32>
    %59 = vector.broadcast %51 : vector<14x1xf32> to vector<14x32xf32>
    %60 = arith.subf %45, %59 : vector<14x32xf32>
    %cst_29 = arith.constant 9.99999974E-6 : f32
    %61 = vector.broadcast %cst_29 : f32 to vector<14x1xf32>
    %62 = arith.addf %58, %61 : vector<14x1xf32>
    %63 = math.rsqrt %62 : vector<14x1xf32>
    %64 = vector.broadcast %63 : vector<14x1xf32> to vector<14x32xf32>
    %65 = arith.mulf %60, %64 : vector<14x32xf32>
    %66 = vector.broadcast %46 : vector<1x32xf32> to vector<14x32xf32>
    %67 = arith.mulf %65, %66 : vector<14x32xf32>
    %68 = vector.broadcast %47 : vector<1x32xf32> to vector<14x32xf32>
    %69 = arith.addf %67, %68 : vector<14x32xf32>
    %c0_30 = arith.constant 0 : index
    %c0_31 = arith.constant 0 : index
    %70 = vector.load %arg10[%c0_30, %c0_31] : memref<14x32xf32, #tpu.memory_space<vmem>>, vector<14x32xf32>
    tpu.vector_store %arg10[%c0_30, %c0_31], %69 {strides = array<i32>} : memref<14x32xf32, #tpu.memory_space<vmem>>, vector<14x32xf32>,
    return
  }
  func.func @transform_0(%arg0: i32) -> (i32, i32) {
    %c0_i32 = arith.constant 0 : i32
    %c0_i32_0 = arith.constant 0 : i32
    return %arg0, %c0_i32 : i32, i32
  }
  func.func @transform_1(%arg0: i32) -> (i32, i32) {
    %c0_i32 = arith.constant 0 : i32
    %c0_i32_0 = arith.constant 0 : i32
    %c0_i32_1 = arith.constant 0 : i32
    return %c0_i32, %c0_i32_0 : i32, i32
  }
  func.func @transform_2(%arg0: i32) -> (i32, i32) {
    %c0_i32 = arith.constant 0 : i32
    %c0_i32_0 = arith.constant 0 : i32
    %c0_i32_1 = arith.constant 0 : i32
    return %c0_i32, %c0_i32_0 : i32, i32
  }
  func.func @transform_3(%arg0: i32) -> (i32, i32) {
    %c0_i32 = arith.constant 0 : i32
    %c0_i32_0 = arith.constant 0 : i32
    %c0_i32_1 = arith.constant 0 : i32
    return %c0_i32, %c0_i32_0 : i32, i32
  }
  func.func @transform_4(%arg0: i32) -> (i32, i32) {
    %c0_i32 = arith.constant 0 : i32
    %c0_i32_0 = arith.constant 0 : i32
    %c0_i32_1 = arith.constant 0 : i32
    return %c0_i32, %c0_i32_0 : i32, i32
  }
  func.func @transform_5(%arg0: i32) -> (i32, i32) {
    %c0_i32 = arith.constant 0 : i32
    %c0_i32_0 = arith.constant 0 : i32
    %c0_i32_1 = arith.constant 0 : i32
    return %c0_i32, %c0_i32_0 : i32, i32
  }
  func.func @transform_6(%arg0: i32) -> (i32, i32) {
    %c0_i32 = arith.constant 0 : i32
    %c0_i32_0 = arith.constant 0 : i32
    %c0_i32_1 = arith.constant 0 : i32
    return %c0_i32, %c0_i32_0 : i32, i32
  }
  func.func @transform_7(%arg0: i32) -> (i32, i32) {
    %c0_i32 = arith.constant 0 : i32
    %c0_i32_0 = arith.constant 0 : i32
    %c0_i32_1 = arith.constant 0 : i32
    return %c0_i32, %c0_i32_0 : i32, i32
  }
  func.func @transform_8(%arg0: i32) -> (i32, i32) {
    %c0_i32 = arith.constant 0 : i32
    %c0_i32_0 = arith.constant 0 : i32
    %c0_i32_1 = arith.constant 0 : i32
    return %c0_i32, %c0_i32_0 : i32, i32
  }
  func.func @transform_9(%arg0: i32) -> (i32, i32) {
    %c0_i32 = arith.constant 0 : i32
    %c0_i32_0 = arith.constant 0 : i32
    return %arg0, %c0_i32 : i32, i32
  }
}

module attributes {stable_mosaic.version = 11 : i64} {
  func.func @_fc_logsm_kernel(%arg0: i32, %arg1: memref<14x32xf32, #tpu.memory_space<vmem>>, %arg2: memref<32x40xbf16, #tpu.memory_space<vmem>>, %arg3: memref<1x40xf32, #tpu.memory_space<vmem>>, %arg4: memref<14x40xf32, #tpu.memory_space<vmem>>, %arg5: memref<14x40xf32, #tpu.memory_space<vmem>>) attributes {dimension_semantics = [#tpu.dimension_semantics<parallel>], iteration_bounds = array<i64: 1>, scalar_prefetch = 0 : i64, scratch_operands = 0 : i64, tpu.core_type = #tpu.core_type<tc>, window_params = [{transform_indices = @transform_0, window_bounds = array<i64: 14, 32>}, {pipeline_mode = #tpu.pipeline_mode<synchronous>, transform_indices = @transform_1, window_bounds = array<i64: 32, 40>}, {pipeline_mode = #tpu.pipeline_mode<synchronous>, transform_indices = @transform_2, window_bounds = array<i64: 1, 40>}, {transform_indices = @transform_3, window_bounds = array<i64: 14, 40>}, {transform_indices = @transform_4, window_bounds = array<i64: 14, 40>}]} {
    %c0 = arith.constant 0 : index
    %c0_0 = arith.constant 0 : index
    %0 = vector.load %arg1[%c0, %c0_0] : memref<14x32xf32, #tpu.memory_space<vmem>>, vector<14x32xf32>
    %1 = arith.truncf %0 : vector<14x32xf32> to vector<14x32xbf16>
    %c0_1 = arith.constant 0 : index
    %c0_2 = arith.constant 0 : index
    %2 = vector.load %arg2[%c0_1, %c0_2] : memref<32x40xbf16, #tpu.memory_space<vmem>>, vector<32x40xbf16>
    %cst = arith.constant dense<0.000000e+00> : vector<14x40xf32>
    %3 = tpu.matmul %1, %2, %cst {dimension_numbers = #tpu.dot_dimension_numbers<[1], [0], [0], [1], [0, 0, 1, 1], [], []>} : vector<14x32xbf16>, vector<32x40xbf16>, vector<14x40xf32> -> vector<14x40xf32>
    %c0_3 = arith.constant 0 : index
    %c0_4 = arith.constant 0 : index
    %4 = vector.load %arg3[%c0_3, %c0_4] : memref<1x40xf32, #tpu.memory_space<vmem>>, vector<1x40xf32>
    %5 = vector.broadcast %4 : vector<1x40xf32> to vector<14x40xf32>
    %6 = arith.addf %3, %5 : vector<14x40xf32>
    %c0_5 = arith.constant 0 : index
    %c0_6 = arith.constant 0 : index
    %7 = vector.load %arg4[%c0_5, %c0_6] : memref<14x40xf32, #tpu.memory_space<vmem>>, vector<14x40xf32>
    tpu.vector_store %arg4[%c0_5, %c0_6], %6 {strides = array<i32>} : memref<14x40xf32, #tpu.memory_space<vmem>>, vector<14x40xf32>,
    %cst_7 = arith.constant dense<0xFF800000> : vector<14xf32>
    %8 = vector.multi_reduction <maximumf>, %6, %cst_7 [1] : vector<14x40xf32> to vector<14xf32>
    %9 = vector.shape_cast %8 : vector<14xf32> to vector<14x1xf32>
    %10 = vector.broadcast %9 : vector<14x1xf32> to vector<14x40xf32>
    %11 = arith.subf %6, %10 : vector<14x40xf32>
    %12 = math.exp %11 : vector<14x40xf32>
    %cst_8 = arith.constant dense<0.000000e+00> : vector<14xf32>
    %13 = vector.multi_reduction <add>, %12, %cst_8 [1] : vector<14x40xf32> to vector<14xf32>
    %14 = vector.shape_cast %13 : vector<14xf32> to vector<14x1xf32>
    %15 = math.log %14 : vector<14x1xf32>
    %16 = vector.broadcast %15 : vector<14x1xf32> to vector<14x40xf32>
    %17 = arith.subf %11, %16 : vector<14x40xf32>
    %c0_9 = arith.constant 0 : index
    %c0_10 = arith.constant 0 : index
    %18 = vector.load %arg5[%c0_9, %c0_10] : memref<14x40xf32, #tpu.memory_space<vmem>>, vector<14x40xf32>
    tpu.vector_store %arg5[%c0_9, %c0_10], %17 {strides = array<i32>} : memref<14x40xf32, #tpu.memory_space<vmem>>, vector<14x40xf32>,
    return
  }
  func.func @transform_0(%arg0: i32) -> (i32, i32) {
    %c0_i32 = arith.constant 0 : i32
    %c0_i32_0 = arith.constant 0 : i32
    return %arg0, %c0_i32 : i32, i32
  }
  func.func @transform_1(%arg0: i32) -> (i32, i32) {
    %c0_i32 = arith.constant 0 : i32
    %c0_i32_0 = arith.constant 0 : i32
    %c0_i32_1 = arith.constant 0 : i32
    return %c0_i32, %c0_i32_0 : i32, i32
  }
  func.func @transform_2(%arg0: i32) -> (i32, i32) {
    %c0_i32 = arith.constant 0 : i32
    %c0_i32_0 = arith.constant 0 : i32
    %c0_i32_1 = arith.constant 0 : i32
    return %c0_i32, %c0_i32_0 : i32, i32
  }
  func.func @transform_3(%arg0: i32) -> (i32, i32) {
    %c0_i32 = arith.constant 0 : i32
    %c0_i32_0 = arith.constant 0 : i32
    return %arg0, %c0_i32 : i32, i32
  }
  func.func @transform_4(%arg0: i32) -> (i32, i32) {
    %c0_i32 = arith.constant 0 : i32
    %c0_i32_0 = arith.constant 0 : i32
    return %arg0, %c0_i32 : i32, i32
  }
}

</mosaic_0001>

<llo_original>
// kernel: _lambda_.18
$region0: #{_lambda_.18}
  #allocation0 [shape = 'u32[]', space=smem, size = 0x4, offset = 0x4, fixed_abs, tag = 'smem constant byte address 0x4 - core index']
  #allocation1 [shape = 'u32[72,128]{1,0:T(1,128)}', space=vmem, size = 0x9000, scoped, tag = 'internal scratch']
  %s0 = inlined_call_operand.vmem [shape: f32[210,9], index: 0, kind: input, shape index: {}]
  %s1 = inlined_call_operand.vmem [shape: bf16[9,32], index: 1, kind: input, shape index: {}]
  %s2 = inlined_call_operand.vmem [shape: f32[1,32], index: 2, kind: input, shape index: {}]
  %s3 = inlined_call_operand.vmem [shape: f32[210,32], index: 3, kind: output, shape index: {}]
  %s4 = sld [smem:[#allocation0]]
  $region22: #{_lambda_.18} parent=0
    _
  %s6 = ssub.s32 1, %s4
  %s7 = scalar_select 0, %s6, %s4
  // Predicated region
  $region2: #{_lambda_.18} parent=0 // pred_check
    _
  $region3: #{_lambda_.18} parent=0 // pred_check_branch
    %9 = sbr.rel (0) target = $region5
  $region4: #{_lambda_.18} parent=0 // pred_region
    _
  $region5: #{_lambda_.18} parent=0 // pred_fallthru
    _
  // Predicated region
  $region6: #{_lambda_.18} parent=0 // pred_check
    _
  $region7: #{_lambda_.18} parent=0 // pred_check_branch
    %11 = sbr.rel (0) target = $region9
  $region8: #{_lambda_.18} parent=0 // pred_region
    _
  $region9: #{_lambda_.18} parent=0 // pred_fallthru
    _
  // Predicated region
  $region10: #{_lambda_.18} parent=0 // pred_check
    _
  $region11: #{_lambda_.18} parent=0 // pred_check_branch
    %13 = sbr.rel (0) target = $region13
  $region12: #{_lambda_.18} parent=0 // pred_region
    _
  $region13: #{_lambda_.18} parent=0 // pred_fallthru
    _
  %v15 = vld [vmem:[%s0] sm:$0xff]
  %v16 = vld [vmem:[%s0 + $0x8] sm:$0xff]
  %v17 = vld [vmem:[%s0 + $0x10] sm:$0xff]
  %v18 = vld [vmem:[%s0 + $0x18] sm:$0xff]
  %v19 = vld [vmem:[%s0 + $0x20] sm:$0xff]
  %v20 = vld [vmem:[%s0 + $0x28] sm:$0xff]
  %v21 = vld [vmem:[%s0 + $0x30] sm:$0xff]
  %v22 = vld [vmem:[%s0 + $0x38] sm:$0xff]
  %v23 = vld [vmem:[%s0 + $0x40] sm:$0xff]
  %v24 = vld [vmem:[%s0 + $0x48] sm:$0xff]
  %v25 = vld [vmem:[%s0 + $0x50] sm:$0xff]
  %v26 = vld [vmem:[%s0 + $0x58] sm:$0xff]
  %v27 = vld [vmem:[%s0 + $0x60] sm:$0xff]
  %v28 = vld [vmem:[%s0 + $0x68] sm:$0xff]
  %v29 = vld [vmem:[%s0 + $0x70] sm:$0xff]
  %v30 = vld [vmem:[%s0 + $0x78] sm:$0xff]
  %v31 = vld [vmem:[%s0 + $0x80] sm:$0xff]
  %v32 = vld [vmem:[%s0 + $0x88] sm:$0xff]
  %v33 = vld [vmem:[%s0 + $0x90] sm:$0xff]
  %v34 = vld [vmem:[%s0 + $0x98] sm:$0xff]
  %v35 = vld [vmem:[%s0 + $0xa0] sm:$0xff]
  %v36 = vld [vmem:[%s0 + $0xa8] sm:$0xff]
  %v37 = vld [vmem:[%s0 + $0xb0] sm:$0xff]
  %v38 = vld [vmem:[%s0 + $0xb8] sm:$0xff]
  %v39 = vld [vmem:[%s0 + $0xc0] sm:$0xff]
  %v40 = vld [vmem:[%s0 + $0xc8] sm:$0xff]
  %v41 = vld [vmem:[%s0 + $0xd0] sm:$0x3]
  %v42 = vld [vmem:[%s1] sm:$0xf]
  %v43 = vld [vmem:[%s1 + $0x4] sm:$0x1]
  %v44 = vld [vmem:[%s2] sm:$0x1]
  %v45 = vpack.c.bf16 %v16, %v15
  %v46 = vpack.c.bf16 %v18, %v17
  %v47 = vpack.c.bf16 %v20, %v19
  %v48 = vpack.c.bf16 %v22, %v21
  %v49 = vpack.c.bf16 %v24, %v23
  %v50 = vpack.c.bf16 %v26, %v25
  %v51 = vpack.c.bf16 %v28, %v27
  %v52 = vpack.c.bf16 %v30, %v29
  %v53 = vpack.c.bf16 %v32, %v31
  %v54 = vpack.c.bf16 %v34, %v33
  %v55 = vpack.c.bf16 %v36, %v35
  %v56 = vpack.c.bf16 %v38, %v37
  %v57 = vpack.c.bf16 %v40, %v39
  %v58 = vpack.c.bf16 %v41, %v41
  %v60 = vperm.slane %v44, 0
  %v64 = vunpack.c.l.b16 %v42
  %v65 = vunpack.c.l.b16 %v43
  %v66 = vpack.c.b16 %v65, %v64
  %vm67 = vcmask 72704
  %v69 = vsel %vm67, %v45, 0
  %v72 = vsel %vm67, %v46, 0
  %v75 = vsel %vm67, %v47, 0
  %v78 = vsel %vm67, %v48, 0
  %v81 = vsel %vm67, %v49, 0
  %v84 = vsel %vm67, %v50, 0
  %v87 = vsel %vm67, %v51, 0
  %v90 = vsel %vm67, %v52, 0
  %v93 = vsel %vm67, %v53, 0
  %v96 = vsel %vm67, %v54, 0
  %v99 = vsel %vm67, %v55, 0
  %v102 = vsel %vm67, %v56, 0
  %v105 = vsel %vm67, %v57, 0
  %v108 = vsel %vm67, %v58, 0
  %vm110 = vcmask 1043456
  %vm111 = vcmask 1044480
  %v112 = vsel %vm110, 4294967295, 65535
  %v113 = vsel %vm111, %v112, 0
  %v115 = vand.u32 %v66, %v113
  %117 = vmatpush.bf16.msra.mxu0 0
  %118 = vmatpush.bf16.msra.mxu0 0
  %119 = vmatpush.bf16.msra.mxu0 0
  %120 = vmatpush.bf16.msra.mxu0 0
  %121 = vmatpush.bf16.msra.mxu0 0
  %122 = vmatpush.bf16.msra.mxu0 0
  %123 = vmatpush.bf16.msra.mxu0 0
  %124 = vmatpush.bf16.msra.mxu0 %v115
  %125 = vmatmul.bf16.gmra.mxu0 %v69
  %v126 = vpop.f32.mrf.mxu0
  %v127 = vadd.f32 %v60, %v126
  %v128 = vpop.f32.mrf.mxu0
  %v129 = vadd.f32 %v60, %v128
  %130 = vmatmul.bf16.gmra.mxu0 %v72
  %v131 = vpop.f32.mrf.mxu0
  %v132 = vadd.f32 %v60, %v131
  %v133 = vpop.f32.mrf.mxu0
  %v134 = vadd.f32 %v60, %v133
  %135 = vmatmul.bf16.gmra.mxu0 %v75
  %v136 = vpop.f32.mrf.mxu0
  %v137 = vadd.f32 %v60, %v136
  %v138 = vpop.f32.mrf.mxu0
  %v139 = vadd.f32 %v60, %v138
  %140 = vmatmul.bf16.gmra.mxu0 %v78
  %v141 = vpop.f32.mrf.mxu0
  %v142 = vadd.f32 %v60, %v141
  %v143 = vpop.f32.mrf.mxu0
  %v144 = vadd.f32 %v60, %v143
  %145 = vmatmul.bf16.gmra.mxu0 %v81
  %v146 = vpop.f32.mrf.mxu0
  %v147 = vadd.f32 %v60, %v146
  %v148 = vpop.f32.mrf.mxu0
  %v149 = vadd.f32 %v60, %v148
  %150 = vmatmul.bf16.gmra.mxu0 %v84
  %v151 = vpop.f32.mrf.mxu0
  %v152 = vadd.f32 %v60, %v151
  %v153 = vpop.f32.mrf.mxu0
  %v154 = vadd.f32 %v60, %v153
  %155 = vmatmul.bf16.gmra.mxu0 %v87
  %v156 = vpop.f32.mrf.mxu0
  %v157 = vadd.f32 %v60, %v156
  %v158 = vpop.f32.mrf.mxu0
  %v159 = vadd.f32 %v60, %v158
  %160 = vmatmul.bf16.gmra.mxu0 %v90
  %v161 = vpop.f32.mrf.mxu0
  %v162 = vadd.f32 %v60, %v161
  %v163 = vpop.f32.mrf.mxu0
  %v164 = vadd.f32 %v60, %v163
  %165 = vmatmul.bf16.gmra.mxu0 %v93
  %v166 = vpop.f32.mrf.mxu0
  %v167 = vadd.f32 %v60, %v166
  %v168 = vpop.f32.mrf.mxu0
  %v169 = vadd.f32 %v60, %v168
  %170 = vmatmul.bf16.gmra.mxu0 %v96
  %v171 = vpop.f32.mrf.mxu0
  %v172 = vadd.f32 %v60, %v171
  %v173 = vpop.f32.mrf.mxu0
  %v174 = vadd.f32 %v60, %v173
  %175 = vmatmul.bf16.gmra.mxu0 %v99
  %v176 = vpop.f32.mrf.mxu0
  %v177 = vadd.f32 %v60, %v176
  %v178 = vpop.f32.mrf.mxu0
  %v179 = vadd.f32 %v60, %v178
  %180 = vmatmul.bf16.gmra.mxu0 %v102
  %v181 = vpop.f32.mrf.mxu0
  %v182 = vadd.f32 %v60, %v181
  %v183 = vpop.f32.mrf.mxu0
  %v184 = vadd.f32 %v60, %v183
  %185 = vmatmul.bf16.gmra.mxu0 %v105
  %v186 = vpop.f32.mrf.mxu0
  %v187 = vadd.f32 %v60, %v186
  %v188 = vpop.f32.mrf.mxu0
  %v189 = vadd.f32 %v60, %v188
  %190 = vmatmul.bf16.gmra.mxu0 %v108
  %v191 = vpop.f32.mrf.mxu0
  %v192 = vadd.f32 %v60, %v191
  %v193 = vpop.f32.mrf.mxu0
  %194 = vdwg.mxu0
  %v195 = vmax.f32 %v127, 0.0
  %v196 = vmax.f32 %v129, 0.0
  %v197 = vmax.f32 %v132, 0.0
  %v198 = vmax.f32 %v134, 0.0
  %v199 = vmax.f32 %v137, 0.0
  %v200 = vmax.f32 %v139, 0.0
  %v201 = vmax.f32 %v142, 0.0
  %v202 = vmax.f32 %v144, 0.0
  %v203 = vmax.f32 %v147, 0.0
  %v204 = vmax.f32 %v149, 0.0
  %v205 = vmax.f32 %v152, 0.0
  %v206 = vmax.f32 %v154, 0.0
  %v207 = vmax.f32 %v157, 0.0
  %v208 = vmax.f32 %v159, 0.0
  %v209 = vmax.f32 %v162, 0.0
  %v210 = vmax.f32 %v164, 0.0
  %v211 = vmax.f32 %v167, 0.0
  %v212 = vmax.f32 %v169, 0.0
  %v213 = vmax.f32 %v172, 0.0
  %v214 = vmax.f32 %v174, 0.0
  %v215 = vmax.f32 %v177, 0.0
  %v216 = vmax.f32 %v179, 0.0
  %v217 = vmax.f32 %v182, 0.0
  %v218 = vmax.f32 %v184, 0.0
  %v219 = vmax.f32 %v187, 0.0
  %v220 = vmax.f32 %v189, 0.0
  %v221 = vmax.f32 %v192, 0.0
  %vm222 = vcmask 261120
  %223 = vst.msk [vmem:[%s3] sm:$0xff] %vm222, %v195
  %224 = vst.msk [vmem:[%s3 + $0x8] sm:$0xff] %vm222, %v196
  %225 = vst.msk [vmem:[%s3 + $0x10] sm:$0xff] %vm222, %v197
  %226 = vst.msk [vmem:[%s3 + $0x18] sm:$0xff] %vm222, %v198
  %227 = vst.msk [vmem:[%s3 + $0x20] sm:$0xff] %vm222, %v199
  %228 = vst.msk [vmem:[%s3 + $0x28] sm:$0xff] %vm222, %v200
  %229 = vst.msk [vmem:[%s3 + $0x30] sm:$0xff] %vm222, %v201
  %230 = vst.msk [vmem:[%s3 + $0x38] sm:$0xff] %vm222, %v202
  %231 = vst.msk [vmem:[%s3 + $0x40] sm:$0xff] %vm222, %v203
  %232 = vst.msk [vmem:[%s3 + $0x48] sm:$0xff] %vm222, %v204
  %233 = vst.msk [vmem:[%s3 + $0x50] sm:$0xff] %vm222, %v205
  %234 = vst.msk [vmem:[%s3 + $0x58] sm:$0xff] %vm222, %v206
  %235 = vst.msk [vmem:[%s3 + $0x60] sm:$0xff] %vm222, %v207
  %236 = vst.msk [vmem:[%s3 + $0x68] sm:$0xff] %vm222, %v208
  %237 = vst.msk [vmem:[%s3 + $0x70] sm:$0xff] %vm222, %v209
  %238 = vst.msk [vmem:[%s3 + $0x78] sm:$0xff] %vm222, %v210
  %239 = vst.msk [vmem:[%s3 + $0x80] sm:$0xff] %vm222, %v211
  %240 = vst.msk [vmem:[%s3 + $0x88] sm:$0xff] %vm222, %v212
  %241 = vst.msk [vmem:[%s3 + $0x90] sm:$0xff] %vm222, %v213
  %242 = vst.msk [vmem:[%s3 + $0x98] sm:$0xff] %vm222, %v214
  %243 = vst.msk [vmem:[%s3 + $0xa0] sm:$0xff] %vm222, %v215
  %244 = vst.msk [vmem:[%s3 + $0xa8] sm:$0xff] %vm222, %v216
  %245 = vst.msk [vmem:[%s3 + $0xb0] sm:$0xff] %vm222, %v217
  %246 = vst.msk [vmem:[%s3 + $0xb8] sm:$0xff] %vm222, %v218
  %247 = vst.msk [vmem:[%s3 + $0xc0] sm:$0xff] %vm222, %v219
  %248 = vst.msk [vmem:[%s3 + $0xc8] sm:$0xff] %vm222, %v220
  %vm249 = vcmask 254976
  %250 = vst.msk [vmem:[%s3 + $0xd0] sm:$0x3] %vm249, %v221
  // Predicated region
  $region14: #{_lambda_.18} parent=0 // pred_check
    _
  $region15: #{_lambda_.18} parent=0 // pred_check_branch
    %252 = sbr.rel (0) target = $region17
  $region16: #{_lambda_.18} parent=0 // pred_region
    _
  $region17: #{_lambda_.18} parent=0 // pred_fallthru
    _
  // Predicated region
  $region18: #{_lambda_.18} parent=0 // pred_check
    _
  $region19: #{_lambda_.18} parent=0 // pred_check_branch
    %254 = sbr.rel (0) target = $region21
  $region20: #{_lambda_.18} parent=0 // pred_region
    _
  $region21: #{_lambda_.18} parent=0 // pred_fallthru
    _

// kernel: _lambda_.19
$region0: #{_lambda_.19}
  #allocation0 [shape = 'u32[]', space=smem, size = 0x4, offset = 0x4, fixed_abs, tag = 'smem constant byte address 0x4 - core index']
  #allocation1 [shape = 'u32[72,128]{1,0:T(1,128)}', space=vmem, size = 0x9000, scoped, tag = 'internal scratch']
  %s0 = inlined_call_operand.vmem [shape: f32[42,288], index: 0, kind: input, shape index: {}]
  %s1 = inlined_call_operand.vmem [shape: bf16[288,32], index: 1, kind: input, shape index: {}]
  %s2 = inlined_call_operand.vmem [shape: f32[1,32], index: 2, kind: input, shape index: {}]
  %s3 = inlined_call_operand.vmem [shape: f32[42,32], index: 3, kind: output, shape index: {}]
  %s4 = sld [smem:[#allocation0]]
  $region22: #{_lambda_.19} parent=0
    _
  %s6 = ssub.s32 1, %s4
  %s7 = scalar_select 0, %s6, %s4
  // Predicated region
  $region2: #{_lambda_.19} parent=0 // pred_check
    _
  $region3: #{_lambda_.19} parent=0 // pred_check_branch
    %9 = sbr.rel (0) target = $region5
  $region4: #{_lambda_.19} parent=0 // pred_region
    _
  $region5: #{_lambda_.19} parent=0 // pred_fallthru
    _
  // Predicated region
  $region6: #{_lambda_.19} parent=0 // pred_check
    _
  $region7: #{_lambda_.19} parent=0 // pred_check_branch
    %11 = sbr.rel (0) target = $region9
  $region8: #{_lambda_.19} parent=0 // pred_region
    _
  $region9: #{_lambda_.19} parent=0 // pred_fallthru
    _
  // Predicated region
  $region10: #{_lambda_.19} parent=0 // pred_check
    _
  $region11: #{_lambda_.19} parent=0 // pred_check_branch
    %13 = sbr.rel (0) target = $region13
  $region12: #{_lambda_.19} parent=0 // pred_region
    _
  $region13: #{_lambda_.19} parent=0 // pred_fallthru
    _
  %v15 = vld [vmem:[%s0] sm:$0xff]
  %v16 = vld [vmem:[%s0 + $0x8] sm:$0xff]
  %v17 = vld [vmem:[%s0 + $0x10] sm:$0xff]
  %v18 = vld [vmem:[%s0 + $0x18] sm:$0xff]
  %v19 = vld [vmem:[%s0 + $0x20] sm:$0xff]
  %v20 = vld [vmem:[%s0 + $0x28] sm:$0xff]
  %v21 = vld [vmem:[%s0 + $0x30] sm:$0xff]
  %v22 = vld [vmem:[%s0 + $0x38] sm:$0xff]
  %v23 = vld [vmem:[%s0 + $0x40] sm:$0xff]
  %v24 = vld [vmem:[%s0 + $0x48] sm:$0xff]
  %v25 = vld [vmem:[%s0 + $0x50] sm:$0xff]
  %v26 = vld [vmem:[%s0 + $0x58] sm:$0xff]
  %v27 = vld [vmem:[%s0 + $0x60] sm:$0xff]
  %v28 = vld [vmem:[%s0 + $0x68] sm:$0xff]
  %v29 = vld [vmem:[%s0 + $0x70] sm:$0xff]
  %v30 = vld [vmem:[%s0 + $0x78] sm:$0x3]
  %v31 = vld [vmem:[%s0 + $0x80] sm:$0x3]
  %v32 = vld [vmem:[%s0 + $0x88] sm:$0x3]
  %v33 = vld [vmem:[%s1] sm:$0xf]
  %v34 = vld [vmem:[%s1 + $0x4] sm:$0xf]
  %v35 = vld [vmem:[%s1 + $0x8] sm:$0xf]
  %v36 = vld [vmem:[%s1 + $0xc] sm:$0xf]
  %v37 = vld [vmem:[%s1 + $0x10] sm:$0xf]
  %v38 = vld [vmem:[%s1 + $0x14] sm:$0xf]
  %v39 = vld [vmem:[%s1 + $0x18] sm:$0xf]
  %v40 = vld [vmem:[%s1 + $0x1c] sm:$0xf]
  %v41 = vld [vmem:[%s1 + $0x20] sm:$0xf]
  %v42 = vld [vmem:[%s1 + $0x24] sm:$0xf]
  %v43 = vld [vmem:[%s1 + $0x28] sm:$0xf]
  %v44 = vld [vmem:[%s1 + $0x2c] sm:$0xf]
  %v45 = vld [vmem:[%s1 + $0x30] sm:$0xf]
  %v46 = vld [vmem:[%s1 + $0x34] sm:$0xf]
  %v47 = vld [vmem:[%s1 + $0x38] sm:$0xf]
  %v48 = vld [vmem:[%s1 + $0x3c] sm:$0xf]
  %v49 = vld [vmem:[%s1 + $0x40] sm:$0xf]
  %v50 = vld [vmem:[%s1 + $0x44] sm:$0xf]
  %v51 = vld [vmem:[%s1 + $0x48] sm:$0xf]
  %v52 = vld [vmem:[%s1 + $0x4c] sm:$0xf]
  %v53 = vld [vmem:[%s1 + $0x50] sm:$0xf]
  %v54 = vld [vmem:[%s1 + $0x54] sm:$0xf]
  %v55 = vld [vmem:[%s1 + $0x58] sm:$0xf]
  %v56 = vld [vmem:[%s1 + $0x5c] sm:$0xf]
  %v57 = vld [vmem:[%s1 + $0x60] sm:$0xf]
  %v58 = vld [vmem:[%s1 + $0x64] sm:$0xf]
  %v59 = vld [vmem:[%s1 + $0x68] sm:$0xf]
  %v60 = vld [vmem:[%s1 + $0x6c] sm:$0xf]
  %v61 = vld [vmem:[%s1 + $0x70] sm:$0xf]
  %v62 = vld [vmem:[%s1 + $0x74] sm:$0xf]
  %v63 = vld [vmem:[%s1 + $0x78] sm:$0xf]
  %v64 = vld [vmem:[%s1 + $0x7c] sm:$0xf]
  %v65 = vld [vmem:[%s1 + $0x80] sm:$0xf]
  %v66 = vld [vmem:[%s1 + $0x84] sm:$0xf]
  %v67 = vld [vmem:[%s1 + $0x88] sm:$0xf]
  %v68 = vld [vmem:[%s1 + $0x8c] sm:$0xf]
  %v69 = vld [vmem:[%s2] sm:$0x1]
  %v70 = vpack.c.bf16 %v18, %v15
  %v71 = vpack.c.bf16 %v19, %v16
  %v72 = vpack.c.bf16 %v20, %v17
  %v73 = vpack.c.bf16 %v24, %v21
  %v74 = vpack.c.bf16 %v25, %v22
  %v75 = vpack.c.bf16 %v26, %v23
  %v76 = vpack.c.bf16 %v30, %v27
  %v77 = vpack.c.bf16 %v31, %v28
  %v78 = vpack.c.bf16 %v32, %v29
  %v80 = vperm.slane %v69, 0
  %v118 = vunpack.c.l.b16 %v33
  %v119 = vunpack.c.l.b16 %v34
  %v120 = vunpack.c.l.b16 %v35
  %v121 = vunpack.c.l.b16 %v36
  %v122 = vunpack.c.l.b16 %v37
  %v123 = vunpack.c.l.b16 %v38
  %v124 = vunpack.c.l.b16 %v39
  %v125 = vunpack.c.l.b16 %v40
  %v126 = vunpack.c.l.b16 %v41
  %v127 = vunpack.c.l.b16 %v42
  %v128 = vunpack.c.l.b16 %v43
  %v129 = vunpack.c.l.b16 %v44
  %v130 = vunpack.c.l.b16 %v45
  %v131 = vunpack.c.l.b16 %v46
  %v132 = vunpack.c.l.b16 %v47
  %v133 = vunpack.c.l.b16 %v48
  %v134 = vunpack.c.l.b16 %v49
  %v135 = vunpack.c.l.b16 %v50
  %v136 = vunpack.c.l.b16 %v51
  %v137 = vunpack.c.l.b16 %v52
  %v138 = vunpack.c.l.b16 %v53
  %v139 = vunpack.c.l.b16 %v54
  %v140 = vunpack.c.l.b16 %v55
  %v141 = vunpack.c.l.b16 %v56
  %v142 = vunpack.c.l.b16 %v57
  %v143 = vunpack.c.l.b16 %v58
  %v144 = vunpack.c.l.b16 %v59
  %v145 = vunpack.c.l.b16 %v60
  %v146 = vunpack.c.l.b16 %v61
  %v147 = vunpack.c.l.b16 %v62
  %v148 = vunpack.c.l.b16 %v63
  %v149 = vunpack.c.l.b16 %v64
  %v150 = vunpack.c.l.b16 %v65
  %v151 = vunpack.c.l.b16 %v66
  %v152 = vunpack.c.l.b16 %v67
  %v153 = vunpack.c.l.b16 %v68
  %v154 = vpack.c.b16 %v119, %v118
  %v155 = vpack.c.b16 %v121, %v120
  %v156 = vpack.c.b16 %v123, %v122
  %v157 = vpack.c.b16 %v125, %v124
  %v158 = vpack.c.b16 %v127, %v126
  %v159 = vpack.c.b16 %v129, %v128
  %v160 = vpack.c.b16 %v131, %v130
  %v161 = vpack.c.b16 %v133, %v132
  %v162 = vpack.c.b16 %v135, %v134
  %v163 = vpack.c.b16 %v137, %v136
  %v164 = vpack.c.b16 %v139, %v138
  %v165 = vpack.c.b16 %v141, %v140
  %v166 = vpack.c.b16 %v143, %v142
  %v167 = vpack.c.b16 %v145, %v144
  %v168 = vpack.c.b16 %v147, %v146
  %v169 = vpack.c.b16 %v149, %v148
  %v170 = vpack.c.b16 %v151, %v150
  %v171 = vpack.c.b16 %v153, %v152
  %vm190 = vcmask 261120
  %v192 = vsel %vm190, %v72, 0
  %v195 = vsel %vm190, %v75, 0
  %v198 = vsel %vm190, %v78, 0
  %200 = vmatpush.bf16.msra.mxu0 %v161
  %201 = vmatpush.bf16.msra.mxu0 %v160
  %202 = vmatpush.bf16.msra.mxu0 %v159
  %203 = vmatpush.bf16.msra.mxu0 %v158
  %204 = vmatpush.bf16.msra.mxu0 %v157
  %205 = vmatpush.bf16.msra.mxu0 %v156
  %206 = vmatpush.bf16.msra.mxu0 %v155
  %207 = vmatpush.bf16.msra.mxu0 %v154
  %208 = vmatmul.bf16.gmra.mxu0 %v70
  %v209 = vpop.f32.mrf.mxu0
  %v210 = vadd.f32 %v80, %v209
  %v211 = vpop.f32.mrf.mxu0
  %v212 = vadd.f32 %v80, %v211
  %213 = vmatmul.bf16.gmra.mxu0 %v73
  %v214 = vpop.f32.mrf.mxu0
  %v215 = vadd.f32 %v80, %v214
  %v216 = vpop.f32.mrf.mxu0
  %v217 = vadd.f32 %v80, %v216
  %218 = vmatmul.bf16.gmra.mxu0 %v76
  %v219 = vpop.f32.mrf.mxu0
  %v220 = vadd.f32 %v80, %v219
  %v221 = vpop.f32.mrf.mxu0
  %v222 = vadd.f32 %v80, %v221
  %223 = vdwg.mxu0
  %224 = vmatpush.bf16.msra.mxu0 %v169
  %225 = vmatpush.bf16.msra.mxu0 %v168
  %226 = vmatpush.bf16.msra.mxu0 %v167
  %227 = vmatpush.bf16.msra.mxu0 %v166
  %228 = vmatpush.bf16.msra.mxu0 %v165
  %229 = vmatpush.bf16.msra.mxu0 %v164
  %230 = vmatpush.bf16.msra.mxu0 %v163
  %231 = vmatpush.bf16.msra.mxu0 %v162
  %232 = vmatmul.bf16.gmra.mxu0 %v71
  %v233 = vpop.f32.mrf.mxu0
  %v234 = vadd.f32 %v210, %v233
  %v235 = vpop.f32.mrf.mxu0
  %v236 = vadd.f32 %v212, %v235
  %237 = vmatmul.bf16.gmra.mxu0 %v74
  %v238 = vpop.f32.mrf.mxu0
  %v239 = vadd.f32 %v215, %v238
  %v240 = vpop.f32.mrf.mxu0
  %v241 = vadd.f32 %v217, %v240
  %242 = vmatmul.bf16.gmra.mxu0 %v77
  %v243 = vpop.f32.mrf.mxu0
  %v244 = vadd.f32 %v220, %v243
  %v245 = vpop.f32.mrf.mxu0
  %v246 = vadd.f32 %v222, %v245
  %247 = vdwg.mxu0
  %248 = vmatpush.bf16.msra.mxu0 0
  %249 = vmatpush.bf16.msra.mxu0 0
  %250 = vmatpush.bf16.msra.mxu0 0
  %251 = vmatpush.bf16.msra.mxu0 0
  %252 = vmatpush.bf16.msra.mxu0 0
  %253 = vmatpush.bf16.msra.mxu0 0
  %254 = vmatpush.bf16.msra.mxu0 %v171
  %255 = vmatpush.bf16.msra.mxu0 %v170
  %256 = vmatmul.bf16.gmra.mxu0 %v192
  %v257 = vpop.f32.mrf.mxu0
  %v258 = vadd.f32 %v234, %v257
  %v259 = vpop.f32.mrf.mxu0
  %v260 = vadd.f32 %v236, %v259
  %261 = vmatmul.bf16.gmra.mxu0 %v195
  %v262 = vpop.f32.mrf.mxu0
  %v263 = vadd.f32 %v239, %v262
  %v264 = vpop.f32.mrf.mxu0
  %v265 = vadd.f32 %v241, %v264
  %266 = vmatmul.bf16.gmra.mxu0 %v198
  %v267 = vpop.f32.mrf.mxu0
  %v268 = vadd.f32 %v244, %v267
  %v269 = vpop.f32.mrf.mxu0
  %v270 = vadd.f32 %v246, %v269
  %271 = vdwg.mxu0
  %v272 = vmax.f32 %v258, 0.0
  %v273 = vmax.f32 %v260, 0.0
  %v274 = vmax.f32 %v263, 0.0
  %v275 = vmax.f32 %v265, 0.0
  %v276 = vmax.f32 %v268, 0.0
  %v277 = vmax.f32 %v270, 0.0
  %278 = vst.msk [vmem:[%s3] sm:$0xff] %vm190, %v272
  %279 = vst.msk [vmem:[%s3 + $0x8] sm:$0xff] %vm190, %v273
  %280 = vst.msk [vmem:[%s3 + $0x10] sm:$0xff] %vm190, %v274
  %281 = vst.msk [vmem:[%s3 + $0x18] sm:$0xff] %vm190, %v275
  %282 = vst.msk [vmem:[%s3 + $0x20] sm:$0xff] %vm190, %v276
  %vm283 = vcmask 254976
  %284 = vst.msk [vmem:[%s3 + $0x28] sm:$0x3] %vm283, %v277
  // Predicated region
  $region14: #{_lambda_.19} parent=0 // pred_check
    _
  $region15: #{_lambda_.19} parent=0 // pred_check_branch
    %286 = sbr.rel (0) target = $region17
  $region16: #{_lambda_.19} parent=0 // pred_region
    _
  $region17: #{_lambda_.19} parent=0 // pred_fallthru
    _
  // Predicated region
  $region18: #{_lambda_.19} parent=0 // pred_check
    _
  $region19: #{_lambda_.19} parent=0 // pred_check_branch
    %288 = sbr.rel (0) target = $region21
  $region20: #{_lambda_.19} parent=0 // pred_region
    _
  $region21: #{_lambda_.19} parent=0 // pred_fallthru
    _

// kernel: _lambda_.20
$region0: #{_lambda_.20}
  #allocation0 [shape = 'u32[]', space=smem, size = 0x4, offset = 0x4, fixed_abs, tag = 'smem constant byte address 0x4 - core index']
  #allocation1 [shape = 'u32[72,128]{1,0:T(1,128)}', space=vmem, size = 0x9000, scoped, tag = 'internal scratch']
  %s0 = inlined_call_operand.vmem [shape: f32[14,96], index: 0, kind: input, shape index: {}]
  %s1 = inlined_call_operand.vmem [shape: bf16[96,32], index: 1, kind: input, shape index: {}]
  %s2 = inlined_call_operand.vmem [shape: f32[1,32], index: 2, kind: input, shape index: {}]
  %s3 = inlined_call_operand.vmem [shape: f32[14,32], index: 3, kind: input, shape index: {}]
  %s4 = inlined_call_operand.vmem [shape: f32[14,32], index: 4, kind: output, shape index: {}]
  %s5 = sld [smem:[#allocation0]]
  $region26: #{_lambda_.20} parent=0
    _
  %s7 = ssub.s32 1, %s5
  %s8 = scalar_select 0, %s7, %s5
  // Predicated region
  $region2: #{_lambda_.20} parent=0 // pred_check
    _
  $region3: #{_lambda_.20} parent=0 // pred_check_branch
    %10 = sbr.rel (0) target = $region5
  $region4: #{_lambda_.20} parent=0 // pred_region
    _
  $region5: #{_lambda_.20} parent=0 // pred_fallthru
    _
  // Predicated region
  $region6: #{_lambda_.20} parent=0 // pred_check
    _
  $region7: #{_lambda_.20} parent=0 // pred_check_branch
    %12 = sbr.rel (0) target = $region9
  $region8: #{_lambda_.20} parent=0 // pred_region
    _
  $region9: #{_lambda_.20} parent=0 // pred_fallthru
    _
  // Predicated region
  $region10: #{_lambda_.20} parent=0 // pred_check
    _
  $region11: #{_lambda_.20} parent=0 // pred_check_branch
    %14 = sbr.rel (0) target = $region13
  $region12: #{_lambda_.20} parent=0 // pred_region
    _
  $region13: #{_lambda_.20} parent=0 // pred_fallthru
    _
  // Predicated region
  $region14: #{_lambda_.20} parent=0 // pred_check
    _
  $region15: #{_lambda_.20} parent=0 // pred_check_branch
    %16 = sbr.rel (0) target = $region17
  $region16: #{_lambda_.20} parent=0 // pred_region
    _
  $region17: #{_lambda_.20} parent=0 // pred_fallthru
    _
  %v18 = vld [vmem:[%s0] sm:$0xff]
  %v19 = vld [vmem:[%s0 + $0x8] sm:$0x3f]
  %v20 = vld [vmem:[%s1] sm:$0xf]
  %v21 = vld [vmem:[%s1 + $0x4] sm:$0xf]
  %v22 = vld [vmem:[%s1 + $0x8] sm:$0xf]
  %v23 = vld [vmem:[%s1 + $0xc] sm:$0xf]
  %v24 = vld [vmem:[%s1 + $0x10] sm:$0xf]
  %v25 = vld [vmem:[%s1 + $0x14] sm:$0xf]
  %v26 = vld [vmem:[%s1 + $0x18] sm:$0xf]
  %v27 = vld [vmem:[%s1 + $0x1c] sm:$0xf]
  %v28 = vld [vmem:[%s1 + $0x20] sm:$0xf]
  %v29 = vld [vmem:[%s1 + $0x24] sm:$0xf]
  %v30 = vld [vmem:[%s1 + $0x28] sm:$0xf]
  %v31 = vld [vmem:[%s1 + $0x2c] sm:$0xf]
  %v32 = vld [vmem:[%s2] sm:$0x1]
  %v33 = vpack.c.bf16 %v19, %v18
  %v35 = vperm.slane %v32, 0
  %v49 = vunpack.c.l.b16 %v20
  %v50 = vunpack.c.l.b16 %v21
  %v51 = vunpack.c.l.b16 %v22
  %v52 = vunpack.c.l.b16 %v23
  %v53 = vunpack.c.l.b16 %v24
  %v54 = vunpack.c.l.b16 %v25
  %v55 = vunpack.c.l.b16 %v26
  %v56 = vunpack.c.l.b16 %v27
  %v57 = vunpack.c.l.b16 %v28
  %v58 = vunpack.c.l.b16 %v29
  %v59 = vunpack.c.l.b16 %v30
  %v60 = vunpack.c.l.b16 %v31
  %v61 = vpack.c.b16 %v50, %v49
  %v62 = vpack.c.b16 %v52, %v51
  %v63 = vpack.c.b16 %v54, %v53
  %v64 = vpack.c.b16 %v56, %v55
  %v65 = vpack.c.b16 %v58, %v57
  %v66 = vpack.c.b16 %v60, %v59
  %vm73 = vcmask 785408
  %v75 = vsel %vm73, %v33, 0
  %77 = vmatpush.bf16.msra.mxu0 0
  %78 = vmatpush.bf16.msra.mxu0 0
  %79 = vmatpush.bf16.msra.mxu0 %v66
  %80 = vmatpush.bf16.msra.mxu0 %v65
  %81 = vmatpush.bf16.msra.mxu0 %v64
  %82 = vmatpush.bf16.msra.mxu0 %v63
  %83 = vmatpush.bf16.msra.mxu0 %v62
  %84 = vmatpush.bf16.msra.mxu0 %v61
  %85 = vmatmul.bf16.gmra.mxu0 %v75
  %v86 = vpop.f32.mrf.mxu0
  %v87 = vadd.f32 %v35, %v86
  %v88 = vpop.f32.mrf.mxu0
  %v89 = vadd.f32 %v35, %v88
  %90 = vdwg.mxu0
  %v91 = vmul.f32 %v87, 5.656854
  %v92 = vmul.f32 %v89, 5.656854
  %v93 = vld [vmem:[%s3] sm:$0xff]
  %v94 = vld [vmem:[%s3 + $0x8] sm:$0x3f]
  %v95 = vadd.f32 %v91, %v93
  %v96 = vadd.f32 %v92, %v94
  %vm97 = vcmask 261120
  %98 = vst.msk [vmem:[%s4] sm:$0xff] %vm97, %v95
  %vm99 = vcmask 259072
  %100 = vst.msk [vmem:[%s4 + $0x8] sm:$0x3f] %vm99, %v96
  // Predicated region
  $region18: #{_lambda_.20} parent=0 // pred_check
    _
  $region19: #{_lambda_.20} parent=0 // pred_check_branch
    %102 = sbr.rel (0) target = $region21
  $region20: #{_lambda_.20} parent=0 // pred_region
    _
  $region21: #{_lambda_.20} parent=0 // pred_fallthru
    _
  // Predicated region
  $region22: #{_lambda_.20} parent=0 // pred_check
    _
  $region23: #{_lambda_.20} parent=0 // pred_check_branch
    %104 = sbr.rel (0) target = $region25
  $region24: #{_lambda_.20} parent=0 // pred_region
    _
  $region25: #{_lambda_.20} parent=0 // pred_fallthru
    _

// kernel: _lambda_.21
$region0: #{_lambda_.21}
  #allocation0 [shape = 'u32[]', space=smem, size = 0x4, offset = 0x4, fixed_abs, tag = 'smem constant byte address 0x4 - core index']
  #allocation1 [shape = 'u32[72,128]{1,0:T(1,128)}', space=vmem, size = 0x9000, scoped, tag = 'internal scratch']
  %s0 = inlined_call_operand.vmem [shape: f32[14,32], index: 0, kind: input, shape index: {}]
  %s1 = inlined_call_operand.vmem [shape: f32[1,32], index: 1, kind: input, shape index: {}]
  %s2 = inlined_call_operand.vmem [shape: f32[1,32], index: 2, kind: input, shape index: {}]
  %s3 = inlined_call_operand.vmem [shape: bf16[32,128], index: 3, kind: input, shape index: {}]
  %s4 = inlined_call_operand.vmem [shape: f32[1,128], index: 4, kind: input, shape index: {}]
  %s5 = inlined_call_operand.vmem [shape: bf16[128,32], index: 5, kind: input, shape index: {}]
  %s6 = inlined_call_operand.vmem [shape: f32[1,32], index: 6, kind: input, shape index: {}]
  %s7 = inlined_call_operand.vmem [shape: f32[14,32], index: 7, kind: output, shape index: {}]
  %s8 = sld [smem:[#allocation0]]
  $region38: #{_lambda_.21} parent=0
    _
  %s10 = ssub.s32 1, %s8
  %s11 = scalar_select 0, %s10, %s8
  // Predicated region
  $region2: #{_lambda_.21} parent=0 // pred_check
    _
  $region3: #{_lambda_.21} parent=0 // pred_check_branch
    %13 = sbr.rel (0) target = $region5
  $region4: #{_lambda_.21} parent=0 // pred_region
    _
  $region5: #{_lambda_.21} parent=0 // pred_fallthru
    _
  // Predicated region
  $region6: #{_lambda_.21} parent=0 // pred_check
    _
  $region7: #{_lambda_.21} parent=0 // pred_check_branch
    %15 = sbr.rel (0) target = $region9
  $region8: #{_lambda_.21} parent=0 // pred_region
    _
  $region9: #{_lambda_.21} parent=0 // pred_fallthru
    _
  // Predicated region
  $region10: #{_lambda_.21} parent=0 // pred_check
    _
  $region11: #{_lambda_.21} parent=0 // pred_check_branch
    %17 = sbr.rel (0) target = $region13
  $region12: #{_lambda_.21} parent=0 // pred_region
    _
  $region13: #{_lambda_.21} parent=0 // pred_fallthru
    _
  // Predicated region
  $region14: #{_lambda_.21} parent=0 // pred_check
    _
  $region15: #{_lambda_.21} parent=0 // pred_check_branch
    %19 = sbr.rel (0) target = $region17
  $region16: #{_lambda_.21} parent=0 // pred_region
    _
  $region17: #{_lambda_.21} parent=0 // pred_fallthru
    _
  // Predicated region
  $region18: #{_lambda_.21} parent=0 // pred_check
    _
  $region19: #{_lambda_.21} parent=0 // pred_check_branch
    %21 = sbr.rel (0) target = $region21
  $region20: #{_lambda_.21} parent=0 // pred_region
    _
  $region21: #{_lambda_.21} parent=0 // pred_fallthru
    _
  // Predicated region
  $region22: #{_lambda_.21} parent=0 // pred_check
    _
  $region23: #{_lambda_.21} parent=0 // pred_check_branch
    %23 = sbr.rel (0) target = $region25
  $region24: #{_lambda_.21} parent=0 // pred_region
    _
  $region25: #{_lambda_.21} parent=0 // pred_fallthru
    _
  // Predicated region
  $region26: #{_lambda_.21} parent=0 // pred_check
    _
  $region27: #{_lambda_.21} parent=0 // pred_check_branch
    %25 = sbr.rel (0) target = $region29
  $region28: #{_lambda_.21} parent=0 // pred_region
    _
  $region29: #{_lambda_.21} parent=0 // pred_fallthru
    _
  %v27 = vld [vmem:[%s0] sm:$0xff]
  %v28 = vld [vmem:[%s0 + $0x8] sm:$0x3f]
  %v29 = vld [vmem:[%s1] sm:$0x1]
  %v30 = vld [vmem:[%s2] sm:$0x1]
  %vm31 = vcmask 261120
  %v32 = vsel %vm31, %v27, 0.0
  %33 = vadd.xlane.f32.xlu0 %v32
  %v34 = vpop.xlane.xlu0 %33
  %vm35 = vcmask 259072
  %v36 = vsel %vm35, %v28, 0.0
  %37 = vadd.xlane.f32.xlu0 %v36
  %v38 = vpop.xlane.xlu0 %37
  %v39 = vrcp.pop 32.0
  %v40 = vmul.f32 32.0, %v39
  %v41 = vsub.f32 1.0, %v40
  %v42 = vmul.f32 %v39, %v41
  %v43 = vadd.f32 %v39, %v42
  %vm44 = vweird.f32 %v39
  %v45 = vsel %vm44, %v39, %v43
  %v46 = vmul.f32 %v34, %v45
  %v47 = vmul.f32 %v38, %v45
  %v48 = vsub.f32 %v27, %v46
  %v49 = vsub.f32 %v28, %v47
  %v50 = vmul.f32 %v48, %v48
  %v51 = vmul.f32 %v49, %v49
  %v52 = vsel %vm31, %v50, 0.0
  %53 = vadd.xlane.f32.xlu0 %v52
  %v54 = vpop.xlane.xlu0 %53
  %v55 = vsel %vm35, %v51, 0.0
  %56 = vadd.xlane.f32.xlu0 %v55
  %v57 = vpop.xlane.xlu0 %56
  %v58 = vmul.f32 %v54, %v45
  %v59 = vmul.f32 %v57, %v45
  %v60 = vadd.f32 %v58, 1e-05
  %v61 = vadd.f32 %v59, 1e-05
  %v62 = vrsqrt.pop %v60
  %v63 = vmul.f32 %v62, %v60
  %v64 = vmul.f32 %v63, %v62
  %v65 = vmul.f32 0.5, %v64
  %v66 = vsub.f32 1.5, %v65
  %v67 = vmul.f32 %v62, %v66
  %vm68 = vweird.f32 %v60
  %vm69 = vweird.f32 %v62
  %vm70 = vmor %vm68, %vm69
  %v71 = vsel %vm70, %v62, %v67
  %v72 = vrsqrt.pop %v61
  %v73 = vmul.f32 %v72, %v61
  %v74 = vmul.f32 %v73, %v72
  %v75 = vmul.f32 0.5, %v74
  %v76 = vsub.f32 1.5, %v75
  %v77 = vmul.f32 %v72, %v76
  %vm78 = vweird.f32 %v61
  %vm79 = vweird.f32 %v72
  %vm80 = vmor %vm78, %vm79
  %v81 = vsel %vm80, %v72, %v77
  %v82 = vmul.f32 %v48, %v71
  %v83 = vmul.f32 %v49, %v81
  %v85 = vperm.slane %v29, 0
  %v87 = vmul.f32 %v82, %v85
  %v88 = vmul.f32 %v83, %v85
  %v90 = vperm.slane %v30, 0
  %v92 = vadd.f32 %v87, %v90
  %v93 = vadd.f32 %v88, %v90
  %v94 = vpack.c.bf16 %v93, %v92
  %v95 = vld [vmem:[%s3] sm:$0xf]
  %v96 = vld [vmem:[%s3 + $0x4] sm:$0xf]
  %v97 = vld [vmem:[%s3 + $0x8] sm:$0xf]
  %v98 = vld [vmem:[%s3 + $0xc] sm:$0xf]
  %v99 = vld [vmem:[%s4] sm:$0x1]
  %v101 = vperm.slane %v99, 0
  %v107 = vunpack.c.l.b16 %v95
  %v108 = vunpack.c.l.b16 %v96
  %v109 = vunpack.c.l.b16 %v97
  %v110 = vunpack.c.l.b16 %v98
  %v111 = vpack.c.b16 %v108, %v107
  %v112 = vpack.c.b16 %v110, %v109
  %v116 = vsel %vm31, %v94, 0
  %118 = vmatpush.bf16.msra.mxu0 0
  %119 = vmatpush.bf16.msra.mxu0 0
  %120 = vmatpush.bf16.msra.mxu0 0
  %121 = vmatpush.bf16.msra.mxu0 0
  %122 = vmatpush.bf16.msra.mxu0 0
  %123 = vmatpush.bf16.msra.mxu0 0
  %124 = vmatpush.bf16.msra.mxu0 %v112
  %125 = vmatpush.bf16.msra.mxu0 %v111
  %126 = vmatmul.bf16.gmra.mxu0 %v116
  %v127 = vpop.f32.mrf.mxu0
  %v128 = vadd.f32 %v101, %v127
  %v129 = vpop.f32.mrf.mxu0
  %v130 = vadd.f32 %v101, %v129
  %131 = vdwg.mxu0
  %v132 = vxor.u32 %v128, 2147483648
  %v133 = vxor.u32 %v130, 2147483648
  %v134 = vmul.f32 %v132, 1.442695
  %v135 = vpow.pop %v134
  %v136 = vmul.f32 %v133, 1.442695
  %v137 = vpow.pop %v136
  %v138 = vadd.f32 %v135, 1.0
  %v139 = vadd.f32 %v137, 1.0
  %v140 = vrcp.pop %v138
  %v141 = vmul.f32 %v138, %v140
  %v142 = vsub.f32 1.0, %v141
  %v143 = vmul.f32 %v140, %v142
  %v144 = vadd.f32 %v140, %v143
  %vm145 = vweird.f32 %v138
  %vm146 = vweird.f32 %v140
  %vm147 = vmor %vm145, %vm146
  %v148 = vsel %vm147, %v140, %v144
  %v149 = vand.u32 2147483647, %v138
  %vm150 = vcmp.eq.f32.partialorder %v149, 8.507059e+37
  %v151 = vand.u32 %v138, 2147483648
  %v152 = vor.u32 1.1754944e-38, %v151
  %v153 = vsel %vm150, %v152, %v148
  %v154 = vmul.f32 1.0, %v153
  %v155 = vrcp.pop %v139
  %v156 = vmul.f32 %v139, %v155
  %v157 = vsub.f32 1.0, %v156
  %v158 = vmul.f32 %v155, %v157
  %v159 = vadd.f32 %v155, %v158
  %vm160 = vweird.f32 %v139
  %vm161 = vweird.f32 %v155
  %vm162 = vmor %vm160, %vm161
  %v163 = vsel %vm162, %v155, %v159
  %v164 = vand.u32 2147483647, %v139
  %vm165 = vcmp.eq.f32.partialorder %v164, 8.507059e+37
  %v166 = vand.u32 %v139, 2147483648
  %v167 = vor.u32 1.1754944e-38, %v166
  %v168 = vsel %vm165, %v167, %v163
  %v169 = vmul.f32 1.0, %v168
  %v170 = vmul.f32 %v128, %v154
  %v171 = vmul.f32 %v130, %v169
  %v172 = vpack.c.bf16 %v171, %v170
  %v173 = vld [vmem:[%s5] sm:$0xf]
  %v174 = vld [vmem:[%s5 + $0x4] sm:$0xf]
  %v175 = vld [vmem:[%s5 + $0x8] sm:$0xf]
  %v176 = vld [vmem:[%s5 + $0xc] sm:$0xf]
  %v177 = vld [vmem:[%s5 + $0x10] sm:$0xf]
  %v178 = vld [vmem:[%s5 + $0x14] sm:$0xf]
  %v179 = vld [vmem:[%s5 + $0x18] sm:$0xf]
  %v180 = vld [vmem:[%s5 + $0x1c] sm:$0xf]
  %v181 = vld [vmem:[%s5 + $0x20] sm:$0xf]
  %v182 = vld [vmem:[%s5 + $0x24] sm:$0xf]
  %v183 = vld [vmem:[%s5 + $0x28] sm:$0xf]
  %v184 = vld [vmem:[%s5 + $0x2c] sm:$0xf]
  %v185 = vld [vmem:[%s5 + $0x30] sm:$0xf]
  %v186 = vld [vmem:[%s5 + $0x34] sm:$0xf]
  %v187 = vld [vmem:[%s5 + $0x38] sm:$0xf]
  %v188 = vld [vmem:[%s5 + $0x3c] sm:$0xf]
  %v189 = vld [vmem:[%s6] sm:$0x1]
  %v191 = vperm.slane %v189, 0
  %v209 = vunpack.c.l.b16 %v173
  %v210 = vunpack.c.l.b16 %v174
  %v211 = vunpack.c.l.b16 %v175
  %v212 = vunpack.c.l.b16 %v176
  %v213 = vunpack.c.l.b16 %v177
  %v214 = vunpack.c.l.b16 %v178
  %v215 = vunpack.c.l.b16 %v179
  %v216 = vunpack.c.l.b16 %v180
  %v217 = vunpack.c.l.b16 %v181
  %v218 = vunpack.c.l.b16 %v182
  %v219 = vunpack.c.l.b16 %v183
  %v220 = vunpack.c.l.b16 %v184
  %v221 = vunpack.c.l.b16 %v185
  %v222 = vunpack.c.l.b16 %v186
  %v223 = vunpack.c.l.b16 %v187
  %v224 = vunpack.c.l.b16 %v188
  %v225 = vpack.c.b16 %v210, %v209
  %v226 = vpack.c.b16 %v212, %v211
  %v227 = vpack.c.b16 %v214, %v213
  %v228 = vpack.c.b16 %v216, %v215
  %v229 = vpack.c.b16 %v218, %v217
  %v230 = vpack.c.b16 %v220, %v219
  %v231 = vpack.c.b16 %v222, %v221
  %v232 = vpack.c.b16 %v224, %v223
  %241 = vmatpush.bf16.msra.mxu0 %v232
  %242 = vmatpush.bf16.msra.mxu0 %v231
  %243 = vmatpush.bf16.msra.mxu0 %v230
  %244 = vmatpush.bf16.msra.mxu0 %v229
  %245 = vmatpush.bf16.msra.mxu0 %v228
  %246 = vmatpush.bf16.msra.mxu0 %v227
  %247 = vmatpush.bf16.msra.mxu0 %v226
  %248 = vmatpush.bf16.msra.mxu0 %v225
  %249 = vmatmul.bf16.gmra.mxu0 %v172
  %v250 = vpop.f32.mrf.mxu0
  %v251 = vadd.f32 %v191, %v250
  %v252 = vpop.f32.mrf.mxu0
  %v253 = vadd.f32 %v191, %v252
  %254 = vdwg.mxu0
  %v255 = vmul.f32 %v251, 0.5
  %v256 = vmul.f32 %v253, 0.5
  %v257 = vadd.f32 %v27, %v255
  %v258 = vadd.f32 %v28, %v256
  %259 = vst.msk [vmem:[%s7] sm:$0xff] %vm31, %v257
  %260 = vst.msk [vmem:[%s7 + $0x8] sm:$0x3f] %vm35, %v258
  // Predicated region
  $region30: #{_lambda_.21} parent=0 // pred_check
    _
  $region31: #{_lambda_.21} parent=0 // pred_check_branch
    %262 = sbr.rel (0) target = $region33
  $region32: #{_lambda_.21} parent=0 // pred_region
    _
  $region33: #{_lambda_.21} parent=0 // pred_fallthru
    _
  // Predicated region
  $region34: #{_lambda_.21} parent=0 // pred_check
    _
  $region35: #{_lambda_.21} parent=0 // pred_check_branch
    %264 = sbr.rel (0) target = $region37
  $region36: #{_lambda_.21} parent=0 // pred_region
    _
  $region37: #{_lambda_.21} parent=0 // pred_fallthru
    _

// kernel: _lambda_.22
$region0: #{_lambda_.22}
  #allocation0 [shape = 'u32[]', space=smem, size = 0x4, offset = 0x4, fixed_abs, tag = 'smem constant byte address 0x4 - core index']
  #allocation1 [shape = 'u32[72,128]{1,0:T(1,128)}', space=vmem, size = 0x9000, scoped, tag = 'internal scratch']
  %s0 = inlined_call_operand.vmem [shape: f32[14,32], index: 0, kind: input, shape index: {}]
  %s1 = inlined_call_operand.vmem [shape: f32[1,32], index: 1, kind: input, shape index: {}]
  %s2 = inlined_call_operand.vmem [shape: f32[1,32], index: 2, kind: input, shape index: {}]
  %s3 = inlined_call_operand.vmem [shape: bf16[32,96], index: 3, kind: input, shape index: {}]
  %s4 = inlined_call_operand.vmem [shape: f32[1,96], index: 4, kind: input, shape index: {}]
  %s5 = inlined_call_operand.vmem [shape: f32[14,96], index: 5, kind: output, shape index: {}]
  %s6 = sld [smem:[#allocation0]]
  $region30: #{_lambda_.22} parent=0
    _
  %s8 = ssub.s32 1, %s6
  %s9 = scalar_select 0, %s8, %s6
  // Predicated region
  $region2: #{_lambda_.22} parent=0 // pred_check
    _
  $region3: #{_lambda_.22} parent=0 // pred_check_branch
    %11 = sbr.rel (0) target = $region5
  $region4: #{_lambda_.22} parent=0 // pred_region
    _
  $region5: #{_lambda_.22} parent=0 // pred_fallthru
    _
  // Predicated region
  $region6: #{_lambda_.22} parent=0 // pred_check
    _
  $region7: #{_lambda_.22} parent=0 // pred_check_branch
    %13 = sbr.rel (0) target = $region9
  $region8: #{_lambda_.22} parent=0 // pred_region
    _
  $region9: #{_lambda_.22} parent=0 // pred_fallthru
    _
  // Predicated region
  $region10: #{_lambda_.22} parent=0 // pred_check
    _
  $region11: #{_lambda_.22} parent=0 // pred_check_branch
    %15 = sbr.rel (0) target = $region13
  $region12: #{_lambda_.22} parent=0 // pred_region
    _
  $region13: #{_lambda_.22} parent=0 // pred_fallthru
    _
  // Predicated region
  $region14: #{_lambda_.22} parent=0 // pred_check
    _
  $region15: #{_lambda_.22} parent=0 // pred_check_branch
    %17 = sbr.rel (0) target = $region17
  $region16: #{_lambda_.22} parent=0 // pred_region
    _
  $region17: #{_lambda_.22} parent=0 // pred_fallthru
    _
  // Predicated region
  $region18: #{_lambda_.22} parent=0 // pred_check
    _
  $region19: #{_lambda_.22} parent=0 // pred_check_branch
    %19 = sbr.rel (0) target = $region21
  $region20: #{_lambda_.22} parent=0 // pred_region
    _
  $region21: #{_lambda_.22} parent=0 // pred_fallthru
    _
  %v21 = vld [vmem:[%s0] sm:$0xff]
  %v22 = vld [vmem:[%s0 + $0x8] sm:$0x3f]
  %v23 = vld [vmem:[%s1] sm:$0x1]
  %v24 = vld [vmem:[%s2] sm:$0x1]
  %vm25 = vcmask 261120
  %v26 = vsel %vm25, %v21, 0.0
  %27 = vadd.xlane.f32.xlu0 %v26
  %v28 = vpop.xlane.xlu0 %27
  %vm29 = vcmask 259072
  %v30 = vsel %vm29, %v22, 0.0
  %31 = vadd.xlane.f32.xlu0 %v30
  %v32 = vpop.xlane.xlu0 %31
  %v33 = vrcp.pop 32.0
  %v34 = vmul.f32 32.0, %v33
  %v35 = vsub.f32 1.0, %v34
  %v36 = vmul.f32 %v33, %v35
  %v37 = vadd.f32 %v33, %v36
  %vm38 = vweird.f32 %v33
  %v39 = vsel %vm38, %v33, %v37
  %v40 = vmul.f32 %v28, %v39
  %v41 = vmul.f32 %v32, %v39
  %v42 = vsub.f32 %v21, %v40
  %v43 = vsub.f32 %v22, %v41
  %v44 = vmul.f32 %v42, %v42
  %v45 = vmul.f32 %v43, %v43
  %v46 = vsel %vm25, %v44, 0.0
  %47 = vadd.xlane.f32.xlu0 %v46
  %v48 = vpop.xlane.xlu0 %47
  %v49 = vsel %vm29, %v45, 0.0
  %50 = vadd.xlane.f32.xlu0 %v49
  %v51 = vpop.xlane.xlu0 %50
  %v52 = vmul.f32 %v48, %v39
  %v53 = vmul.f32 %v51, %v39
  %v54 = vadd.f32 %v52, 1e-05
  %v55 = vadd.f32 %v53, 1e-05
  %v56 = vrsqrt.pop %v54
  %v57 = vmul.f32 %v56, %v54
  %v58 = vmul.f32 %v57, %v56
  %v59 = vmul.f32 0.5, %v58
  %v60 = vsub.f32 1.5, %v59
  %v61 = vmul.f32 %v56, %v60
  %vm62 = vweird.f32 %v54
  %vm63 = vweird.f32 %v56
  %vm64 = vmor %vm62, %vm63
  %v65 = vsel %vm64, %v56, %v61
  %v66 = vrsqrt.pop %v55
  %v67 = vmul.f32 %v66, %v55
  %v68 = vmul.f32 %v67, %v66
  %v69 = vmul.f32 0.5, %v68
  %v70 = vsub.f32 1.5, %v69
  %v71 = vmul.f32 %v66, %v70
  %vm72 = vweird.f32 %v55
  %vm73 = vweird.f32 %v66
  %vm74 = vmor %vm72, %vm73
  %v75 = vsel %vm74, %v66, %v71
  %v76 = vmul.f32 %v42, %v65
  %v77 = vmul.f32 %v43, %v75
  %v79 = vperm.slane %v23, 0
  %v81 = vmul.f32 %v76, %v79
  %v82 = vmul.f32 %v77, %v79
  %v84 = vperm.slane %v24, 0
  %v86 = vadd.f32 %v81, %v84
  %v87 = vadd.f32 %v82, %v84
  %v88 = vld [vmem:[%s3] sm:$0xf]
  %v89 = vld [vmem:[%s3 + $0x4] sm:$0xf]
  %v90 = vld [vmem:[%s3 + $0x8] sm:$0xf]
  %v91 = vld [vmem:[%s3 + $0xc] sm:$0xf]
  %v92 = vld [vmem:[%s4] sm:$0x1]
  %v93 = vpack.c.bf16 %v87, %v86
  %v95 = vperm.slane %v92, 0
  %v101 = vunpack.c.l.b16 %v88
  %v102 = vunpack.c.l.b16 %v89
  %v103 = vunpack.c.l.b16 %v90
  %v104 = vunpack.c.l.b16 %v91
  %v105 = vpack.c.b16 %v102, %v101
  %v106 = vpack.c.b16 %v104, %v103
  %v110 = vsel %vm25, %v93, 0
  %112 = vmatpush.bf16.msra.mxu0 0
  %113 = vmatpush.bf16.msra.mxu0 0
  %114 = vmatpush.bf16.msra.mxu0 0
  %115 = vmatpush.bf16.msra.mxu0 0
  %116 = vmatpush.bf16.msra.mxu0 0
  %117 = vmatpush.bf16.msra.mxu0 0
  %118 = vmatpush.bf16.msra.mxu0 %v106
  %119 = vmatpush.bf16.msra.mxu0 %v105
  %120 = vmatmul.bf16.gmra.mxu0 %v110
  %v121 = vpop.f32.mrf.mxu0
  %v122 = vadd.f32 %v95, %v121
  %v123 = vpop.f32.mrf.mxu0
  %v124 = vadd.f32 %v95, %v123
  %125 = vdwg.mxu0
  %vm126 = vcmask 785408
  %127 = vst.msk [vmem:[%s5] sm:$0xff] %vm126, %v122
  %vm128 = vcmask 783360
  %129 = vst.msk [vmem:[%s5 + $0x8] sm:$0x3f] %vm128, %v124
  // Predicated region
  $region22: #{_lambda_.22} parent=0 // pred_check
    _
  $region23: #{_lambda_.22} parent=0 // pred_check_branch
    %131 = sbr.rel (0) target = $region25
  $region24: #{_lambda_.22} parent=0 // pred_region
    _
  $region25: #{_lambda_.22} parent=0 // pred_fallthru
    _
  // Predicated region
  $region26: #{_lambda_.22} parent=0 // pred_check
    _
  $region27: #{_lambda_.22} parent=0 // pred_check_branch
    %133 = sbr.rel (0) target = $region29
  $region28: #{_lambda_.22} parent=0 // pred_region
    _
  $region29: #{_lambda_.22} parent=0 // pred_fallthru
    _

// kernel: _lambda_.24
$region0: #{_lambda_.24}
  #allocation0 [shape = 'u32[]', space=smem, size = 0x4, offset = 0x4, fixed_abs, tag = 'smem constant byte address 0x4 - core index']
  #allocation1 [shape = 'u32[72,128]{1,0:T(1,128)}', space=vmem, size = 0x9000, scoped, tag = 'internal scratch']
  %s0 = inlined_call_operand.vmem [shape: f32[14,32], index: 0, kind: input, shape index: {}]
  %s1 = inlined_call_operand.vmem [shape: bf16[32,32], index: 1, kind: input, shape index: {}]
  %s2 = inlined_call_operand.vmem [shape: f32[1,32], index: 2, kind: input, shape index: {}]
  %s3 = inlined_call_operand.vmem [shape: f32[14,32], index: 3, kind: input, shape index: {}]
  %s4 = inlined_call_operand.vmem [shape: f32[14,32], index: 4, kind: output, shape index: {}]
  %s5 = sld [smem:[#allocation0]]
  $region26: #{_lambda_.24} parent=0
    _
  %s7 = ssub.s32 1, %s5
  %s8 = scalar_select 0, %s7, %s5
  // Predicated region
  $region2: #{_lambda_.24} parent=0 // pred_check
    _
  $region3: #{_lambda_.24} parent=0 // pred_check_branch
    %10 = sbr.rel (0) target = $region5
  $region4: #{_lambda_.24} parent=0 // pred_region
    _
  $region5: #{_lambda_.24} parent=0 // pred_fallthru
    _
  // Predicated region
  $region6: #{_lambda_.24} parent=0 // pred_check
    _
  $region7: #{_lambda_.24} parent=0 // pred_check_branch
    %12 = sbr.rel (0) target = $region9
  $region8: #{_lambda_.24} parent=0 // pred_region
    _
  $region9: #{_lambda_.24} parent=0 // pred_fallthru
    _
  // Predicated region
  $region10: #{_lambda_.24} parent=0 // pred_check
    _
  $region11: #{_lambda_.24} parent=0 // pred_check_branch
    %14 = sbr.rel (0) target = $region13
  $region12: #{_lambda_.24} parent=0 // pred_region
    _
  $region13: #{_lambda_.24} parent=0 // pred_fallthru
    _
  // Predicated region
  $region14: #{_lambda_.24} parent=0 // pred_check
    _
  $region15: #{_lambda_.24} parent=0 // pred_check_branch
    %16 = sbr.rel (0) target = $region17
  $region16: #{_lambda_.24} parent=0 // pred_region
    _
  $region17: #{_lambda_.24} parent=0 // pred_fallthru
    _
  %v18 = vld [vmem:[%s0] sm:$0xff]
  %v19 = vld [vmem:[%s0 + $0x8] sm:$0x3f]
  %v20 = vld [vmem:[%s1] sm:$0xf]
  %v21 = vld [vmem:[%s1 + $0x4] sm:$0xf]
  %v22 = vld [vmem:[%s1 + $0x8] sm:$0xf]
  %v23 = vld [vmem:[%s1 + $0xc] sm:$0xf]
  %v24 = vld [vmem:[%s2] sm:$0x1]
  %v25 = vpack.c.bf16 %v19, %v18
  %v27 = vperm.slane %v24, 0
  %v33 = vunpack.c.l.b16 %v20
  %v34 = vunpack.c.l.b16 %v21
  %v35 = vunpack.c.l.b16 %v22
  %v36 = vunpack.c.l.b16 %v23
  %v37 = vpack.c.b16 %v34, %v33
  %v38 = vpack.c.b16 %v36, %v35
  %vm41 = vcmask 261120
  %v43 = vsel %vm41, %v25, 0
  %45 = vmatpush.bf16.msra.mxu0 0
  %46 = vmatpush.bf16.msra.mxu0 0
  %47 = vmatpush.bf16.msra.mxu0 0
  %48 = vmatpush.bf16.msra.mxu0 0
  %49 = vmatpush.bf16.msra.mxu0 0
  %50 = vmatpush.bf16.msra.mxu0 0
  %51 = vmatpush.bf16.msra.mxu0 %v38
  %52 = vmatpush.bf16.msra.mxu0 %v37
  %53 = vmatmul.bf16.gmra.mxu0 %v43
  %v54 = vpop.f32.mrf.mxu0
  %v55 = vadd.f32 %v27, %v54
  %v56 = vpop.f32.mrf.mxu0
  %v57 = vadd.f32 %v27, %v56
  %58 = vdwg.mxu0
  %v59 = vld [vmem:[%s3] sm:$0xff]
  %v60 = vld [vmem:[%s3 + $0x8] sm:$0x3f]
  %v61 = vadd.f32 %v55, %v59
  %v62 = vadd.f32 %v57, %v60
  %63 = vst.msk [vmem:[%s4] sm:$0xff] %vm41, %v61
  %vm64 = vcmask 259072
  %65 = vst.msk [vmem:[%s4 + $0x8] sm:$0x3f] %vm64, %v62
  // Predicated region
  $region18: #{_lambda_.24} parent=0 // pred_check
    _
  $region19: #{_lambda_.24} parent=0 // pred_check_branch
    %67 = sbr.rel (0) target = $region21
  $region20: #{_lambda_.24} parent=0 // pred_region
    _
  $region21: #{_lambda_.24} parent=0 // pred_fallthru
    _
  // Predicated region
  $region22: #{_lambda_.24} parent=0 // pred_check
    _
  $region23: #{_lambda_.24} parent=0 // pred_check_branch
    %69 = sbr.rel (0) target = $region25
  $region24: #{_lambda_.24} parent=0 // pred_region
    _
  $region25: #{_lambda_.24} parent=0 // pred_fallthru
    _

// kernel: _lambda_.23
$region0: #{_lambda_.23}
  #allocation0 [shape = 'u32[]', space=smem, size = 0x4, offset = 0x4, fixed_abs, tag = 'smem constant byte address 0x4 - core index']
  #allocation1 [shape = 'u32[72,128]{1,0:T(1,128)}', space=vmem, size = 0x9000, scoped, tag = 'internal scratch']
  %s0 = inlined_call_operand.vmem [shape: f32[2,7,96], index: 0, kind: input, shape index: {}]
  %s1 = inlined_call_operand.vmem [shape: f32[2,1,7], index: 1, kind: input, shape index: {}]
  %s2 = inlined_call_operand.vmem [shape: f32[2,7,32], index: 2, kind: output, shape index: {}]
  %s3 = sld [smem:[#allocation0]]
  $region41: #{_lambda_.23} parent=0
    _
  %s5 = ssub.s32 1, %s3
  %s6 = scalar_select 0, %s5, %s3
  loop: start=0, step=1, limit=4
  $region2: #{_lambda_.23} parent=0 // loop_pre_header
    _
  $region3: #{_lambda_.23} parent=0 // loop_header
    %s8 = sphi 0, %s12
    %p9 = scmp.ge.s32.totalorder %s8, 4
    %s18 = sphi 0, %s20
    %s21 = sphi 0, %s18
    %s22 = sphi 0, %s21
    %s38 = sphi 0, %s22
    %s44 = sphi 0, %s46
    %s47 = sphi 0, %s44
    %s48 = sphi 0, %s47
    %s64 = sphi 0, %s48
    %s70 = sphi 0, %s72
    %s73 = sphi 0, %s70
    %s74 = sphi 0, %s73
    %s90 = sphi 0, %s74
  $region4: #{_lambda_.23} parent=0 // loop_header_branch
    %11 = sbr.rel (%p9) target = $region8
  $region5: #{_lambda_.23} parent=0 // loop_body
    %s13 = ssub.s32 %s8, 1
    %s14 = ssub.s32 %s8, 2
    %s15 = sadd.s32 %s8, 1
    %s16 = ssub.s32 %s8, %s15
    %p17 = scmp.eq.s32.totalorder %s16, 0
    %s19 = sadd.s32 %s18, 1
    %s20 = scalar_select %p17, %s18, %s19
    %p23 = pneg %p17
    %p24 = scmp.eq.s32.totalorder %s8, 1
    %p25 = por %p23, %p24
    %p26 = scmp.ne.s32.totalorder %s18, %s21
    %p27 = scmp.eq.s32.totalorder %s8, 0
    %p28 = por %p26, %p27
    %p29 = scmp.ne.s32.totalorder %s18, %s21
    %p30 = scmp.eq.s32.totalorder %s13, 1
    %p31 = por %p29, %p30
    %p32 = scmp.ne.s32.totalorder %s21, %s22
    %p33 = scmp.eq.s32.totalorder %s13, 0
    %p34 = por %p32, %p33
    %p35 = scmp.ne.s32.totalorder %s21, %s22
    %p36 = scmp.eq.s32.totalorder %s14, 1
    %p37 = por %p35, %p36
    %p39 = scmp.ne.s32.totalorder %s22, %s38
    %p40 = scmp.eq.s32.totalorder %s14, 0
    %p41 = por %p39, %p40
    %s42 = ssub.s32 %s8, %s15
    %p43 = scmp.eq.s32.totalorder %s42, 0
    %s45 = sadd.s32 %s44, 1
    %s46 = scalar_select %p43, %s44, %s45
    %p49 = pneg %p43
    %p50 = scmp.eq.s32.totalorder %s8, 1
    %p51 = por %p49, %p50
    %p52 = scmp.ne.s32.totalorder %s44, %s47
    %p53 = scmp.eq.s32.totalorder %s8, 0
    %p54 = por %p52, %p53
    %p55 = scmp.ne.s32.totalorder %s44, %s47
    %p56 = scmp.eq.s32.totalorder %s13, 1
    %p57 = por %p55, %p56
    %p58 = scmp.ne.s32.totalorder %s47, %s48
    %p59 = scmp.eq.s32.totalorder %s13, 0
    %p60 = por %p58, %p59
    %p61 = scmp.ne.s32.totalorder %s47, %s48
    %p62 = scmp.eq.s32.totalorder %s14, 1
    %p63 = por %p61, %p62
    %p65 = scmp.ne.s32.totalorder %s48, %s64
    %p66 = scmp.eq.s32.totalorder %s14, 0
    %p67 = por %p65, %p66
    %s68 = ssub.s32 %s8, %s15
    %p69 = scmp.eq.s32.totalorder %s68, 0
    %s71 = sadd.s32 %s70, 1
    %s72 = scalar_select %p69, %s70, %s71
    %p75 = pneg %p69
    %p76 = scmp.eq.s32.totalorder %s8, 1
    %p77 = por %p75, %p76
    %p78 = scmp.ne.s32.totalorder %s70, %s73
    %p79 = scmp.eq.s32.totalorder %s8, 0
    %p80 = por %p78, %p79
    %p81 = scmp.ne.s32.totalorder %s70, %s73
    %p82 = scmp.eq.s32.totalorder %s13, 1
    %p83 = por %p81, %p82
    %p84 = scmp.ne.s32.totalorder %s73, %s74
    %p85 = scmp.eq.s32.totalorder %s13, 0
    %p86 = por %p84, %p85
    %p87 = scmp.ne.s32.totalorder %s73, %s74
    %p88 = scmp.eq.s32.totalorder %s14, 1
    %p89 = por %p87, %p88
    %p91 = scmp.ne.s32.totalorder %s74, %s90
    %p92 = scmp.eq.s32.totalorder %s14, 0
    %p93 = por %p91, %p92
    %p94 = scmp.le.s32.totalorder 1, %s8
    %p95 = scmp.lt.s32.totalorder %s8, 3
    %p96 = pnand %p94, %p95
    %p97 = pneg %p96
    // Predicated region
    $region9: #{_lambda_.23} parent=5 // pred_check
      _
    $region10: #{_lambda_.23} parent=5 // pred_check_branch
      %99 = sbr.rel (%p96) target = $region12
    $region11: #{_lambda_.23} parent=5 // pred_region
      %s100 = ssub.s32 %s8, 1
    $region12: #{_lambda_.23} parent=5 // pred_fallthru
      _
    %p101 = scmp.lt.s32.totalorder %s8, 2
    // Predicated region
    $region13: #{_lambda_.23} parent=5 // pred_check
      %p102 = pneg %p101
    $region14: #{_lambda_.23} parent=5 // pred_check_branch
      %104 = sbr.rel (%p102) target = $region16
    $region15: #{_lambda_.23} parent=5 // pred_region
      // Predicated region
      $region17: #{_lambda_.23} parent=15 // pred_check
        %p105 = pneg %p28
      $region18: #{_lambda_.23} parent=15 // pred_check_branch
        %107 = sbr.rel (%p105) target = $region20
      $region19: #{_lambda_.23} parent=15 // pred_region
        %p108 = scmp.lt.s32.totalorder %s8, 1
        %s109 = scalar_select %p108, %s8, 1
        %s110 = smul.addr %s109, 8
        %s111 = scalar_lea.vmem %s0, %s110
      $region20: #{_lambda_.23} parent=15 // pred_fallthru
        _
      // Predicated region
      $region21: #{_lambda_.23} parent=15 // pred_check
        %p112 = pneg %p54
      $region22: #{_lambda_.23} parent=15 // pred_check_branch
        %114 = sbr.rel (%p112) target = $region24
      $region23: #{_lambda_.23} parent=15 // pred_region
        %p115 = scmp.lt.s32.totalorder %s8, 1
        %s116 = scalar_select %p115, %s8, 1
        %s117 = scalar_lea.vmem %s1, %s116
      $region24: #{_lambda_.23} parent=15 // pred_fallthru
        _
    $region16: #{_lambda_.23} parent=5 // pred_fallthru
      _
    %p118 = scmp.le.s32.totalorder 1, %s8
    %p119 = scmp.lt.s32.totalorder %s8, 3
    %p120 = pnand %p118, %p119
    %p121 = pneg %p120
    // Predicated region
    $region25: #{_lambda_.23} parent=5 // pred_check
      _
    $region26: #{_lambda_.23} parent=5 // pred_check_branch
      %123 = sbr.rel (%p120) target = $region28
    $region27: #{_lambda_.23} parent=5 // pred_region
      %s124 = ssub.s32 %s8, 1
      %p125 = scmp.lt.s32.totalorder %s13, 1
      %s126 = scalar_select %p125, %s13, 1
      %s127 = smul.addr %s126, 8
      %s128 = scalar_lea.vmem %s0, %s127
      %p129 = pneg %p34
      %p130 = pneg %p31
      %p131 = scmp.lt.s32.totalorder %s13, 1
      %s132 = scalar_select %p131, %s13, 1
      %s133 = scalar_lea.vmem %s1, %s132
      %p134 = pneg %p60
      %p135 = pneg %p57
      %p136 = pneg %p86
      %p137 = pneg %p83
      %p138 = scmp.lt.s32.totalorder %s13, 1
      %s139 = scalar_select %p138, %s13, 1
      %s140 = smul.addr %s139, 8
      %s141 = scalar_lea.vmem %s2, %s140
      %p142 = scmp.lt.s32.totalorder %s13, 1
      %s143 = scalar_select %p142, %s13, 1
      %s144 = smul.addr %s143, 8
      %s145 = scalar_lea.vmem %s0, %s144
      %p146 = scmp.lt.s32.totalorder %s13, 1
      %s147 = scalar_select %p146, %s13, 1
      %s148 = scalar_lea.vmem %s1, %s147
      %p149 = scmp.lt.s32.totalorder %s13, 1
      %s150 = scalar_select %p149, %s13, 1
      %s151 = smul.addr %s150, 8
      %s152 = scalar_lea.vmem %s2, %s151
      %v154 = vld [vmem:[%s145] sm:$0x7f]
      %v155 = vld [vmem:[%s148] sm:$0x1]
      %v156 = vpack.c.bf16 %v154, %v154
      %158 = vrot.lane.b32.xlu0 %v156, 96
      %v159 = vpop.permute.xlu0 %158
      %vm160 = vcmask 64512
      %v162 = vsel %vm160, %v156, 0
      %v165 = vsel %vm160, %v159, 0
      %167 = vmatpush.bf16.xpose.msra.mxu0 0
      %168 = vmatpush.bf16.xpose.msra.mxu0 0
      %169 = vmatpush.bf16.xpose.msra.mxu0 0
      %170 = vmatpush.bf16.xpose.msra.mxu0 0
      %171 = vmatpush.bf16.xpose.msra.mxu0 0
      %172 = vmatpush.bf16.xpose.msra.mxu0 0
      %173 = vmatpush.bf16.xpose.msra.mxu0 0
      %174 = vmatpush.bf16.xpose.msra.mxu0 %v165
      %175 = vmatmul.bf16.gmra.mxu0 %v162
      %v176 = vpop.f32.mrf.mxu0
      %v177 = vadd.f32 0.0, %v176
      %v178 = vpop.f32.mrf.mxu0
      %179 = vdwg.mxu0
      %v180 = vmul.f32 %v177, 0.35355338
      %v182 = vperm.slane %v155, 0
      %v184 = vadd.f32 %v180, %v182
      %vm185 = vcmask 55296
      %v186 = vsel %vm185, %v184, -inf
      %187 = vmax.xlane.f32.xlu0 %v186
      %v188 = vpop.xlane.xlu0 %187
      %v189 = vsub.f32 %v184, %v188
      %v190 = vmul.f32 %v189, 1.442695
      %v191 = vpow.pop %v190
      %v192 = vsel %vm185, %v191, 0.0
      %193 = vadd.xlane.f32.xlu0 %v192
      %v194 = vpop.xlane.xlu0 %193
      %v195 = vrcp.pop %v194
      %v196 = vmul.f32 %v191, %v195
      %v197 = vpack.c.bf16 %v196, %v196
      %198 = vrot.lane.b32.xlu0 %v156, 64
      %v199 = vpop.permute.xlu0 %198
      %vm200 = vcmask 56320
      %v202 = vsel %vm200, %v197, 0
      %vm204 = vcmask 1042432
      %vm205 = vcmask 1043456
      %v206 = vsel %vm204, 4294967295, 65535
      %v207 = vsel %vm205, %v206, 0
      %v209 = vand.u32 %v199, %v207
      %211 = vmatpush.bf16.msra.mxu0 0
      %212 = vmatpush.bf16.msra.mxu0 0
      %213 = vmatpush.bf16.msra.mxu0 0
      %214 = vmatpush.bf16.msra.mxu0 0
      %215 = vmatpush.bf16.msra.mxu0 0
      %216 = vmatpush.bf16.msra.mxu0 0
      %217 = vmatpush.bf16.msra.mxu0 0
      %218 = vmatpush.bf16.msra.mxu0 %v209
      %219 = vmatmul.bf16.gmra.mxu0 %v202
      %v220 = vpop.f32.mrf.mxu0
      %v221 = vadd.f32 0.0, %v220
      %v222 = vpop.f32.mrf.mxu0
      %223 = vdwg.mxu0
      %224 = vrot.lane.b32.xlu0 %v156, 120
      %v225 = vpop.permute.xlu0 %224
      %226 = vrot.lane.b32.xlu0 %v156, 88
      %v227 = vpop.permute.xlu0 %226
      %v229 = vsel %vm160, %v225, 0
      %v232 = vsel %vm160, %v227, 0
      %234 = vmatpush.bf16.xpose.msra.mxu0 0
      %235 = vmatpush.bf16.xpose.msra.mxu0 0
      %236 = vmatpush.bf16.xpose.msra.mxu0 0
      %237 = vmatpush.bf16.xpose.msra.mxu0 0
      %238 = vmatpush.bf16.xpose.msra.mxu0 0
      %239 = vmatpush.bf16.xpose.msra.mxu0 0
      %240 = vmatpush.bf16.xpose.msra.mxu0 0
      %241 = vmatpush.bf16.xpose.msra.mxu0 %v232
      %242 = vmatmul.bf16.gmra.mxu0 %v229
      %v243 = vpop.f32.mrf.mxu0
      %v244 = vadd.f32 0.0, %v243
      %v245 = vpop.f32.mrf.mxu0
      %246 = vdwg.mxu0
      %v247 = vmul.f32 %v244, 0.35355338
      %v248 = vadd.f32 %v247, %v182
      %v249 = vsel %vm185, %v248, -inf
      %250 = vmax.xlane.f32.xlu0 %v249
      %v251 = vpop.xlane.xlu0 %250
      %v252 = vsub.f32 %v248, %v251
      %v253 = vmul.f32 %v252, 1.442695
      %v254 = vpow.pop %v253
      %v255 = vsel %vm185, %v254, 0.0
      %256 = vadd.xlane.f32.xlu0 %v255
      %v257 = vpop.xlane.xlu0 %256
      %v258 = vrcp.pop %v257
      %v259 = vmul.f32 %v254, %v258
      %v260 = vpack.c.bf16 %v259, %v259
      %261 = vrot.lane.b32.xlu0 %v156, 56
      %v262 = vpop.permute.xlu0 %261
      %v264 = vsel %vm200, %v260, 0
      %v267 = vand.u32 %v262, %v207
      %269 = vmatpush.bf16.msra.mxu0 0
      %270 = vmatpush.bf16.msra.mxu0 0
      %271 = vmatpush.bf16.msra.mxu0 0
      %272 = vmatpush.bf16.msra.mxu0 0
      %273 = vmatpush.bf16.msra.mxu0 0
      %274 = vmatpush.bf16.msra.mxu0 0
      %275 = vmatpush.bf16.msra.mxu0 0
      %276 = vmatpush.bf16.msra.mxu0 %v267
      %277 = vmatmul.bf16.gmra.mxu0 %v264
      %v278 = vpop.f32.mrf.mxu0
      %v279 = vadd.f32 0.0, %v278
      %v280 = vpop.f32.mrf.mxu0
      %281 = vdwg.mxu0
      %282 = vrot.lane.b32.xlu0 %v156, 112
      %v283 = vpop.permute.xlu0 %282
      %284 = vrot.lane.b32.xlu0 %v156, 80
      %v285 = vpop.permute.xlu0 %284
      %v287 = vsel %vm160, %v283, 0
      %v290 = vsel %vm160, %v285, 0
      %292 = vmatpush.bf16.xpose.msra.mxu0 0
      %293 = vmatpush.bf16.xpose.msra.mxu0 0
      %294 = vmatpush.bf16.xpose.msra.mxu0 0
      %295 = vmatpush.bf16.xpose.msra.mxu0 0
      %296 = vmatpush.bf16.xpose.msra.mxu0 0
      %297 = vmatpush.bf16.xpose.msra.mxu0 0
      %298 = vmatpush.bf16.xpose.msra.mxu0 0
      %299 = vmatpush.bf16.xpose.msra.mxu0 %v290
      %300 = vmatmul.bf16.gmra.mxu0 %v287
      %v301 = vpop.f32.mrf.mxu0
      %v302 = vadd.f32 0.0, %v301
      %v303 = vpop.f32.mrf.mxu0
      %304 = vdwg.mxu0
      %v305 = vmul.f32 %v302, 0.35355338
      %v306 = vadd.f32 %v305, %v182
      %v307 = vsel %vm185, %v306, -inf
      %308 = vmax.xlane.f32.xlu0 %v307
      %v309 = vpop.xlane.xlu0 %308
      %v310 = vsub.f32 %v306, %v309
      %v311 = vmul.f32 %v310, 1.442695
      %v312 = vpow.pop %v311
      %v313 = vsel %vm185, %v312, 0.0
      %314 = vadd.xlane.f32.xlu0 %v313
      %v315 = vpop.xlane.xlu0 %314
      %v316 = vrcp.pop %v315
      %v317 = vmul.f32 %v312, %v316
      %v318 = vpack.c.bf16 %v317, %v317
      %319 = vrot.lane.b32.xlu0 %v156, 48
      %v320 = vpop.permute.xlu0 %319
      %v322 = vsel %vm200, %v318, 0
      %v325 = vand.u32 %v320, %v207
      %327 = vmatpush.bf16.msra.mxu0 0
      %328 = vmatpush.bf16.msra.mxu0 0
      %329 = vmatpush.bf16.msra.mxu0 0
      %330 = vmatpush.bf16.msra.mxu0 0
      %331 = vmatpush.bf16.msra.mxu0 0
      %332 = vmatpush.bf16.msra.mxu0 0
      %333 = vmatpush.bf16.msra.mxu0 0
      %334 = vmatpush.bf16.msra.mxu0 %v325
      %335 = vmatmul.bf16.gmra.mxu0 %v322
      %v336 = vpop.f32.mrf.mxu0
      %v337 = vadd.f32 0.0, %v336
      %v338 = vpop.f32.mrf.mxu0
      %339 = vdwg.mxu0
      %340 = vrot.lane.b32.xlu0 %v156, 104
      %v341 = vpop.permute.xlu0 %340
      %342 = vrot.lane.b32.xlu0 %v156, 72
      %v343 = vpop.permute.xlu0 %342
      %v345 = vsel %vm160, %v341, 0
      %v348 = vsel %vm160, %v343, 0
      %350 = vmatpush.bf16.xpose.msra.mxu0 0
      %351 = vmatpush.bf16.xpose.msra.mxu0 0
      %352 = vmatpush.bf16.xpose.msra.mxu0 0
      %353 = vmatpush.bf16.xpose.msra.mxu0 0
      %354 = vmatpush.bf16.xpose.msra.mxu0 0
      %355 = vmatpush.bf16.xpose.msra.mxu0 0
      %356 = vmatpush.bf16.xpose.msra.mxu0 0
      %357 = vmatpush.bf16.xpose.msra.mxu0 %v348
      %358 = vmatmul.bf16.gmra.mxu0 %v345
      %v359 = vpop.f32.mrf.mxu0
      %v360 = vadd.f32 0.0, %v359
      %v361 = vpop.f32.mrf.mxu0
      %362 = vdwg.mxu0
      %v363 = vmul.f32 %v360, 0.35355338
      %v364 = vadd.f32 %v363, %v182
      %v365 = vsel %vm185, %v364, -inf
      %366 = vmax.xlane.f32.xlu0 %v365
      %v367 = vpop.xlane.xlu0 %366
      %v368 = vsub.f32 %v364, %v367
      %v369 = vmul.f32 %v368, 1.442695
      %v370 = vpow.pop %v369
      %v371 = vsel %vm185, %v370, 0.0
      %372 = vadd.xlane.f32.xlu0 %v371
      %v373 = vpop.xlane.xlu0 %372
      %v374 = vrcp.pop %v373
      %v375 = vmul.f32 %v370, %v374
      %v376 = vpack.c.bf16 %v375, %v375
      %377 = vrot.lane.b32.xlu0 %v156, 40
      %v378 = vpop.permute.xlu0 %377
      %v380 = vsel %vm200, %v376, 0
      %v383 = vand.u32 %v378, %v207
      %385 = vmatpush.bf16.msra.mxu0 0
      %386 = vmatpush.bf16.msra.mxu0 0
      %387 = vmatpush.bf16.msra.mxu0 0
      %388 = vmatpush.bf16.msra.mxu0 0
      %389 = vmatpush.bf16.msra.mxu0 0
      %390 = vmatpush.bf16.msra.mxu0 0
      %391 = vmatpush.bf16.msra.mxu0 0
      %392 = vmatpush.bf16.msra.mxu0 %v383
      %393 = vmatmul.bf16.gmra.mxu0 %v380
      %v394 = vpop.f32.mrf.mxu0
      %v395 = vadd.f32 0.0, %v394
      %v396 = vpop.f32.mrf.mxu0
      %397 = vdwg.mxu0
      %399 = vrot.lane.b32.xlu0 %v279, 8
      %v400 = vpop.permute.xlu0 %399
      %403 = vrot.lane.b32.xlu0 %v337, 16
      %v404 = vpop.permute.xlu0 %403
      %407 = vrot.lane.b32.xlu0 %v395, 24
      %v408 = vpop.permute.xlu0 %407
      %v410 = vsel %vm160, %v221, %v400
      %vm411 = vcmask 130048
      %v412 = vsel %vm411, %v410, %v404
      %vm413 = vcmask 195584
      %v414 = vsel %vm413, %v412, %v408
      %vm415 = vcmask 260096
      %416 = vst.msk [vmem:[%s152] sm:$0x7f] %vm415, %v414
      %p417 = scmp.lt.s32.totalorder %s13, 1
      %s418 = scalar_select %p417, %s13, 1
      %s419 = smul.addr %s418, 8
      %s420 = scalar_lea.vmem %s2, %s419
      // Predicated region
      $region29: #{_lambda_.23} parent=27 // pred_check
        %p421 = pneg %p83
      $region30: #{_lambda_.23} parent=27 // pred_check_branch
        %423 = sbr.rel (%p421) target = $region32
      $region31: #{_lambda_.23} parent=27 // pred_region
        _
      $region32: #{_lambda_.23} parent=27 // pred_fallthru
        _
    $region28: #{_lambda_.23} parent=5 // pred_fallthru
      _
    %p424 = scmp.le.s32.totalorder 2, %s8
    // Predicated region
    $region33: #{_lambda_.23} parent=5 // pred_check
      %p425 = pneg %p424
    $region34: #{_lambda_.23} parent=5 // pred_check_branch
      %427 = sbr.rel (%p425) target = $region36
    $region35: #{_lambda_.23} parent=5 // pred_region
      %s428 = ssub.s32 %s8, 2
      // Predicated region
      $region37: #{_lambda_.23} parent=35 // pred_check
        %p429 = pneg %p89
      $region38: #{_lambda_.23} parent=35 // pred_check_branch
        %431 = sbr.rel (%p429) target = $region40
      $region39: #{_lambda_.23} parent=35 // pred_region
        %p432 = scmp.lt.s32.totalorder %s14, 1
        %s433 = scalar_select %p432, %s14, 1
        %s434 = smul.addr %s433, 8
        %s435 = scalar_lea.vmem %s2, %s434
      $region40: #{_lambda_.23} parent=35 // pred_fallthru
        _
    $region36: #{_lambda_.23} parent=5 // pred_fallthru
      _
  $region6: #{_lambda_.23} parent=0 // loop_footer
    %s12 = sadd.s32 1, %s8
  $region7: #{_lambda_.23} parent=0 // loop_footer_branch
    %7 = sbr.rel target = $region3
  $region8: #{_lambda_.23} parent=0 // loop_exit
    _

// kernel: _lambda_.25
$region0: #{_lambda_.25}
  #allocation0 [shape = 'u32[]', space=smem, size = 0x4, offset = 0x4, fixed_abs, tag = 'smem constant byte address 0x4 - core index']
  #allocation1 [shape = 'u32[72,128]{1,0:T(1,128)}', space=vmem, size = 0x9000, scoped, tag = 'internal scratch']
  %s0 = inlined_call_operand.vmem [shape: f32[14,32], index: 0, kind: input, shape index: {}]
  %s1 = inlined_call_operand.vmem [shape: f32[1,32], index: 1, kind: input, shape index: {}]
  %s2 = inlined_call_operand.vmem [shape: f32[1,32], index: 2, kind: input, shape index: {}]
  %s3 = inlined_call_operand.vmem [shape: bf16[32,32], index: 3, kind: input, shape index: {}]
  %s4 = inlined_call_operand.vmem [shape: f32[1,32], index: 4, kind: input, shape index: {}]
  %s5 = inlined_call_operand.vmem [shape: bf16[32,32], index: 5, kind: input, shape index: {}]
  %s6 = inlined_call_operand.vmem [shape: f32[1,32], index: 6, kind: input, shape index: {}]
  %s7 = inlined_call_operand.vmem [shape: f32[14,32], index: 7, kind: output, shape index: {}]
  %s8 = sld [smem:[#allocation0]]
  $region38: #{_lambda_.25} parent=0
    _
  %s10 = ssub.s32 1, %s8
  %s11 = scalar_select 0, %s10, %s8
  // Predicated region
  $region2: #{_lambda_.25} parent=0 // pred_check
    _
  $region3: #{_lambda_.25} parent=0 // pred_check_branch
    %13 = sbr.rel (0) target = $region5
  $region4: #{_lambda_.25} parent=0 // pred_region
    _
  $region5: #{_lambda_.25} parent=0 // pred_fallthru
    _
  // Predicated region
  $region6: #{_lambda_.25} parent=0 // pred_check
    _
  $region7: #{_lambda_.25} parent=0 // pred_check_branch
    %15 = sbr.rel (0) target = $region9
  $region8: #{_lambda_.25} parent=0 // pred_region
    _
  $region9: #{_lambda_.25} parent=0 // pred_fallthru
    _
  // Predicated region
  $region10: #{_lambda_.25} parent=0 // pred_check
    _
  $region11: #{_lambda_.25} parent=0 // pred_check_branch
    %17 = sbr.rel (0) target = $region13
  $region12: #{_lambda_.25} parent=0 // pred_region
    _
  $region13: #{_lambda_.25} parent=0 // pred_fallthru
    _
  // Predicated region
  $region14: #{_lambda_.25} parent=0 // pred_check
    _
  $region15: #{_lambda_.25} parent=0 // pred_check_branch
    %19 = sbr.rel (0) target = $region17
  $region16: #{_lambda_.25} parent=0 // pred_region
    _
  $region17: #{_lambda_.25} parent=0 // pred_fallthru
    _
  // Predicated region
  $region18: #{_lambda_.25} parent=0 // pred_check
    _
  $region19: #{_lambda_.25} parent=0 // pred_check_branch
    %21 = sbr.rel (0) target = $region21
  $region20: #{_lambda_.25} parent=0 // pred_region
    _
  $region21: #{_lambda_.25} parent=0 // pred_fallthru
    _
  // Predicated region
  $region22: #{_lambda_.25} parent=0 // pred_check
    _
  $region23: #{_lambda_.25} parent=0 // pred_check_branch
    %23 = sbr.rel (0) target = $region25
  $region24: #{_lambda_.25} parent=0 // pred_region
    _
  $region25: #{_lambda_.25} parent=0 // pred_fallthru
    _
  // Predicated region
  $region26: #{_lambda_.25} parent=0 // pred_check
    _
  $region27: #{_lambda_.25} parent=0 // pred_check_branch
    %25 = sbr.rel (0) target = $region29
  $region28: #{_lambda_.25} parent=0 // pred_region
    _
  $region29: #{_lambda_.25} parent=0 // pred_fallthru
    _
  %v27 = vld [vmem:[%s0] sm:$0xff]
  %v28 = vld [vmem:[%s0 + $0x8] sm:$0x3f]
  %v29 = vld [vmem:[%s1] sm:$0x1]
  %v30 = vld [vmem:[%s2] sm:$0x1]
  %vm31 = vcmask 261120
  %v32 = vsel %vm31, %v27, 0.0
  %33 = vadd.xlane.f32.xlu0 %v32
  %v34 = vpop.xlane.xlu0 %33
  %vm35 = vcmask 259072
  %v36 = vsel %vm35, %v28, 0.0
  %37 = vadd.xlane.f32.xlu0 %v36
  %v38 = vpop.xlane.xlu0 %37
  %v39 = vrcp.pop 32.0
  %v40 = vmul.f32 32.0, %v39
  %v41 = vsub.f32 1.0, %v40
  %v42 = vmul.f32 %v39, %v41
  %v43 = vadd.f32 %v39, %v42
  %vm44 = vweird.f32 %v39
  %v45 = vsel %vm44, %v39, %v43
  %v46 = vmul.f32 %v34, %v45
  %v47 = vmul.f32 %v38, %v45
  %v48 = vsub.f32 %v27, %v46
  %v49 = vsub.f32 %v28, %v47
  %v50 = vmul.f32 %v48, %v48
  %v51 = vmul.f32 %v49, %v49
  %v52 = vsel %vm31, %v50, 0.0
  %53 = vadd.xlane.f32.xlu0 %v52
  %v54 = vpop.xlane.xlu0 %53
  %v55 = vsel %vm35, %v51, 0.0
  %56 = vadd.xlane.f32.xlu0 %v55
  %v57 = vpop.xlane.xlu0 %56
  %v58 = vmul.f32 %v54, %v45
  %v59 = vmul.f32 %v57, %v45
  %v60 = vadd.f32 %v58, 1e-05
  %v61 = vadd.f32 %v59, 1e-05
  %v62 = vrsqrt.pop %v60
  %v63 = vmul.f32 %v62, %v60
  %v64 = vmul.f32 %v63, %v62
  %v65 = vmul.f32 0.5, %v64
  %v66 = vsub.f32 1.5, %v65
  %v67 = vmul.f32 %v62, %v66
  %vm68 = vweird.f32 %v60
  %vm69 = vweird.f32 %v62
  %vm70 = vmor %vm68, %vm69
  %v71 = vsel %vm70, %v62, %v67
  %v72 = vrsqrt.pop %v61
  %v73 = vmul.f32 %v72, %v61
  %v74 = vmul.f32 %v73, %v72
  %v75 = vmul.f32 0.5, %v74
  %v76 = vsub.f32 1.5, %v75
  %v77 = vmul.f32 %v72, %v76
  %vm78 = vweird.f32 %v61
  %vm79 = vweird.f32 %v72
  %vm80 = vmor %vm78, %vm79
  %v81 = vsel %vm80, %v72, %v77
  %v82 = vmul.f32 %v48, %v71
  %v83 = vmul.f32 %v49, %v81
  %v85 = vperm.slane %v29, 0
  %v87 = vmul.f32 %v82, %v85
  %v88 = vmul.f32 %v83, %v85
  %v90 = vperm.slane %v30, 0
  %v92 = vadd.f32 %v87, %v90
  %v93 = vadd.f32 %v88, %v90
  %v94 = vpack.c.bf16 %v93, %v92
  %v95 = vld [vmem:[%s3] sm:$0xf]
  %v96 = vld [vmem:[%s3 + $0x4] sm:$0xf]
  %v97 = vld [vmem:[%s3 + $0x8] sm:$0xf]
  %v98 = vld [vmem:[%s3 + $0xc] sm:$0xf]
  %v99 = vld [vmem:[%s4] sm:$0x1]
  %v101 = vperm.slane %v99, 0
  %v107 = vunpack.c.l.b16 %v95
  %v108 = vunpack.c.l.b16 %v96
  %v109 = vunpack.c.l.b16 %v97
  %v110 = vunpack.c.l.b16 %v98
  %v111 = vpack.c.b16 %v108, %v107
  %v112 = vpack.c.b16 %v110, %v109
  %v116 = vsel %vm31, %v94, 0
  %118 = vmatpush.bf16.msra.mxu0 0
  %119 = vmatpush.bf16.msra.mxu0 0
  %120 = vmatpush.bf16.msra.mxu0 0
  %121 = vmatpush.bf16.msra.mxu0 0
  %122 = vmatpush.bf16.msra.mxu0 0
  %123 = vmatpush.bf16.msra.mxu0 0
  %124 = vmatpush.bf16.msra.mxu0 %v112
  %125 = vmatpush.bf16.msra.mxu0 %v111
  %126 = vmatmul.bf16.gmra.mxu0 %v116
  %v127 = vpop.f32.mrf.mxu0
  %v128 = vadd.f32 %v101, %v127
  %v129 = vpop.f32.mrf.mxu0
  %v130 = vadd.f32 %v101, %v129
  %131 = vdwg.mxu0
  %v132 = vld [vmem:[%s5] sm:$0xf]
  %v133 = vld [vmem:[%s5 + $0x4] sm:$0xf]
  %v134 = vld [vmem:[%s5 + $0x8] sm:$0xf]
  %v135 = vld [vmem:[%s5 + $0xc] sm:$0xf]
  %v136 = vld [vmem:[%s6] sm:$0x1]
  %v138 = vperm.slane %v136, 0
  %v144 = vunpack.c.l.b16 %v132
  %v145 = vunpack.c.l.b16 %v133
  %v146 = vunpack.c.l.b16 %v134
  %v147 = vunpack.c.l.b16 %v135
  %v148 = vpack.c.b16 %v145, %v144
  %v149 = vpack.c.b16 %v147, %v146
  %152 = vmatpush.bf16.msra.mxu0 0
  %153 = vmatpush.bf16.msra.mxu0 0
  %154 = vmatpush.bf16.msra.mxu0 0
  %155 = vmatpush.bf16.msra.mxu0 0
  %156 = vmatpush.bf16.msra.mxu0 0
  %157 = vmatpush.bf16.msra.mxu0 0
  %158 = vmatpush.bf16.msra.mxu0 %v149
  %159 = vmatpush.bf16.msra.mxu0 %v148
  %160 = vmatmul.bf16.gmra.mxu0 %v116
  %v161 = vpop.f32.mrf.mxu0
  %v162 = vadd.f32 %v138, %v161
  %v163 = vpop.f32.mrf.mxu0
  %v164 = vadd.f32 %v138, %v163
  %165 = vdwg.mxu0
  %v166 = vxor.u32 %v162, 2147483648
  %v167 = vxor.u32 %v164, 2147483648
  %v168 = vmul.f32 %v166, 1.442695
  %v169 = vpow.pop %v168
  %v170 = vmul.f32 %v167, 1.442695
  %v171 = vpow.pop %v170
  %v172 = vadd.f32 %v169, 1.0
  %v173 = vadd.f32 %v171, 1.0
  %v174 = vrcp.pop %v172
  %v175 = vmul.f32 %v172, %v174
  %v176 = vsub.f32 1.0, %v175
  %v177 = vmul.f32 %v174, %v176
  %v178 = vadd.f32 %v174, %v177
  %vm179 = vweird.f32 %v172
  %vm180 = vweird.f32 %v174
  %vm181 = vmor %vm179, %vm180
  %v182 = vsel %vm181, %v174, %v178
  %v183 = vand.u32 2147483647, %v172
  %vm184 = vcmp.eq.f32.partialorder %v183, 8.507059e+37
  %v185 = vand.u32 %v172, 2147483648
  %v186 = vor.u32 1.1754944e-38, %v185
  %v187 = vsel %vm184, %v186, %v182
  %v188 = vmul.f32 1.0, %v187
  %v189 = vrcp.pop %v173
  %v190 = vmul.f32 %v173, %v189
  %v191 = vsub.f32 1.0, %v190
  %v192 = vmul.f32 %v189, %v191
  %v193 = vadd.f32 %v189, %v192
  %vm194 = vweird.f32 %v173
  %vm195 = vweird.f32 %v189
  %vm196 = vmor %vm194, %vm195
  %v197 = vsel %vm196, %v189, %v193
  %v198 = vand.u32 2147483647, %v173
  %vm199 = vcmp.eq.f32.partialorder %v198, 8.507059e+37
  %v200 = vand.u32 %v173, 2147483648
  %v201 = vor.u32 1.1754944e-38, %v200
  %v202 = vsel %vm199, %v201, %v197
  %v203 = vmul.f32 1.0, %v202
  %v204 = vmul.f32 %v128, %v188
  %v205 = vmul.f32 %v130, %v203
  %206 = vst.msk [vmem:[%s7] sm:$0xff] %vm31, %v204
  %207 = vst.msk [vmem:[%s7 + $0x8] sm:$0x3f] %vm35, %v205
  // Predicated region
  $region30: #{_lambda_.25} parent=0 // pred_check
    _
  $region31: #{_lambda_.25} parent=0 // pred_check_branch
    %209 = sbr.rel (0) target = $region33
  $region32: #{_lambda_.25} parent=0 // pred_region
    _
  $region33: #{_lambda_.25} parent=0 // pred_fallthru
    _
  // Predicated region
  $region34: #{_lambda_.25} parent=0 // pred_check
    _
  $region35: #{_lambda_.25} parent=0 // pred_check_branch
    %211 = sbr.rel (0) target = $region37
  $region36: #{_lambda_.25} parent=0 // pred_region
    _
  $region37: #{_lambda_.25} parent=0 // pred_fallthru
    _

// kernel: _lambda_.26
$region0: #{_lambda_.26}
  #allocation0 [shape = 'u32[]', space=smem, size = 0x4, offset = 0x4, fixed_abs, tag = 'smem constant byte address 0x4 - core index']
  #allocation1 [shape = 'u32[72,128]{1,0:T(1,128)}', space=vmem, size = 0x9000, scoped, tag = 'internal scratch']
  %s0 = inlined_call_operand.vmem [shape: f32[2,13,32], index: 0, kind: input, shape index: {}]
  %s1 = inlined_call_operand.vmem [shape: f32[7,32], index: 1, kind: input, shape index: {}]
  %s2 = inlined_call_operand.vmem [shape: f32[1,32], index: 2, kind: input, shape index: {}]
  %s3 = inlined_call_operand.vmem [shape: f32[1,32], index: 3, kind: input, shape index: {}]
  %s4 = inlined_call_operand.vmem [shape: f32[1,32], index: 4, kind: input, shape index: {}]
  %s5 = inlined_call_operand.vmem [shape: bf16[32,32], index: 5, kind: input, shape index: {}]
  %s6 = inlined_call_operand.vmem [shape: f32[1,32], index: 6, kind: input, shape index: {}]
  %s7 = inlined_call_operand.vmem [shape: f32[2,7,32], index: 7, kind: input, shape index: {}]
  %s8 = inlined_call_operand.vmem [shape: f32[2,7,32], index: 8, kind: output, shape index: {}]
  %s9 = sld [smem:[#allocation0]]
  $region65: #{_lambda_.26} parent=0
    _
  %s11 = ssub.s32 1, %s9
  %s12 = scalar_select 0, %s11, %s9
  loop: start=0, step=1, limit=4
  $region2: #{_lambda_.26} parent=0 // loop_pre_header
    _
  $region3: #{_lambda_.26} parent=0 // loop_header
    %s14 = sphi 0, %s18
    %p15 = scmp.ge.s32.totalorder %s14, 4
    %s24 = sphi 0, %s26
    %s27 = sphi 0, %s24
    %s28 = sphi 0, %s27
    %s44 = sphi 0, %s28
    %s48 = sphi 0, %s48
    %s50 = sphi 0, %s48
    %s51 = sphi 0, %s50
    %s65 = sphi 0, %s51
    %s69 = sphi 0, %s69
    %s71 = sphi 0, %s69
    %s72 = sphi 0, %s71
    %s86 = sphi 0, %s72
    %s90 = sphi 0, %s90
    %s92 = sphi 0, %s90
    %s93 = sphi 0, %s92
    %s107 = sphi 0, %s93
    %s111 = sphi 0, %s111
    %s113 = sphi 0, %s111
    %s114 = sphi 0, %s113
    %s128 = sphi 0, %s114
    %s132 = sphi 0, %s132
    %s134 = sphi 0, %s132
    %s135 = sphi 0, %s134
    %s149 = sphi 0, %s135
    %s153 = sphi 0, %s153
    %s155 = sphi 0, %s153
    %s156 = sphi 0, %s155
    %s170 = sphi 0, %s156
    %s176 = sphi 0, %s178
    %s179 = sphi 0, %s176
    %s180 = sphi 0, %s179
    %s196 = sphi 0, %s180
    %s202 = sphi 0, %s204
    %s205 = sphi 0, %s202
    %s206 = sphi 0, %s205
    %s222 = sphi 0, %s206
  $region4: #{_lambda_.26} parent=0 // loop_header_branch
    %17 = sbr.rel (%p15) target = $region8
  $region5: #{_lambda_.26} parent=0 // loop_body
    %s19 = ssub.s32 %s14, 1
    %s20 = ssub.s32 %s14, 2
    %s21 = sadd.s32 %s14, 1
    %s22 = ssub.s32 %s14, %s21
    %p23 = scmp.eq.s32.totalorder %s22, 0
    %s25 = sadd.s32 %s24, 1
    %s26 = scalar_select %p23, %s24, %s25
    %p29 = pneg %p23
    %p30 = scmp.eq.s32.totalorder %s14, 1
    %p31 = por %p29, %p30
    %p32 = scmp.ne.s32.totalorder %s24, %s27
    %p33 = scmp.eq.s32.totalorder %s14, 0
    %p34 = por %p32, %p33
    %p35 = scmp.ne.s32.totalorder %s24, %s27
    %p36 = scmp.eq.s32.totalorder %s19, 1
    %p37 = por %p35, %p36
    %p38 = scmp.ne.s32.totalorder %s27, %s28
    %p39 = scmp.eq.s32.totalorder %s19, 0
    %p40 = por %p38, %p39
    %p41 = scmp.ne.s32.totalorder %s27, %s28
    %p42 = scmp.eq.s32.totalorder %s20, 1
    %p43 = por %p41, %p42
    %p45 = scmp.ne.s32.totalorder %s28, %s44
    %p46 = scmp.eq.s32.totalorder %s20, 0
    %p47 = por %p45, %p46
    %s49 = sadd.s32 %s48, 1
    %p52 = scmp.eq.s32.totalorder %s14, 1
    %p53 = scmp.ne.s32.totalorder %s48, %s50
    %p54 = scmp.eq.s32.totalorder %s14, 0
    %p55 = por %p53, %p54
    %p56 = scmp.ne.s32.totalorder %s48, %s50
    %p57 = scmp.eq.s32.totalorder %s19, 1
    %p58 = por %p56, %p57
    %p59 = scmp.ne.s32.totalorder %s50, %s51
    %p60 = scmp.eq.s32.totalorder %s19, 0
    %p61 = por %p59, %p60
    %p62 = scmp.ne.s32.totalorder %s50, %s51
    %p63 = scmp.eq.s32.totalorder %s20, 1
    %p64 = por %p62, %p63
    %p66 = scmp.ne.s32.totalorder %s51, %s65
    %p67 = scmp.eq.s32.totalorder %s20, 0
    %p68 = por %p66, %p67
    %s70 = sadd.s32 %s69, 1
    %p73 = scmp.eq.s32.totalorder %s14, 1
    %p74 = scmp.ne.s32.totalorder %s69, %s71
    %p75 = scmp.eq.s32.totalorder %s14, 0
    %p76 = por %p74, %p75
    %p77 = scmp.ne.s32.totalorder %s69, %s71
    %p78 = scmp.eq.s32.totalorder %s19, 1
    %p79 = por %p77, %p78
    %p80 = scmp.ne.s32.totalorder %s71, %s72
    %p81 = scmp.eq.s32.totalorder %s19, 0
    %p82 = por %p80, %p81
    %p83 = scmp.ne.s32.totalorder %s71, %s72
    %p84 = scmp.eq.s32.totalorder %s20, 1
    %p85 = por %p83, %p84
    %p87 = scmp.ne.s32.totalorder %s72, %s86
    %p88 = scmp.eq.s32.totalorder %s20, 0
    %p89 = por %p87, %p88
    %s91 = sadd.s32 %s90, 1
    %p94 = scmp.eq.s32.totalorder %s14, 1
    %p95 = scmp.ne.s32.totalorder %s90, %s92
    %p96 = scmp.eq.s32.totalorder %s14, 0
    %p97 = por %p95, %p96
    %p98 = scmp.ne.s32.totalorder %s90, %s92
    %p99 = scmp.eq.s32.totalorder %s19, 1
    %p100 = por %p98, %p99
    %p101 = scmp.ne.s32.totalorder %s92, %s93
    %p102 = scmp.eq.s32.totalorder %s19, 0
    %p103 = por %p101, %p102
    %p104 = scmp.ne.s32.totalorder %s92, %s93
    %p105 = scmp.eq.s32.totalorder %s20, 1
    %p106 = por %p104, %p105
    %p108 = scmp.ne.s32.totalorder %s93, %s107
    %p109 = scmp.eq.s32.totalorder %s20, 0
    %p110 = por %p108, %p109
    %s112 = sadd.s32 %s111, 1
    %p115 = scmp.eq.s32.totalorder %s14, 1
    %p116 = scmp.ne.s32.totalorder %s111, %s113
    %p117 = scmp.eq.s32.totalorder %s14, 0
    %p118 = por %p116, %p117
    %p119 = scmp.ne.s32.totalorder %s111, %s113
    %p120 = scmp.eq.s32.totalorder %s19, 1
    %p121 = por %p119, %p120
    %p122 = scmp.ne.s32.totalorder %s113, %s114
    %p123 = scmp.eq.s32.totalorder %s19, 0
    %p124 = por %p122, %p123
    %p125 = scmp.ne.s32.totalorder %s113, %s114
    %p126 = scmp.eq.s32.totalorder %s20, 1
    %p127 = por %p125, %p126
    %p129 = scmp.ne.s32.totalorder %s114, %s128
    %p130 = scmp.eq.s32.totalorder %s20, 0
    %p131 = por %p129, %p130
    %s133 = sadd.s32 %s132, 1
    %p136 = scmp.eq.s32.totalorder %s14, 1
    %p137 = scmp.ne.s32.totalorder %s132, %s134
    %p138 = scmp.eq.s32.totalorder %s14, 0
    %p139 = por %p137, %p138
    %p140 = scmp.ne.s32.totalorder %s132, %s134
    %p141 = scmp.eq.s32.totalorder %s19, 1
    %p142 = por %p140, %p141
    %p143 = scmp.ne.s32.totalorder %s134, %s135
    %p144 = scmp.eq.s32.totalorder %s19, 0
    %p145 = por %p143, %p144
    %p146 = scmp.ne.s32.totalorder %s134, %s135
    %p147 = scmp.eq.s32.totalorder %s20, 1
    %p148 = por %p146, %p147
    %p150 = scmp.ne.s32.totalorder %s135, %s149
    %p151 = scmp.eq.s32.totalorder %s20, 0
    %p152 = por %p150, %p151
    %s154 = sadd.s32 %s153, 1
    %p157 = scmp.eq.s32.totalorder %s14, 1
    %p158 = scmp.ne.s32.totalorder %s153, %s155
    %p159 = scmp.eq.s32.totalorder %s14, 0
    %p160 = por %p158, %p159
    %p161 = scmp.ne.s32.totalorder %s153, %s155
    %p162 = scmp.eq.s32.totalorder %s19, 1
    %p163 = por %p161, %p162
    %p164 = scmp.ne.s32.totalorder %s155, %s156
    %p165 = scmp.eq.s32.totalorder %s19, 0
    %p166 = por %p164, %p165
    %p167 = scmp.ne.s32.totalorder %s155, %s156
    %p168 = scmp.eq.s32.totalorder %s20, 1
    %p169 = por %p167, %p168
    %p171 = scmp.ne.s32.totalorder %s156, %s170
    %p172 = scmp.eq.s32.totalorder %s20, 0
    %p173 = por %p171, %p172
    %s174 = ssub.s32 %s14, %s21
    %p175 = scmp.eq.s32.totalorder %s174, 0
    %s177 = sadd.s32 %s176, 1
    %s178 = scalar_select %p175, %s176, %s177
    %p181 = pneg %p175
    %p182 = scmp.eq.s32.totalorder %s14, 1
    %p183 = por %p181, %p182
    %p184 = scmp.ne.s32.totalorder %s176, %s179
    %p185 = scmp.eq.s32.totalorder %s14, 0
    %p186 = por %p184, %p185
    %p187 = scmp.ne.s32.totalorder %s176, %s179
    %p188 = scmp.eq.s32.totalorder %s19, 1
    %p189 = por %p187, %p188
    %p190 = scmp.ne.s32.totalorder %s179, %s180
    %p191 = scmp.eq.s32.totalorder %s19, 0
    %p192 = por %p190, %p191
    %p193 = scmp.ne.s32.totalorder %s179, %s180
    %p194 = scmp.eq.s32.totalorder %s20, 1
    %p195 = por %p193, %p194
    %p197 = scmp.ne.s32.totalorder %s180, %s196
    %p198 = scmp.eq.s32.totalorder %s20, 0
    %p199 = por %p197, %p198
    %s200 = ssub.s32 %s14, %s21
    %p201 = scmp.eq.s32.totalorder %s200, 0
    %s203 = sadd.s32 %s202, 1
    %s204 = scalar_select %p201, %s202, %s203
    %p207 = pneg %p201
    %p208 = scmp.eq.s32.totalorder %s14, 1
    %p209 = por %p207, %p208
    %p210 = scmp.ne.s32.totalorder %s202, %s205
    %p211 = scmp.eq.s32.totalorder %s14, 0
    %p212 = por %p210, %p211
    %p213 = scmp.ne.s32.totalorder %s202, %s205
    %p214 = scmp.eq.s32.totalorder %s19, 1
    %p215 = por %p213, %p214
    %p216 = scmp.ne.s32.totalorder %s205, %s206
    %p217 = scmp.eq.s32.totalorder %s19, 0
    %p218 = por %p216, %p217
    %p219 = scmp.ne.s32.totalorder %s205, %s206
    %p220 = scmp.eq.s32.totalorder %s20, 1
    %p221 = por %p219, %p220
    %p223 = scmp.ne.s32.totalorder %s206, %s222
    %p224 = scmp.eq.s32.totalorder %s20, 0
    %p225 = por %p223, %p224
    %p226 = scmp.le.s32.totalorder 1, %s14
    %p227 = scmp.lt.s32.totalorder %s14, 3
    %p228 = pnand %p226, %p227
    %p229 = pneg %p228
    // Predicated region
    $region9: #{_lambda_.26} parent=5 // pred_check
      _
    $region10: #{_lambda_.26} parent=5 // pred_check_branch
      %231 = sbr.rel (%p228) target = $region12
    $region11: #{_lambda_.26} parent=5 // pred_region
      %s232 = ssub.s32 %s14, 1
      // Predicated region
      $region13: #{_lambda_.26} parent=11 // pred_check
        %p233 = pneg %p61
      $region14: #{_lambda_.26} parent=11 // pred_check_branch
        %235 = sbr.rel (%p233) target = $region16
      $region15: #{_lambda_.26} parent=11 // pred_region
        _
      $region16: #{_lambda_.26} parent=11 // pred_fallthru
        _
      // Predicated region
      $region17: #{_lambda_.26} parent=11 // pred_check
        %p236 = pneg %p82
      $region18: #{_lambda_.26} parent=11 // pred_check_branch
        %238 = sbr.rel (%p236) target = $region20
      $region19: #{_lambda_.26} parent=11 // pred_region
        _
      $region20: #{_lambda_.26} parent=11 // pred_fallthru
        _
      // Predicated region
      $region21: #{_lambda_.26} parent=11 // pred_check
        %p239 = pneg %p103
      $region22: #{_lambda_.26} parent=11 // pred_check_branch
        %241 = sbr.rel (%p239) target = $region24
      $region23: #{_lambda_.26} parent=11 // pred_region
        _
      $region24: #{_lambda_.26} parent=11 // pred_fallthru
        _
      // Predicated region
      $region25: #{_lambda_.26} parent=11 // pred_check
        %p242 = pneg %p124
      $region26: #{_lambda_.26} parent=11 // pred_check_branch
        %244 = sbr.rel (%p242) target = $region28
      $region27: #{_lambda_.26} parent=11 // pred_region
        _
      $region28: #{_lambda_.26} parent=11 // pred_fallthru
        _
      // Predicated region
      $region29: #{_lambda_.26} parent=11 // pred_check
        %p245 = pneg %p145
      $region30: #{_lambda_.26} parent=11 // pred_check_branch
        %247 = sbr.rel (%p245) target = $region32
      $region31: #{_lambda_.26} parent=11 // pred_region
        _
      $region32: #{_lambda_.26} parent=11 // pred_fallthru
        _
      // Predicated region
      $region33: #{_lambda_.26} parent=11 // pred_check
        %p248 = pneg %p166
      $region34: #{_lambda_.26} parent=11 // pred_check_branch
        %250 = sbr.rel (%p248) target = $region36
      $region35: #{_lambda_.26} parent=11 // pred_region
        _
      $region36: #{_lambda_.26} parent=11 // pred_fallthru
        _
    $region12: #{_lambda_.26} parent=5 // pred_fallthru
      _
    %p251 = scmp.lt.s32.totalorder %s14, 2
    // Predicated region
    $region37: #{_lambda_.26} parent=5 // pred_check
      %p252 = pneg %p251
    $region38: #{_lambda_.26} parent=5 // pred_check_branch
      %254 = sbr.rel (%p252) target = $region40
    $region39: #{_lambda_.26} parent=5 // pred_region
      // Predicated region
      $region41: #{_lambda_.26} parent=39 // pred_check
        %p255 = pneg %p34
      $region42: #{_lambda_.26} parent=39 // pred_check_branch
        %257 = sbr.rel (%p255) target = $region44
      $region43: #{_lambda_.26} parent=39 // pred_region
        %p258 = scmp.lt.s32.totalorder %s14, 1
        %s259 = scalar_select %p258, %s14, 1
        %s260 = smul.addr %s259, 2
        %s261 = smul.addr %s260, 8
        %s262 = scalar_lea.vmem %s0, %s261
      $region44: #{_lambda_.26} parent=39 // pred_fallthru
        _
      // Predicated region
      $region45: #{_lambda_.26} parent=39 // pred_check
        %p263 = pneg %p186
      $region46: #{_lambda_.26} parent=39 // pred_check_branch
        %265 = sbr.rel (%p263) target = $region48
      $region47: #{_lambda_.26} parent=39 // pred_region
        %p266 = scmp.lt.s32.totalorder %s14, 1
        %s267 = scalar_select %p266, %s14, 1
        %s268 = smul.addr %s267, 8
        %s269 = scalar_lea.vmem %s7, %s268
      $region48: #{_lambda_.26} parent=39 // pred_fallthru
        _
    $region40: #{_lambda_.26} parent=5 // pred_fallthru
      _
    %p270 = scmp.le.s32.totalorder 1, %s14
    %p271 = scmp.lt.s32.totalorder %s14, 3
    %p272 = pnand %p270, %p271
    %p273 = pneg %p272
    // Predicated region
    $region49: #{_lambda_.26} parent=5 // pred_check
      _
    $region50: #{_lambda_.26} parent=5 // pred_check_branch
      %275 = sbr.rel (%p272) target = $region52
    $region51: #{_lambda_.26} parent=5 // pred_region
      %s276 = ssub.s32 %s14, 1
      %p277 = scmp.lt.s32.totalorder %s19, 1
      %s278 = scalar_select %p277, %s19, 1
      %s279 = smul.addr %s278, 2
      %s280 = smul.addr %s279, 8
      %s281 = scalar_lea.vmem %s0, %s280
      %p282 = pneg %p40
      %p283 = pneg %p37
      %p284 = pneg %p61
      %p285 = pneg %p58
      %p286 = pneg %p82
      %p287 = pneg %p79
      %p288 = pneg %p103
      %p289 = pneg %p100
      %p290 = pneg %p124
      %p291 = pneg %p121
      %p292 = pneg %p145
      %p293 = pneg %p142
      %p294 = pneg %p166
      %p295 = pneg %p163
      %p296 = scmp.lt.s32.totalorder %s19, 1
      %s297 = scalar_select %p296, %s19, 1
      %s298 = smul.addr %s297, 8
      %s299 = scalar_lea.vmem %s7, %s298
      %p300 = pneg %p192
      %p301 = pneg %p189
      %p302 = pneg %p218
      %p303 = pneg %p215
      %p304 = scmp.lt.s32.totalorder %s19, 1
      %s305 = scalar_select %p304, %s19, 1
      %s306 = smul.addr %s305, 8
      %s307 = scalar_lea.vmem %s8, %s306
      %p308 = scmp.lt.s32.totalorder %s19, 1
      %s309 = scalar_select %p308, %s19, 1
      %s310 = smul.addr %s309, 2
      %s311 = smul.addr %s310, 8
      %s312 = scalar_lea.vmem %s0, %s311
      %p313 = scmp.lt.s32.totalorder %s19, 1
      %s314 = scalar_select %p313, %s19, 1
      %s315 = smul.addr %s314, 8
      %s316 = scalar_lea.vmem %s7, %s315
      %p317 = scmp.lt.s32.totalorder %s19, 1
      %s318 = scalar_select %p317, %s19, 1
      %s319 = smul.addr %s318, 8
      %s320 = scalar_lea.vmem %s8, %s319
      %v322 = vld [vmem:[%s312] sm:$0xff]
      %v323 = vld [vmem:[%s312 + $0x8] sm:$0x1f]
      %v324 = vld [vmem:[%s1] sm:$0x7f]
      %v325 = vperm.slane %v324, 0
      %v326 = vmul.f32 %v322, %v325
      %v327 = vperm.slane %v324, 1
      %v328 = vmul.f32 %v322, %v327
      %v330 = vrot.slane %v328, 1
      %v332 = vadd.f32 %v326, %v330
      %v333 = vperm.slane %v324, 2
      %v334 = vmul.f32 %v322, %v333
      %v335 = vmul.f32 %v323, %v333
      %vm338 = vcmask 1045504
      %v339 = vrot.slane %v334, 2
      %v340 = vrot.slane %v335, 2
      %v341 = vsel %vm338, %v339, %v340
      %v343 = vadd.f32 %v332, %v341
      %v344 = vperm.slane %v324, 3
      %v345 = vmul.f32 %v322, %v344
      %v346 = vmul.f32 %v323, %v344
      %vm349 = vcmask 1044480
      %v350 = vrot.slane %v345, 3
      %v351 = vrot.slane %v346, 3
      %v352 = vsel %vm349, %v350, %v351
      %v354 = vadd.f32 %v343, %v352
      %v355 = vperm.slane %v324, 4
      %v356 = vmul.f32 %v322, %v355
      %v357 = vmul.f32 %v323, %v355
      %vm360 = vcmask 1043456
      %v361 = vrot.slane %v356, 4
      %v362 = vrot.slane %v357, 4
      %v363 = vsel %vm360, %v361, %v362
      %v365 = vadd.f32 %v354, %v363
      %v366 = vperm.slane %v324, 5
      %v367 = vmul.f32 %v322, %v366
      %v368 = vmul.f32 %v323, %v366
      %vm371 = vcmask 1042432
      %v372 = vrot.slane %v367, 5
      %v373 = vrot.slane %v368, 5
      %v374 = vsel %vm371, %v372, %v373
      %v376 = vadd.f32 %v365, %v374
      %v377 = vperm.slane %v324, 6
      %v378 = vmul.f32 %v322, %v377
      %v379 = vmul.f32 %v323, %v377
      %vm382 = vcmask 1041408
      %v383 = vrot.slane %v378, 6
      %v384 = vrot.slane %v379, 6
      %v385 = vsel %vm382, %v383, %v384
      %v387 = vadd.f32 %v376, %v385
      %v388 = vld [vmem:[%s2] sm:$0x1]
      %v390 = vperm.slane %v388, 0
      %v392 = vadd.f32 %v387, %v390
      %v393 = vld [vmem:[%s3] sm:$0x1]
      %v395 = vperm.slane %v393, 0
      %v397 = vmul.f32 %v392, %v395
      %v398 = vld [vmem:[%s4] sm:$0x1]
      %v400 = vperm.slane %v398, 0
      %v402 = vadd.f32 %v397, %v400
      %v403 = vxor.u32 %v402, 2147483648
      %v404 = vmul.f32 %v403, 1.442695
      %v405 = vpow.pop %v404
      %v406 = vadd.f32 %v405, 1.0
      %v407 = vrcp.pop %v406
      %v408 = vmul.f32 %v406, %v407
      %v409 = vsub.f32 1.0, %v408
      %v410 = vmul.f32 %v407, %v409
      %v411 = vadd.f32 %v407, %v410
      %vm412 = vweird.f32 %v406
      %vm413 = vweird.f32 %v407
      %vm414 = vmor %vm412, %vm413
      %v415 = vsel %vm414, %v407, %v411
      %v416 = vand.u32 2147483647, %v406
      %vm417 = vcmp.eq.f32.partialorder %v416, 8.507059e+37
      %v418 = vand.u32 %v406, 2147483648
      %v419 = vor.u32 1.1754944e-38, %v418
      %v420 = vsel %vm417, %v419, %v415
      %v421 = vmul.f32 1.0, %v420
      %v422 = vmul.f32 %v402, %v421
      %v423 = vpack.c.bf16 %v422, %v422
      %v424 = vld [vmem:[%s5] sm:$0xf]
      %v425 = vld [vmem:[%s5 + $0x4] sm:$0xf]
      %v426 = vld [vmem:[%s5 + $0x8] sm:$0xf]
      %v427 = vld [vmem:[%s5 + $0xc] sm:$0xf]
      %v428 = vld [vmem:[%s6] sm:$0x1]
      %v430 = vperm.slane %v428, 0
      %v436 = vunpack.c.l.b16 %v424
      %v437 = vunpack.c.l.b16 %v425
      %v438 = vunpack.c.l.b16 %v426
      %v439 = vunpack.c.l.b16 %v427
      %v440 = vpack.c.b16 %v437, %v436
      %v441 = vpack.c.b16 %v439, %v438
      %vm444 = vcmask 261120
      %v446 = vsel %vm444, %v423, 0
      %448 = vmatpush.bf16.msra.mxu0 0
      %449 = vmatpush.bf16.msra.mxu0 0
      %450 = vmatpush.bf16.msra.mxu0 0
      %451 = vmatpush.bf16.msra.mxu0 0
      %452 = vmatpush.bf16.msra.mxu0 0
      %453 = vmatpush.bf16.msra.mxu0 0
      %454 = vmatpush.bf16.msra.mxu0 %v441
      %455 = vmatpush.bf16.msra.mxu0 %v440
      %456 = vmatmul.bf16.gmra.mxu0 %v446
      %v457 = vpop.f32.mrf.mxu0
      %v458 = vadd.f32 %v430, %v457
      %v459 = vpop.f32.mrf.mxu0
      %460 = vdwg.mxu0
      %v461 = vld [vmem:[%s316] sm:$0x7f]
      %v462 = vadd.f32 %v461, %v458
      %vm463 = vcmask 260096
      %464 = vst.msk [vmem:[%s320] sm:$0x7f] %vm463, %v462
      %p465 = scmp.lt.s32.totalorder %s19, 1
      %s466 = scalar_select %p465, %s19, 1
      %s467 = smul.addr %s466, 8
      %s468 = scalar_lea.vmem %s8, %s467
      // Predicated region
      $region53: #{_lambda_.26} parent=51 // pred_check
        %p469 = pneg %p215
      $region54: #{_lambda_.26} parent=51 // pred_check_branch
        %471 = sbr.rel (%p469) target = $region56
      $region55: #{_lambda_.26} parent=51 // pred_region
        _
      $region56: #{_lambda_.26} parent=51 // pred_fallthru
        _
    $region52: #{_lambda_.26} parent=5 // pred_fallthru
      _
    %p472 = scmp.le.s32.totalorder 2, %s14
    // Predicated region
    $region57: #{_lambda_.26} parent=5 // pred_check
      %p473 = pneg %p472
    $region58: #{_lambda_.26} parent=5 // pred_check_branch
      %475 = sbr.rel (%p473) target = $region60
    $region59: #{_lambda_.26} parent=5 // pred_region
      %s476 = ssub.s32 %s14, 2
      // Predicated region
      $region61: #{_lambda_.26} parent=59 // pred_check
        %p477 = pneg %p221
      $region62: #{_lambda_.26} parent=59 // pred_check_branch
        %479 = sbr.rel (%p477) target = $region64
      $region63: #{_lambda_.26} parent=59 // pred_region
        %p480 = scmp.lt.s32.totalorder %s20, 1
        %s481 = scalar_select %p480, %s20, 1
        %s482 = smul.addr %s481, 8
        %s483 = scalar_lea.vmem %s8, %s482
      $region64: #{_lambda_.26} parent=59 // pred_fallthru
        _
    $region60: #{_lambda_.26} parent=5 // pred_fallthru
      _
  $region6: #{_lambda_.26} parent=0 // loop_footer
    %s18 = sadd.s32 1, %s14
  $region7: #{_lambda_.26} parent=0 // loop_footer_branch
    %13 = sbr.rel target = $region3
  $region8: #{_lambda_.26} parent=0 // loop_exit
    _

// kernel: _lambda_.27
$region0: #{_lambda_.27}
  #allocation0 [shape = 'u32[]', space=smem, size = 0x4, offset = 0x4, fixed_abs, tag = 'smem constant byte address 0x4 - core index']
  #allocation1 [shape = 'u32[72,128]{1,0:T(1,128)}', space=vmem, size = 0x9000, scoped, tag = 'internal scratch']
  %s0 = inlined_call_operand.vmem [shape: f32[14,32], index: 0, kind: input, shape index: {}]
  %s1 = inlined_call_operand.vmem [shape: f32[1,32], index: 1, kind: input, shape index: {}]
  %s2 = inlined_call_operand.vmem [shape: f32[1,32], index: 2, kind: input, shape index: {}]
  %s3 = inlined_call_operand.vmem [shape: bf16[32,128], index: 3, kind: input, shape index: {}]
  %s4 = inlined_call_operand.vmem [shape: f32[1,128], index: 4, kind: input, shape index: {}]
  %s5 = inlined_call_operand.vmem [shape: bf16[128,32], index: 5, kind: input, shape index: {}]
  %s6 = inlined_call_operand.vmem [shape: f32[1,32], index: 6, kind: input, shape index: {}]
  %s7 = inlined_call_operand.vmem [shape: f32[1,32], index: 7, kind: input, shape index: {}]
  %s8 = inlined_call_operand.vmem [shape: f32[1,32], index: 8, kind: input, shape index: {}]
  %s9 = inlined_call_operand.vmem [shape: f32[14,32], index: 9, kind: output, shape index: {}]
  %s10 = sld [smem:[#allocation0]]
  $region46: #{_lambda_.27} parent=0
    _
  %s12 = ssub.s32 1, %s10
  %s13 = scalar_select 0, %s12, %s10
  // Predicated region
  $region2: #{_lambda_.27} parent=0 // pred_check
    _
  $region3: #{_lambda_.27} parent=0 // pred_check_branch
    %15 = sbr.rel (0) target = $region5
  $region4: #{_lambda_.27} parent=0 // pred_region
    _
  $region5: #{_lambda_.27} parent=0 // pred_fallthru
    _
  // Predicated region
  $region6: #{_lambda_.27} parent=0 // pred_check
    _
  $region7: #{_lambda_.27} parent=0 // pred_check_branch
    %17 = sbr.rel (0) target = $region9
  $region8: #{_lambda_.27} parent=0 // pred_region
    _
  $region9: #{_lambda_.27} parent=0 // pred_fallthru
    _
  // Predicated region
  $region10: #{_lambda_.27} parent=0 // pred_check
    _
  $region11: #{_lambda_.27} parent=0 // pred_check_branch
    %19 = sbr.rel (0) target = $region13
  $region12: #{_lambda_.27} parent=0 // pred_region
    _
  $region13: #{_lambda_.27} parent=0 // pred_fallthru
    _
  // Predicated region
  $region14: #{_lambda_.27} parent=0 // pred_check
    _
  $region15: #{_lambda_.27} parent=0 // pred_check_branch
    %21 = sbr.rel (0) target = $region17
  $region16: #{_lambda_.27} parent=0 // pred_region
    _
  $region17: #{_lambda_.27} parent=0 // pred_fallthru
    _
  // Predicated region
  $region18: #{_lambda_.27} parent=0 // pred_check
    _
  $region19: #{_lambda_.27} parent=0 // pred_check_branch
    %23 = sbr.rel (0) target = $region21
  $region20: #{_lambda_.27} parent=0 // pred_region
    _
  $region21: #{_lambda_.27} parent=0 // pred_fallthru
    _
  // Predicated region
  $region22: #{_lambda_.27} parent=0 // pred_check
    _
  $region23: #{_lambda_.27} parent=0 // pred_check_branch
    %25 = sbr.rel (0) target = $region25
  $region24: #{_lambda_.27} parent=0 // pred_region
    _
  $region25: #{_lambda_.27} parent=0 // pred_fallthru
    _
  // Predicated region
  $region26: #{_lambda_.27} parent=0 // pred_check
    _
  $region27: #{_lambda_.27} parent=0 // pred_check_branch
    %27 = sbr.rel (0) target = $region29
  $region28: #{_lambda_.27} parent=0 // pred_region
    _
  $region29: #{_lambda_.27} parent=0 // pred_fallthru
    _
  // Predicated region
  $region30: #{_lambda_.27} parent=0 // pred_check
    _
  $region31: #{_lambda_.27} parent=0 // pred_check_branch
    %29 = sbr.rel (0) target = $region33
  $region32: #{_lambda_.27} parent=0 // pred_region
    _
  $region33: #{_lambda_.27} parent=0 // pred_fallthru
    _
  // Predicated region
  $region34: #{_lambda_.27} parent=0 // pred_check
    _
  $region35: #{_lambda_.27} parent=0 // pred_check_branch
    %31 = sbr.rel (0) target = $region37
  $region36: #{_lambda_.27} parent=0 // pred_region
    _
  $region37: #{_lambda_.27} parent=0 // pred_fallthru
    _
  %v33 = vld [vmem:[%s0] sm:$0xff]
  %v34 = vld [vmem:[%s0 + $0x8] sm:$0x3f]
  %v35 = vld [vmem:[%s1] sm:$0x1]
  %v36 = vld [vmem:[%s2] sm:$0x1]
  %vm37 = vcmask 261120
  %v38 = vsel %vm37, %v33, 0.0
  %39 = vadd.xlane.f32.xlu0 %v38
  %v40 = vpop.xlane.xlu0 %39
  %vm41 = vcmask 259072
  %v42 = vsel %vm41, %v34, 0.0
  %43 = vadd.xlane.f32.xlu0 %v42
  %v44 = vpop.xlane.xlu0 %43
  %v45 = vrcp.pop 32.0
  %v46 = vmul.f32 32.0, %v45
  %v47 = vsub.f32 1.0, %v46
  %v48 = vmul.f32 %v45, %v47
  %v49 = vadd.f32 %v45, %v48
  %vm50 = vweird.f32 %v45
  %v51 = vsel %vm50, %v45, %v49
  %v52 = vmul.f32 %v40, %v51
  %v53 = vmul.f32 %v44, %v51
  %v54 = vsub.f32 %v33, %v52
  %v55 = vsub.f32 %v34, %v53
  %v56 = vmul.f32 %v54, %v54
  %v57 = vmul.f32 %v55, %v55
  %v58 = vsel %vm37, %v56, 0.0
  %59 = vadd.xlane.f32.xlu0 %v58
  %v60 = vpop.xlane.xlu0 %59
  %v61 = vsel %vm41, %v57, 0.0
  %62 = vadd.xlane.f32.xlu0 %v61
  %v63 = vpop.xlane.xlu0 %62
  %v64 = vmul.f32 %v60, %v51
  %v65 = vmul.f32 %v63, %v51
  %v66 = vadd.f32 %v64, 1e-05
  %v67 = vadd.f32 %v65, 1e-05
  %v68 = vrsqrt.pop %v66
  %v69 = vmul.f32 %v68, %v66
  %v70 = vmul.f32 %v69, %v68
  %v71 = vmul.f32 0.5, %v70
  %v72 = vsub.f32 1.5, %v71
  %v73 = vmul.f32 %v68, %v72
  %vm74 = vweird.f32 %v66
  %vm75 = vweird.f32 %v68
  %vm76 = vmor %vm74, %vm75
  %v77 = vsel %vm76, %v68, %v73
  %v78 = vrsqrt.pop %v67
  %v79 = vmul.f32 %v78, %v67
  %v80 = vmul.f32 %v79, %v78
  %v81 = vmul.f32 0.5, %v80
  %v82 = vsub.f32 1.5, %v81
  %v83 = vmul.f32 %v78, %v82
  %vm84 = vweird.f32 %v67
  %vm85 = vweird.f32 %v78
  %vm86 = vmor %vm84, %vm85
  %v87 = vsel %vm86, %v78, %v83
  %v88 = vmul.f32 %v54, %v77
  %v89 = vmul.f32 %v55, %v87
  %v91 = vperm.slane %v35, 0
  %v93 = vmul.f32 %v88, %v91
  %v94 = vmul.f32 %v89, %v91
  %v96 = vperm.slane %v36, 0
  %v98 = vadd.f32 %v93, %v96
  %v99 = vadd.f32 %v94, %v96
  %v100 = vpack.c.bf16 %v99, %v98
  %v101 = vld [vmem:[%s3] sm:$0xf]
  %v102 = vld [vmem:[%s3 + $0x4] sm:$0xf]
  %v103 = vld [vmem:[%s3 + $0x8] sm:$0xf]
  %v104 = vld [vmem:[%s3 + $0xc] sm:$0xf]
  %v105 = vld [vmem:[%s4] sm:$0x1]
  %v107 = vperm.slane %v105, 0
  %v113 = vunpack.c.l.b16 %v101
  %v114 = vunpack.c.l.b16 %v102
  %v115 = vunpack.c.l.b16 %v103
  %v116 = vunpack.c.l.b16 %v104
  %v117 = vpack.c.b16 %v114, %v113
  %v118 = vpack.c.b16 %v116, %v115
  %v122 = vsel %vm37, %v100, 0
  %124 = vmatpush.bf16.msra.mxu0 0
  %125 = vmatpush.bf16.msra.mxu0 0
  %126 = vmatpush.bf16.msra.mxu0 0
  %127 = vmatpush.bf16.msra.mxu0 0
  %128 = vmatpush.bf16.msra.mxu0 0
  %129 = vmatpush.bf16.msra.mxu0 0
  %130 = vmatpush.bf16.msra.mxu0 %v118
  %131 = vmatpush.bf16.msra.mxu0 %v117
  %132 = vmatmul.bf16.gmra.mxu0 %v122
  %v133 = vpop.f32.mrf.mxu0
  %v134 = vadd.f32 %v107, %v133
  %v135 = vpop.f32.mrf.mxu0
  %v136 = vadd.f32 %v107, %v135
  %137 = vdwg.mxu0
  %v138 = vxor.u32 %v134, 2147483648
  %v139 = vxor.u32 %v136, 2147483648
  %v140 = vmul.f32 %v138, 1.442695
  %v141 = vpow.pop %v140
  %v142 = vmul.f32 %v139, 1.442695
  %v143 = vpow.pop %v142
  %v144 = vadd.f32 %v141, 1.0
  %v145 = vadd.f32 %v143, 1.0
  %v146 = vrcp.pop %v144
  %v147 = vmul.f32 %v144, %v146
  %v148 = vsub.f32 1.0, %v147
  %v149 = vmul.f32 %v146, %v148
  %v150 = vadd.f32 %v146, %v149
  %vm151 = vweird.f32 %v144
  %vm152 = vweird.f32 %v146
  %vm153 = vmor %vm151, %vm152
  %v154 = vsel %vm153, %v146, %v150
  %v155 = vand.u32 2147483647, %v144
  %vm156 = vcmp.eq.f32.partialorder %v155, 8.507059e+37
  %v157 = vand.u32 %v144, 2147483648
  %v158 = vor.u32 1.1754944e-38, %v157
  %v159 = vsel %vm156, %v158, %v154
  %v160 = vmul.f32 1.0, %v159
  %v161 = vrcp.pop %v145
  %v162 = vmul.f32 %v145, %v161
  %v163 = vsub.f32 1.0, %v162
  %v164 = vmul.f32 %v161, %v163
  %v165 = vadd.f32 %v161, %v164
  %vm166 = vweird.f32 %v145
  %vm167 = vweird.f32 %v161
  %vm168 = vmor %vm166, %vm167
  %v169 = vsel %vm168, %v161, %v165
  %v170 = vand.u32 2147483647, %v145
  %vm171 = vcmp.eq.f32.partialorder %v170, 8.507059e+37
  %v172 = vand.u32 %v145, 2147483648
  %v173 = vor.u32 1.1754944e-38, %v172
  %v174 = vsel %vm171, %v173, %v169
  %v175 = vmul.f32 1.0, %v174
  %v176 = vmul.f32 %v134, %v160
  %v177 = vmul.f32 %v136, %v175
  %v178 = vpack.c.bf16 %v177, %v176
  %v179 = vld [vmem:[%s5] sm:$0xf]
  %v180 = vld [vmem:[%s5 + $0x4] sm:$0xf]
  %v181 = vld [vmem:[%s5 + $0x8] sm:$0xf]
  %v182 = vld [vmem:[%s5 + $0xc] sm:$0xf]
  %v183 = vld [vmem:[%s5 + $0x10] sm:$0xf]
  %v184 = vld [vmem:[%s5 + $0x14] sm:$0xf]
  %v185 = vld [vmem:[%s5 + $0x18] sm:$0xf]
  %v186 = vld [vmem:[%s5 + $0x1c] sm:$0xf]
  %v187 = vld [vmem:[%s5 + $0x20] sm:$0xf]
  %v188 = vld [vmem:[%s5 + $0x24] sm:$0xf]
  %v189 = vld [vmem:[%s5 + $0x28] sm:$0xf]
  %v190 = vld [vmem:[%s5 + $0x2c] sm:$0xf]
  %v191 = vld [vmem:[%s5 + $0x30] sm:$0xf]
  %v192 = vld [vmem:[%s5 + $0x34] sm:$0xf]
  %v193 = vld [vmem:[%s5 + $0x38] sm:$0xf]
  %v194 = vld [vmem:[%s5 + $0x3c] sm:$0xf]
  %v195 = vld [vmem:[%s6] sm:$0x1]
  %v197 = vperm.slane %v195, 0
  %v215 = vunpack.c.l.b16 %v179
  %v216 = vunpack.c.l.b16 %v180
  %v217 = vunpack.c.l.b16 %v181
  %v218 = vunpack.c.l.b16 %v182
  %v219 = vunpack.c.l.b16 %v183
  %v220 = vunpack.c.l.b16 %v184
  %v221 = vunpack.c.l.b16 %v185
  %v222 = vunpack.c.l.b16 %v186
  %v223 = vunpack.c.l.b16 %v187
  %v224 = vunpack.c.l.b16 %v188
  %v225 = vunpack.c.l.b16 %v189
  %v226 = vunpack.c.l.b16 %v190
  %v227 = vunpack.c.l.b16 %v191
  %v228 = vunpack.c.l.b16 %v192
  %v229 = vunpack.c.l.b16 %v193
  %v230 = vunpack.c.l.b16 %v194
  %v231 = vpack.c.b16 %v216, %v215
  %v232 = vpack.c.b16 %v218, %v217
  %v233 = vpack.c.b16 %v220, %v219
  %v234 = vpack.c.b16 %v222, %v221
  %v235 = vpack.c.b16 %v224, %v223
  %v236 = vpack.c.b16 %v226, %v225
  %v237 = vpack.c.b16 %v228, %v227
  %v238 = vpack.c.b16 %v230, %v229
  %247 = vmatpush.bf16.msra.mxu0 %v238
  %248 = vmatpush.bf16.msra.mxu0 %v237
  %249 = vmatpush.bf16.msra.mxu0 %v236
  %250 = vmatpush.bf16.msra.mxu0 %v235
  %251 = vmatpush.bf16.msra.mxu0 %v234
  %252 = vmatpush.bf16.msra.mxu0 %v233
  %253 = vmatpush.bf16.msra.mxu0 %v232
  %254 = vmatpush.bf16.msra.mxu0 %v231
  %255 = vmatmul.bf16.gmra.mxu0 %v178
  %v256 = vpop.f32.mrf.mxu0
  %v257 = vadd.f32 %v197, %v256
  %v258 = vpop.f32.mrf.mxu0
  %v259 = vadd.f32 %v197, %v258
  %260 = vdwg.mxu0
  %v261 = vmul.f32 %v257, 0.5
  %v262 = vmul.f32 %v259, 0.5
  %v263 = vadd.f32 %v33, %v261
  %v264 = vadd.f32 %v34, %v262
  %v265 = vld [vmem:[%s7] sm:$0x1]
  %v266 = vld [vmem:[%s8] sm:$0x1]
  %v267 = vsel %vm37, %v263, 0.0
  %268 = vadd.xlane.f32.xlu0 %v267
  %v269 = vpop.xlane.xlu0 %268
  %v270 = vsel %vm41, %v264, 0.0
  %271 = vadd.xlane.f32.xlu0 %v270
  %v272 = vpop.xlane.xlu0 %271
  %v273 = vmul.f32 %v269, %v51
  %v274 = vmul.f32 %v272, %v51
  %v275 = vsub.f32 %v263, %v273
  %v276 = vsub.f32 %v264, %v274
  %v277 = vmul.f32 %v275, %v275
  %v278 = vmul.f32 %v276, %v276
  %v279 = vsel %vm37, %v277, 0.0
  %280 = vadd.xlane.f32.xlu0 %v279
  %v281 = vpop.xlane.xlu0 %280
  %v282 = vsel %vm41, %v278, 0.0
  %283 = vadd.xlane.f32.xlu0 %v282
  %v284 = vpop.xlane.xlu0 %283
  %v285 = vmul.f32 %v281, %v51
  %v286 = vmul.f32 %v284, %v51
  %v287 = vadd.f32 %v285, 1e-05
  %v288 = vadd.f32 %v286, 1e-05
  %v289 = vrsqrt.pop %v287
  %v290 = vmul.f32 %v289, %v287
  %v291 = vmul.f32 %v290, %v289
  %v292 = vmul.f32 0.5, %v291
  %v293 = vsub.f32 1.5, %v292
  %v294 = vmul.f32 %v289, %v293
  %vm295 = vweird.f32 %v287
  %vm296 = vweird.f32 %v289
  %vm297 = vmor %vm295, %vm296
  %v298 = vsel %vm297, %v289, %v294
  %v299 = vrsqrt.pop %v288
  %v300 = vmul.f32 %v299, %v288
  %v301 = vmul.f32 %v300, %v299
  %v302 = vmul.f32 0.5, %v301
  %v303 = vsub.f32 1.5, %v302
  %v304 = vmul.f32 %v299, %v303
  %vm305 = vweird.f32 %v288
  %vm306 = vweird.f32 %v299
  %vm307 = vmor %vm305, %vm306
  %v308 = vsel %vm307, %v299, %v304
  %v309 = vmul.f32 %v275, %v298
  %v310 = vmul.f32 %v276, %v308
  %v312 = vperm.slane %v265, 0
  %v314 = vmul.f32 %v309, %v312
  %v315 = vmul.f32 %v310, %v312
  %v317 = vperm.slane %v266, 0
  %v319 = vadd.f32 %v314, %v317
  %v320 = vadd.f32 %v315, %v317
  %321 = vst.msk [vmem:[%s9] sm:$0xff] %vm37, %v319
  %322 = vst.msk [vmem:[%s9 + $0x8] sm:$0x3f] %vm41, %v320
  // Predicated region
  $region38: #{_lambda_.27} parent=0 // pred_check
    _
  $region39: #{_lambda_.27} parent=0 // pred_check_branch
    %324 = sbr.rel (0) target = $region41
  $region40: #{_lambda_.27} parent=0 // pred_region
    _
  $region41: #{_lambda_.27} parent=0 // pred_fallthru
    _
  // Predicated region
  $region42: #{_lambda_.27} parent=0 // pred_check
    _
  $region43: #{_lambda_.27} parent=0 // pred_check_branch
    %326 = sbr.rel (0) target = $region45
  $region44: #{_lambda_.27} parent=0 // pred_region
    _
  $region45: #{_lambda_.27} parent=0 // pred_fallthru
    _

// kernel: _lambda_.35
$region0: #{_lambda_.35}
  #allocation0 [shape = 'u32[]', space=smem, size = 0x4, offset = 0x4, fixed_abs, tag = 'smem constant byte address 0x4 - core index']
  #allocation1 [shape = 'u32[72,128]{1,0:T(1,128)}', space=vmem, size = 0x9000, scoped, tag = 'internal scratch']
  %s0 = inlined_call_operand.vmem [shape: f32[14,32], index: 0, kind: input, shape index: {}]
  %s1 = inlined_call_operand.vmem [shape: bf16[32,40], index: 1, kind: input, shape index: {}]
  %s2 = inlined_call_operand.vmem [shape: f32[1,40], index: 2, kind: input, shape index: {}]
  %s3 = inlined_call_operand.vmem [shape: f32[14,40], index: 3, kind: output, shape index: {0}]
  %s4 = inlined_call_operand.vmem [shape: f32[14,40], index: 4, kind: output, shape index: {1}]
  %5 = xla_tuple %s3, %s4
  %s6 = sld [smem:[#allocation0]]
  $region30: #{_lambda_.35} parent=0
    _
  %s8 = ssub.s32 1, %s6
  %s9 = scalar_select 0, %s8, %s6
  // Predicated region
  $region2: #{_lambda_.35} parent=0 // pred_check
    _
  $region3: #{_lambda_.35} parent=0 // pred_check_branch
    %11 = sbr.rel (0) target = $region5
  $region4: #{_lambda_.35} parent=0 // pred_region
    _
  $region5: #{_lambda_.35} parent=0 // pred_fallthru
    _
  // Predicated region
  $region6: #{_lambda_.35} parent=0 // pred_check
    _
  $region7: #{_lambda_.35} parent=0 // pred_check_branch
    %13 = sbr.rel (0) target = $region9
  $region8: #{_lambda_.35} parent=0 // pred_region
    _
  $region9: #{_lambda_.35} parent=0 // pred_fallthru
    _
  // Predicated region
  $region10: #{_lambda_.35} parent=0 // pred_check
    _
  $region11: #{_lambda_.35} parent=0 // pred_check_branch
    %15 = sbr.rel (0) target = $region13
  $region12: #{_lambda_.35} parent=0 // pred_region
    _
  $region13: #{_lambda_.35} parent=0 // pred_fallthru
    _
  %v17 = vld [vmem:[%s0] sm:$0xff]
  %v18 = vld [vmem:[%s0 + $0x8] sm:$0x3f]
  %v19 = vpack.c.bf16 %v18, %v17
  %v20 = vld [vmem:[%s1] sm:$0xf]
  %v21 = vld [vmem:[%s1 + $0x4] sm:$0xf]
  %v22 = vld [vmem:[%s1 + $0x8] sm:$0xf]
  %v23 = vld [vmem:[%s1 + $0xc] sm:$0xf]
  %v24 = vld [vmem:[%s2] sm:$0x1]
  %v26 = vperm.slane %v24, 0
  %v32 = vunpack.c.l.b16 %v20
  %v33 = vunpack.c.l.b16 %v21
  %v34 = vunpack.c.l.b16 %v22
  %v35 = vunpack.c.l.b16 %v23
  %v36 = vpack.c.b16 %v33, %v32
  %v37 = vpack.c.b16 %v35, %v34
  %vm40 = vcmask 261120
  %v42 = vsel %vm40, %v19, 0
  %44 = vmatpush.bf16.msra.mxu0 0
  %45 = vmatpush.bf16.msra.mxu0 0
  %46 = vmatpush.bf16.msra.mxu0 0
  %47 = vmatpush.bf16.msra.mxu0 0
  %48 = vmatpush.bf16.msra.mxu0 0
  %49 = vmatpush.bf16.msra.mxu0 0
  %50 = vmatpush.bf16.msra.mxu0 %v37
  %51 = vmatpush.bf16.msra.mxu0 %v36
  %52 = vmatmul.bf16.gmra.mxu0 %v42
  %v53 = vpop.f32.mrf.mxu0
  %v54 = vadd.f32 %v26, %v53
  %v55 = vpop.f32.mrf.mxu0
  %v56 = vadd.f32 %v26, %v55
  %57 = vdwg.mxu0
  %vm58 = vcmask 326656
  %59 = vst.msk [vmem:[%s3] sm:$0xff] %vm58, %v54
  %vm60 = vcmask 324608
  %61 = vst.msk [vmem:[%s3 + $0x8] sm:$0x3f] %vm60, %v56
  %v62 = vsel %vm58, %v54, -inf
  %63 = vmax.xlane.f32.xlu0 %v62
  %v64 = vpop.xlane.xlu0 %63
  %v65 = vsel %vm60, %v56, -inf
  %66 = vmax.xlane.f32.xlu0 %v65
  %v67 = vpop.xlane.xlu0 %66
  %v68 = vsub.f32 %v54, %v64
  %v69 = vsub.f32 %v56, %v67
  %v70 = vmul.f32 %v68, 1.442695
  %v71 = vpow.pop %v70
  %v72 = vmul.f32 %v69, 1.442695
  %v73 = vpow.pop %v72
  %v74 = vsel %vm58, %v71, 0.0
  %75 = vadd.xlane.f32.xlu0 %v74
  %v76 = vpop.xlane.xlu0 %75
  %v77 = vsel %vm60, %v73, 0.0
  %78 = vadd.xlane.f32.xlu0 %v77
  %v79 = vpop.xlane.xlu0 %78
  %v80 = vlog2.pop %v76
  %v81 = vmul.f32 %v80, 0.6931472
  %v82 = vlog2.pop %v79
  %v83 = vmul.f32 %v82, 0.6931472
  %v84 = vsub.f32 %v68, %v81
  %v85 = vsub.f32 %v69, %v83
  %86 = vst.msk [vmem:[%s4] sm:$0xff] %vm58, %v84
  %87 = vst.msk [vmem:[%s4 + $0x8] sm:$0x3f] %vm60, %v85
  // Predicated region
  $region14: #{_lambda_.35} parent=0 // pred_check
    _
  $region15: #{_lambda_.35} parent=0 // pred_check_branch
    %89 = sbr.rel (0) target = $region17
  $region16: #{_lambda_.35} parent=0 // pred_region
    _
  $region17: #{_lambda_.35} parent=0 // pred_fallthru
    _
  // Predicated region
  $region18: #{_lambda_.35} parent=0 // pred_check
    _
  $region19: #{_lambda_.35} parent=0 // pred_check_branch
    %91 = sbr.rel (0) target = $region21
  $region20: #{_lambda_.35} parent=0 // pred_region
    _
  $region21: #{_lambda_.35} parent=0 // pred_fallthru
    _
  // Predicated region
  $region22: #{_lambda_.35} parent=0 // pred_check
    _
  $region23: #{_lambda_.35} parent=0 // pred_check_branch
    %93 = sbr.rel (0) target = $region25
  $region24: #{_lambda_.35} parent=0 // pred_region
    _
  $region25: #{_lambda_.35} parent=0 // pred_fallthru
    _
  // Predicated region
  $region26: #{_lambda_.35} parent=0 // pred_check
    _
  $region27: #{_lambda_.35} parent=0 // pred_check_branch
    %95 = sbr.rel (0) target = $region29
  $region28: #{_lambda_.35} parent=0 // pred_region
    _
  $region29: #{_lambda_.35} parent=0 // pred_fallthru
    _

</llo_original>
